<compile_context>
chip_gen: v7x
topology: tpu7x:2x2x1
jax: 0.10.0
libtpu: 0.0.40
codegen_flags: <defaults>
</compile_context>

<pallas_src>
import jax
import jax.numpy as jnp
from jax.experimental import pallas as pl
from jax.experimental.pallas import tpu as pltpu


H = 100        # hidden_size fixed by the module
LANE = 128
SUBLANE = 8


def _round_up(x, m):
    return (x + m - 1) // m * m


# ----------------------------------------------------------------------------
# Kernel: whole bidirectional GRU in one grid step; writes only final h.
# Layouts (Hp = 128, G6 = 6*Hp = 768, Bp = padded word count):
#   xcat_ref : (L*Bp, 2*Dp)  rows ordered t-major; cols [x(t) | x(L-1-t)] padded
#   w_in_ref : (2*Dp, G6)    gate-interleaved [r_f|r_b|z_f|z_b|n_f|n_b]
#   b_in_ref : (1, G6)
#   w_hh_ref : (2*Hp, G6)    block structure: h_f rows -> *_f cols, h_b -> *_b
#   b_hh_ref : (1, G6)
#   h0_ref   : (Bp, 2*Hp)    [h_f | h_b] per word
#   o_ref    : (Bp, 2*Hp)    final [h_f | h_b] per word
#   xg_scr   : (L*Bp, G6)    precomputed input projections (f32)
# ----------------------------------------------------------------------------
def _bigru_final_h_kernel(xcat_ref, w_in_ref, b_in_ref, w_hh_ref, b_hh_ref,
                          h0_ref, o_ref, xg_scr):
    Bp, HH = h0_ref.shape          # HH = 2*Hp
    Hp = HH // 2
    L = xg_scr.shape[0] // Bp

    # (1) One big lane-dense MXU matmul: input projections for every timestep,
    #     every word and BOTH directions (bwd half already time-reversed).
    xg_scr[...] = (
        jnp.dot(xcat_ref[...], w_in_ref[...],
                preferred_element_type=jnp.float32)
        + b_in_ref[...].astype(jnp.float32)
    )

    # Loop-invariant recurrent weights/bias: load & cast once, outside the loop.
    w_hh = w_hh_ref[...]
    b_hh = b_hh_ref[...].astype(jnp.float32)

    def body(t, h):
        # Contiguous, sublane-aligned slab for step t (fwd at t, bwd at L-1-t).
        start = pl.multiple_of(t * Bp, Bp)
        gi = xg_scr[pl.ds(start, Bp), :]                       # (Bp, 6*Hp) f32
        # Single merged recurrent matmul for both directions.
        gh = jnp.dot(h.astype(w_hh.dtype), w_hh,
                     preferred_element_type=jnp.float32) + b_hh
        # PyTorch GRU cell (gate order r, z, n), both directions lane-fused:
        r = jax.nn.sigmoid(gi[:, 0:2 * Hp] + gh[:, 0:2 * Hp])
        z = jax.nn.sigmoid(gi[:, 2 * Hp:4 * Hp] + gh[:, 2 * Hp:4 * Hp])
        n = jnp.tanh(gi[:, 4 * Hp:6 * Hp] + r * gh[:, 4 * Hp:6 * Hp])
        return (1.0 - z) * n + z * h

    unroll = True if L <= 64 else 8
    h = jax.lax.fori_loop(0, L, body, h0_ref[...].astype(jnp.float32),
                          unroll=unroll)
    o_ref[...] = h.astype(o_ref.dtype)


# ----------------------------------------------------------------------------
# One-time weight pre-packing (run once per parameter set, NOT per forward).
# ----------------------------------------------------------------------------
def prepack_char_embedding(params, h0, in_size, dtype=jnp.float32):
    Dp = _round_up(in_size, LANE)
    Hp = _round_up(H, LANE)

    def gate_blocks(w):   # (3H, X) -> [r, z, n], each (X, Hp) (transposed, padded)
        blocks = []
        for g in range(3):
            blk = w[g * H:(g + 1) * H, :].T                    # (X, H)
            blocks.append(jnp.pad(blk, ((0, 0), (0, Hp - H))))  # (X, Hp)
        return blocks

    # Input weights: rows 0:Dp act on x(t) (fwd gates), rows Dp:2Dp act on
    # x(L-1-t) (bwd gates). Gate columns interleaved [r_f|r_b|z_f|z_b|n_f|n_b].
    rf, zf, nf = gate_blocks(params["w_ih_fwd"])
    rb, zb, nb = gate_blocks(params["w_ih_bwd"])
    z_in = jnp.zeros((in_size, Hp), rf.dtype)
    top = jnp.concatenate([rf, z_in, zf, z_in, nf, z_in], axis=1)   # (in, 6Hp)
    bot = jnp.concatenate([z_in, rb, z_in, zb, z_in, nb], axis=1)
    top = jnp.pad(top, ((0, Dp - in_size), (0, 0)))
    bot = jnp.pad(bot, ((0, Dp - in_size), (0, 0)))
    w_in = jnp.concatenate([top, bot], axis=0)                      # (2Dp, 6Hp)

    # Recurrent weights: h_f rows feed only *_f columns, h_b rows only *_b.
    rhf, zhf, nhf = gate_blocks(params["w_hh_fwd"])                 # (H, Hp)
    rhb, zhb, nhb = gate_blocks(params["w_hh_bwd"])
    z_h = jnp.zeros((H, Hp), rhf.dtype)
    top_h = jnp.concatenate([rhf, z_h, zhf, z_h, nhf, z_h], axis=1)  # (H, 6Hp)
    bot_h = jnp.concatenate([z_h, rhb, z_h, zhb, z_h, nhb], axis=1)
    top_h = jnp.pad(top_h, ((0, Hp - H), (0, 0)))                    # (Hp, 6Hp)
    bot_h = jnp.pad(bot_h, ((0, Hp - H), (0, 0)))
    w_hh = jnp.concatenate([top_h, bot_h], axis=0)                   # (2Hp, 6Hp)

    def pack_bias(bf, bb):   # -> (1, 6Hp) gate-interleaved
        parts = []
        for g in range(3):
            parts.append(jnp.pad(bf[g * H:(g + 1) * H], (0, Hp - H)))
            parts.append(jnp.pad(bb[g * H:(g + 1) * H], (0, Hp - H)))
        return jnp.concatenate(parts).reshape(1, 6 * Hp)

    b_in = pack_bias(params["b_ih_fwd"], params["b_ih_bwd"])
    b_hh = pack_bias(params["b_hh_fwd"], params["b_hh_bwd"])

    h0_row = jnp.concatenate([jnp.pad(h0[0, 0], (0, Hp - H)),
                              jnp.pad(h0[1, 0], (0, Hp - H))]).reshape(1, 2 * Hp)

    return {
        "w_in": w_in.astype(dtype),
        "b_in": b_in.astype(jnp.float32),
        "w_hh": w_hh.astype(dtype),
        "b_hh": b_hh.astype(jnp.float32),
        "h0": h0_row.astype(jnp.float32),
    }


# ----------------------------------------------------------------------------
# Forward: CharEmbedding.forward.  x: [L, B, D_in]  ->  h_n.view(-1) = [2*B*H].
# B may be > 1 (a batch of independent "words" sharing the module's fixed h0);
# for B == 1 this is exactly the PyTorch module.
# ----------------------------------------------------------------------------
@jax.jit
def char_embedding_forward(x, packed):
    L, B, D_in = x.shape
    Dp = packed["w_in"].shape[0] // 2
    Hp = packed["w_hh"].shape[0] // 2
    assert _round_up(D_in, LANE) == Dp, "input size mismatch with packed weights"
    Bp = _round_up(max(B, 1), SUBLANE)

    wdtype = packed["w_in"].dtype
    xf = jnp.pad(x, ((0, 0), (0, Bp - B), (0, Dp - D_in))).astype(wdtype)
    xb = xf[::-1]                                   # time-reversed copy for bwd
    xcat = jnp.concatenate([xf, xb], axis=-1).reshape(L * Bp, 2 * Dp)

    h0 = jnp.pad(jnp.broadcast_to(packed["h0"], (B, 2 * Hp)),
                 ((0, Bp - B), (0, 0)))

    out = pl.pallas_call(
        _bigru_final_h_kernel,
        out_shape=jax.ShapeDtypeStruct((Bp, 2 * Hp), jnp.float32),
        grid=(1,),
        in_specs=[
            pl.BlockSpec((L * Bp, 2 * Dp), lambda i: (0, 0)),
            pl.BlockSpec((2 * Dp, 6 * Hp), lambda i: (0, 0)),
            pl.BlockSpec((1, 6 * Hp), lambda i: (0, 0)),
            pl.BlockSpec((2 * Hp, 6 * Hp), lambda i: (0, 0)),
            pl.BlockSpec((1, 6 * Hp), lambda i: (0, 0)),
            pl.BlockSpec((Bp, 2 * Hp), lambda i: (0, 0)),
        ],
        out_specs=pl.BlockSpec((Bp, 2 * Hp), lambda i: (0, 0)),
        scratch_shapes=[pltpu.VMEM((L * Bp, 6 * Hp), jnp.float32)],
        compiler_params=pltpu.CompilerParams(
            dimension_semantics=("arbitrary",),
            vmem_limit_bytes=64 * 1024 * 1024),
    )(xcat, packed["w_in"], packed["b_in"], packed["w_hh"], packed["b_hh"], h0)

    # h.view(-1): layout (num_layers*dir=2, B, H), lane padding dropped.
    h_f = out[:B, 0:H]
    h_b = out[:B, Hp:Hp + H]
    return jnp.stack([h_f, h_b], axis=0).reshape(-1)


# ----------------------------------------------------------------------------
# Pure-JAX reference (matches torch.nn.GRU, gate order r,z,n); returns h_n.view(-1)
# for h_n of shape (2, B, H) with the module's fixed h0 replicated per word.
# ----------------------------------------------------------------------------
def _gru_reference(x, params, h0):
    hi = jax.lax.Precision.HIGHEST
    L, B, _ = x.shape

    def direction(xs, w_ih, w_hh, b_ih, b_hh, h):
        def step(h, x_t):
            gi = jnp.dot(x_t, w_ih.T, precision=hi) + b_ih
            gh = jnp.dot(h, w_hh.T, precision=hi) + b_hh
            i_r, i_z, i_n = jnp.split(gi, 3, axis=-1)
            h_r, h_z, h_n = jnp.split(gh, 3, axis=-1)
            r = jax.nn.sigmoid(i_r + h_r)
            z = jax.nn.sigmoid(i_z + h_z)
            n = jnp.tanh(i_n + r * h_n)
            return (1.0 - z) * n + z * h, None
        h, _ = jax.lax.scan(step, h, xs)
        return h

    h0b = jnp.broadcast_to(h0, (2, B, H))
    h_f = direction(x, params["w_ih_fwd"], params["w_hh_fwd"],
                    params["b_ih_fwd"], params["b_hh_fwd"], h0b[0])
    h_b = direction(x[::-1], params["w_ih_bwd"], params["w_hh_bwd"],
                    params["b_ih_bwd"], params["b_hh_bwd"], h0b[1])
    return jnp.stack([h_f, h_b], axis=0).reshape(-1)


if __name__ == "__main__":
    # Module config: in_size=word_emb_size=300, hidden=100, 1 layer, bidirectional.
    in_size = 300
    seq_len = 8

    key = jax.random.PRNGKey(0)
    keys = jax.random.split(key, 11)
    s = 0.1
    params = {
        "w_ih_fwd": jax.random.normal(keys[0], (3 * H, in_size), jnp.float32) * s,
        "w_hh_fwd": jax.random.normal(keys[1], (3 * H, H), jnp.float32) * s,
        "b_ih_fwd": jax.random.normal(keys[2], (3 * H,), jnp.float32) * s,
        "b_hh_fwd": jax.random.normal(keys[3], (3 * H,), jnp.float32) * s,
        "w_ih_bwd": jax.random.normal(keys[4], (3 * H, in_size), jnp.float32) * s,
        "w_hh_bwd": jax.random.normal(keys[5], (3 * H, H), jnp.float32) * s,
        "b_ih_bwd": jax.random.normal(keys[6], (3 * H,), jnp.float32) * s,
        "b_hh_bwd": jax.random.normal(keys[7], (3 * H,), jnp.float32) * s,
    }
    h0 = jax.random.normal(keys[8], (2, 1, H), jnp.float32)   # module's fixed self.h

    # One-time, off-hot-path weight packing (keep f32 to match the f32 reference;
    # pass dtype=jnp.bfloat16 for halved weight DMA / MXU streaming if desired).
    packed = prepack_char_embedding(params, h0, in_size, dtype=jnp.float32)

    # --- Case 1: exactly the PyTorch module (batch = 1) ---
    x1 = jax.random.normal(keys[9], (seq_len, 1, in_size), jnp.float32)
    out1 = jax.block_until_ready(char_embedding_forward(x1, packed))
    ref1 = _gru_reference(x1, params, h0)
    assert out1.shape == (2 * 1 * H,), out1.shape
    err1 = float(jnp.max(jnp.abs(out1 - ref1)))
    assert jnp.allclose(out1, ref1, atol=1e-4, rtol=1e-4), f"B=1 mismatch: {err1}"

    # --- Case 2: batched words (structural throughput lever), same semantics
    #     as running the module once per word with its fixed h0 ---
    x4 = jax.random.normal(keys[10], (seq_len, 4, in_size), jnp.float32)
    out4 = jax.block_until_ready(char_embedding_forward(x4, packed))
    ref4 = _gru_reference(x4, params, h0)
    assert out4.shape == (2 * 4 * H,), out4.shape
    err4 = float(jnp.max(jnp.abs(out4 - ref4)))
    assert jnp.allclose(out4, ref4, atol=1e-4, rtol=1e-4), f"B=4 mismatch: {err4}"

    print("KERNEL_OK")
</pallas_src>

<mosaic_0001>
module attributes {stable_mosaic.version = 11 : i64} {
  func.func @_bigru_final_h_kernel(%arg0: i32, %arg1: memref<64x768xf32, #tpu.memory_space<vmem>>, %arg2: memref<768x768xf32, #tpu.memory_space<vmem>>, %arg3: memref<1x768xf32, #tpu.memory_space<vmem>>, %arg4: memref<256x768xf32, #tpu.memory_space<vmem>>, %arg5: memref<1x768xf32, #tpu.memory_space<vmem>>, %arg6: memref<8x256xf32, #tpu.memory_space<vmem>>, %arg7: memref<8x256xf32, #tpu.memory_space<vmem>>, %arg8: memref<64x768xf32, #tpu.memory_space<vmem>>) attributes {dimension_semantics = [#tpu.dimension_semantics<arbitrary>], iteration_bounds = array<i64: 1>, scalar_prefetch = 0 : i64, scratch_operands = 1 : i64, tpu.core_type = #tpu.core_type<tc>, window_params = [{pipeline_mode = #tpu.pipeline_mode<synchronous>, transform_indices = @transform_0, window_bounds = array<i64: 64, 768>}, {pipeline_mode = #tpu.pipeline_mode<synchronous>, transform_indices = @transform_1, window_bounds = array<i64: 768, 768>}, {pipeline_mode = #tpu.pipeline_mode<synchronous>, transform_indices = @transform_2, window_bounds = array<i64: 1, 768>}, {pipeline_mode = #tpu.pipeline_mode<synchronous>, transform_indices = @transform_3, window_bounds = array<i64: 256, 768>}, {pipeline_mode = #tpu.pipeline_mode<synchronous>, transform_indices = @transform_4, window_bounds = array<i64: 1, 768>}, {pipeline_mode = #tpu.pipeline_mode<synchronous>, transform_indices = @transform_5, window_bounds = array<i64: 8, 256>}, {pipeline_mode = #tpu.pipeline_mode<synchronous>, transform_indices = @transform_6, window_bounds = array<i64: 8, 256>}]} {
    %c0 = arith.constant 0 : index
    %c0_0 = arith.constant 0 : index
    %0 = vector.load %arg1[%c0, %c0_0] : memref<64x768xf32, #tpu.memory_space<vmem>>, vector<64x768xf32>
    %c0_1 = arith.constant 0 : index
    %c0_2 = arith.constant 0 : index
    %1 = vector.load %arg2[%c0_1, %c0_2] : memref<768x768xf32, #tpu.memory_space<vmem>>, vector<768x768xf32>
    %cst = arith.constant dense<0.000000e+00> : vector<64x768xf32>
    %2 = tpu.matmul %0, %1, %cst {dimension_numbers = #tpu.dot_dimension_numbers<[1], [0], [0], [1], [0, 0, 1, 1], [], []>} : vector<64x768xf32>, vector<768x768xf32>, vector<64x768xf32> -> vector<64x768xf32>
    %c0_3 = arith.constant 0 : index
    %c0_4 = arith.constant 0 : index
    %3 = vector.load %arg3[%c0_3, %c0_4] : memref<1x768xf32, #tpu.memory_space<vmem>>, vector<1x768xf32>
    %4 = vector.broadcast %3 : vector<1x768xf32> to vector<64x768xf32>
    %5 = arith.addf %2, %4 : vector<64x768xf32>
    %c0_5 = arith.constant 0 : index
    %c0_6 = arith.constant 0 : index
    %6 = vector.load %arg8[%c0_5, %c0_6] : memref<64x768xf32, #tpu.memory_space<vmem>>, vector<64x768xf32>
    tpu.vector_store %arg8[%c0_5, %c0_6], %5 {strides = array<i32>} : memref<64x768xf32, #tpu.memory_space<vmem>>, vector<64x768xf32>,
    %c0_7 = arith.constant 0 : index
    %c0_8 = arith.constant 0 : index
    %7 = vector.load %arg4[%c0_7, %c0_8] : memref<256x768xf32, #tpu.memory_space<vmem>>, vector<256x768xf32>
    %c0_9 = arith.constant 0 : index
    %c0_10 = arith.constant 0 : index
    %8 = vector.load %arg5[%c0_9, %c0_10] : memref<1x768xf32, #tpu.memory_space<vmem>>, vector<1x768xf32>
    %c0_11 = arith.constant 0 : index
    %c0_12 = arith.constant 0 : index
    %9 = vector.load %arg6[%c0_11, %c0_12] : memref<8x256xf32, #tpu.memory_space<vmem>>, vector<8x256xf32>
    %c0_i32 = arith.constant 0 : i32
    %c8_i32 = arith.constant 8 : i32
    %10 = arith.muli %c0_i32, %c8_i32 : i32
    %11 = tpu.assume_multiple %10, 8 : i32
    %12 = arith.index_cast %11 : i32 to index
    %c0_13 = arith.constant 0 : index
    %13 = vector.load %arg8[%12, %c0_13] : memref<64x768xf32, #tpu.memory_space<vmem>>, vector<8x768xf32>
    %cst_14 = arith.constant dense<0.000000e+00> : vector<8x768xf32>
    %14 = tpu.matmul %9, %7, %cst_14 {dimension_numbers = #tpu.dot_dimension_numbers<[1], [0], [0], [1], [0, 0, 1, 1], [], []>} : vector<8x256xf32>, vector<256x768xf32>, vector<8x768xf32> -> vector<8x768xf32>
    %15 = vector.broadcast %8 : vector<1x768xf32> to vector<8x768xf32>
    %16 = arith.addf %14, %15 : vector<8x768xf32>
    %17 = vector.extract_strided_slice %13 {offsets = [0, 0], sizes = [8, 256], strides = [1, 1]} : vector<8x768xf32> to vector<8x256xf32>
    %18 = vector.extract_strided_slice %16 {offsets = [0, 0], sizes = [8, 256], strides = [1, 1]} : vector<8x768xf32> to vector<8x256xf32>
    %19 = arith.addf %17, %18 : vector<8x256xf32>
    %20 = arith.negf %19 : vector<8x256xf32>
    %21 = math.exp %20 : vector<8x256xf32>
    %cst_15 = arith.constant 1.000000e+00 : f32
    %22 = vector.broadcast %cst_15 : f32 to vector<8x256xf32>
    %23 = arith.addf %22, %21 : vector<8x256xf32>
    %24 = arith.divf %22, %23 : vector<8x256xf32>
    %25 = vector.extract_strided_slice %13 {offsets = [0, 256], sizes = [8, 256], strides = [1, 1]} : vector<8x768xf32> to vector<8x256xf32>
    %26 = vector.extract_strided_slice %16 {offsets = [0, 256], sizes = [8, 256], strides = [1, 1]} : vector<8x768xf32> to vector<8x256xf32>
    %27 = arith.addf %25, %26 : vector<8x256xf32>
    %28 = arith.negf %27 : vector<8x256xf32>
    %29 = math.exp %28 : vector<8x256xf32>
    %cst_16 = arith.constant 1.000000e+00 : f32
    %30 = vector.broadcast %cst_16 : f32 to vector<8x256xf32>
    %31 = arith.addf %30, %29 : vector<8x256xf32>
    %32 = arith.divf %30, %31 : vector<8x256xf32>
    %33 = vector.extract_strided_slice %13 {offsets = [0, 512], sizes = [8, 256], strides = [1, 1]} : vector<8x768xf32> to vector<8x256xf32>
    %34 = vector.extract_strided_slice %16 {offsets = [0, 512], sizes = [8, 256], strides = [1, 1]} : vector<8x768xf32> to vector<8x256xf32>
    %35 = arith.mulf %24, %34 : vector<8x256xf32>
    %36 = arith.addf %33, %35 : vector<8x256xf32>
    %37 = math.tanh %36 : vector<8x256xf32>
    %cst_17 = arith.constant 1.000000e+00 : f32
    %38 = vector.broadcast %cst_17 : f32 to vector<8x256xf32>
    %39 = arith.subf %38, %32 : vector<8x256xf32>
    %40 = arith.mulf %39, %37 : vector<8x256xf32>
    %41 = arith.mulf %32, %9 : vector<8x256xf32>
    %42 = arith.addf %40, %41 : vector<8x256xf32>
    %c1_i32 = arith.constant 1 : i32
    %c8_i32_18 = arith.constant 8 : i32
    %43 = arith.muli %c1_i32, %c8_i32_18 : i32
    %44 = tpu.assume_multiple %43, 8 : i32
    %45 = arith.index_cast %44 : i32 to index
    %c0_19 = arith.constant 0 : index
    %46 = vector.load %arg8[%45, %c0_19] : memref<64x768xf32, #tpu.memory_space<vmem>>, vector<8x768xf32>
    %cst_20 = arith.constant dense<0.000000e+00> : vector<8x768xf32>
    %47 = tpu.matmul %42, %7, %cst_20 {dimension_numbers = #tpu.dot_dimension_numbers<[1], [0], [0], [1], [0, 0, 1, 1], [], []>} : vector<8x256xf32>, vector<256x768xf32>, vector<8x768xf32> -> vector<8x768xf32>
    %48 = vector.broadcast %8 : vector<1x768xf32> to vector<8x768xf32>
    %49 = arith.addf %47, %48 : vector<8x768xf32>
    %50 = vector.extract_strided_slice %46 {offsets = [0, 0], sizes = [8, 256], strides = [1, 1]} : vector<8x768xf32> to vector<8x256xf32>
    %51 = vector.extract_strided_slice %49 {offsets = [0, 0], sizes = [8, 256], strides = [1, 1]} : vector<8x768xf32> to vector<8x256xf32>
    %52 = arith.addf %50, %51 : vector<8x256xf32>
    %53 = arith.negf %52 : vector<8x256xf32>
    %54 = math.exp %53 : vector<8x256xf32>
    %cst_21 = arith.constant 1.000000e+00 : f32
    %55 = vector.broadcast %cst_21 : f32 to vector<8x256xf32>
    %56 = arith.addf %55, %54 : vector<8x256xf32>
    %57 = arith.divf %55, %56 : vector<8x256xf32>
    %58 = vector.extract_strided_slice %46 {offsets = [0, 256], sizes = [8, 256], strides = [1, 1]} : vector<8x768xf32> to vector<8x256xf32>
    %59 = vector.extract_strided_slice %49 {offsets = [0, 256], sizes = [8, 256], strides = [1, 1]} : vector<8x768xf32> to vector<8x256xf32>
    %60 = arith.addf %58, %59 : vector<8x256xf32>
    %61 = arith.negf %60 : vector<8x256xf32>
    %62 = math.exp %61 : vector<8x256xf32>
    %cst_22 = arith.constant 1.000000e+00 : f32
    %63 = vector.broadcast %cst_22 : f32 to vector<8x256xf32>
    %64 = arith.addf %63, %62 : vector<8x256xf32>
    %65 = arith.divf %63, %64 : vector<8x256xf32>
    %66 = vector.extract_strided_slice %46 {offsets = [0, 512], sizes = [8, 256], strides = [1, 1]} : vector<8x768xf32> to vector<8x256xf32>
    %67 = vector.extract_strided_slice %49 {offsets = [0, 512], sizes = [8, 256], strides = [1, 1]} : vector<8x768xf32> to vector<8x256xf32>
    %68 = arith.mulf %57, %67 : vector<8x256xf32>
    %69 = arith.addf %66, %68 : vector<8x256xf32>
    %70 = math.tanh %69 : vector<8x256xf32>
    %cst_23 = arith.constant 1.000000e+00 : f32
    %71 = vector.broadcast %cst_23 : f32 to vector<8x256xf32>
    %72 = arith.subf %71, %65 : vector<8x256xf32>
    %73 = arith.mulf %72, %70 : vector<8x256xf32>
    %74 = arith.mulf %65, %42 : vector<8x256xf32>
    %75 = arith.addf %73, %74 : vector<8x256xf32>
    %c2_i32 = arith.constant 2 : i32
    %c8_i32_24 = arith.constant 8 : i32
    %76 = arith.muli %c2_i32, %c8_i32_24 : i32
    %77 = tpu.assume_multiple %76, 8 : i32
    %78 = arith.index_cast %77 : i32 to index
    %c0_25 = arith.constant 0 : index
    %79 = vector.load %arg8[%78, %c0_25] : memref<64x768xf32, #tpu.memory_space<vmem>>, vector<8x768xf32>
    %cst_26 = arith.constant dense<0.000000e+00> : vector<8x768xf32>
    %80 = tpu.matmul %75, %7, %cst_26 {dimension_numbers = #tpu.dot_dimension_numbers<[1], [0], [0], [1], [0, 0, 1, 1], [], []>} : vector<8x256xf32>, vector<256x768xf32>, vector<8x768xf32> -> vector<8x768xf32>
    %81 = vector.broadcast %8 : vector<1x768xf32> to vector<8x768xf32>
    %82 = arith.addf %80, %81 : vector<8x768xf32>
    %83 = vector.extract_strided_slice %79 {offsets = [0, 0], sizes = [8, 256], strides = [1, 1]} : vector<8x768xf32> to vector<8x256xf32>
    %84 = vector.extract_strided_slice %82 {offsets = [0, 0], sizes = [8, 256], strides = [1, 1]} : vector<8x768xf32> to vector<8x256xf32>
    %85 = arith.addf %83, %84 : vector<8x256xf32>
    %86 = arith.negf %85 : vector<8x256xf32>
    %87 = math.exp %86 : vector<8x256xf32>
    %cst_27 = arith.constant 1.000000e+00 : f32
    %88 = vector.broadcast %cst_27 : f32 to vector<8x256xf32>
    %89 = arith.addf %88, %87 : vector<8x256xf32>
    %90 = arith.divf %88, %89 : vector<8x256xf32>
    %91 = vector.extract_strided_slice %79 {offsets = [0, 256], sizes = [8, 256], strides = [1, 1]} : vector<8x768xf32> to vector<8x256xf32>
    %92 = vector.extract_strided_slice %82 {offsets = [0, 256], sizes = [8, 256], strides = [1, 1]} : vector<8x768xf32> to vector<8x256xf32>
    %93 = arith.addf %91, %92 : vector<8x256xf32>
    %94 = arith.negf %93 : vector<8x256xf32>
    %95 = math.exp %94 : vector<8x256xf32>
    %cst_28 = arith.constant 1.000000e+00 : f32
    %96 = vector.broadcast %cst_28 : f32 to vector<8x256xf32>
    %97 = arith.addf %96, %95 : vector<8x256xf32>
    %98 = arith.divf %96, %97 : vector<8x256xf32>
    %99 = vector.extract_strided_slice %79 {offsets = [0, 512], sizes = [8, 256], strides = [1, 1]} : vector<8x768xf32> to vector<8x256xf32>
    %100 = vector.extract_strided_slice %82 {offsets = [0, 512], sizes = [8, 256], strides = [1, 1]} : vector<8x768xf32> to vector<8x256xf32>
    %101 = arith.mulf %90, %100 : vector<8x256xf32>
    %102 = arith.addf %99, %101 : vector<8x256xf32>
    %103 = math.tanh %102 : vector<8x256xf32>
    %cst_29 = arith.constant 1.000000e+00 : f32
    %104 = vector.broadcast %cst_29 : f32 to vector<8x256xf32>
    %105 = arith.subf %104, %98 : vector<8x256xf32>
    %106 = arith.mulf %105, %103 : vector<8x256xf32>
    %107 = arith.mulf %98, %75 : vector<8x256xf32>
    %108 = arith.addf %106, %107 : vector<8x256xf32>
    %c3_i32 = arith.constant 3 : i32
    %c8_i32_30 = arith.constant 8 : i32
    %109 = arith.muli %c3_i32, %c8_i32_30 : i32
    %110 = tpu.assume_multiple %109, 8 : i32
    %111 = arith.index_cast %110 : i32 to index
    %c0_31 = arith.constant 0 : index
    %112 = vector.load %arg8[%111, %c0_31] : memref<64x768xf32, #tpu.memory_space<vmem>>, vector<8x768xf32>
    %cst_32 = arith.constant dense<0.000000e+00> : vector<8x768xf32>
    %113 = tpu.matmul %108, %7, %cst_32 {dimension_numbers = #tpu.dot_dimension_numbers<[1], [0], [0], [1], [0, 0, 1, 1], [], []>} : vector<8x256xf32>, vector<256x768xf32>, vector<8x768xf32> -> vector<8x768xf32>
    %114 = vector.broadcast %8 : vector<1x768xf32> to vector<8x768xf32>
    %115 = arith.addf %113, %114 : vector<8x768xf32>
    %116 = vector.extract_strided_slice %112 {offsets = [0, 0], sizes = [8, 256], strides = [1, 1]} : vector<8x768xf32> to vector<8x256xf32>
    %117 = vector.extract_strided_slice %115 {offsets = [0, 0], sizes = [8, 256], strides = [1, 1]} : vector<8x768xf32> to vector<8x256xf32>
    %118 = arith.addf %116, %117 : vector<8x256xf32>
    %119 = arith.negf %118 : vector<8x256xf32>
    %120 = math.exp %119 : vector<8x256xf32>
    %cst_33 = arith.constant 1.000000e+00 : f32
    %121 = vector.broadcast %cst_33 : f32 to vector<8x256xf32>
    %122 = arith.addf %121, %120 : vector<8x256xf32>
    %123 = arith.divf %121, %122 : vector<8x256xf32>
    %124 = vector.extract_strided_slice %112 {offsets = [0, 256], sizes = [8, 256], strides = [1, 1]} : vector<8x768xf32> to vector<8x256xf32>
    %125 = vector.extract_strided_slice %115 {offsets = [0, 256], sizes = [8, 256], strides = [1, 1]} : vector<8x768xf32> to vector<8x256xf32>
    %126 = arith.addf %124, %125 : vector<8x256xf32>
    %127 = arith.negf %126 : vector<8x256xf32>
    %128 = math.exp %127 : vector<8x256xf32>
    %cst_34 = arith.constant 1.000000e+00 : f32
    %129 = vector.broadcast %cst_34 : f32 to vector<8x256xf32>
    %130 = arith.addf %129, %128 : vector<8x256xf32>
    %131 = arith.divf %129, %130 : vector<8x256xf32>
    %132 = vector.extract_strided_slice %112 {offsets = [0, 512], sizes = [8, 256], strides = [1, 1]} : vector<8x768xf32> to vector<8x256xf32>
    %133 = vector.extract_strided_slice %115 {offsets = [0, 512], sizes = [8, 256], strides = [1, 1]} : vector<8x768xf32> to vector<8x256xf32>
    %134 = arith.mulf %123, %133 : vector<8x256xf32>
    %135 = arith.addf %132, %134 : vector<8x256xf32>
    %136 = math.tanh %135 : vector<8x256xf32>
    %cst_35 = arith.constant 1.000000e+00 : f32
    %137 = vector.broadcast %cst_35 : f32 to vector<8x256xf32>
    %138 = arith.subf %137, %131 : vector<8x256xf32>
    %139 = arith.mulf %138, %136 : vector<8x256xf32>
    %140 = arith.mulf %131, %108 : vector<8x256xf32>
    %141 = arith.addf %139, %140 : vector<8x256xf32>
    %c4_i32 = arith.constant 4 : i32
    %c8_i32_36 = arith.constant 8 : i32
    %142 = arith.muli %c4_i32, %c8_i32_36 : i32
    %143 = tpu.assume_multiple %142, 8 : i32
    %144 = arith.index_cast %143 : i32 to index
    %c0_37 = arith.constant 0 : index
    %145 = vector.load %arg8[%144, %c0_37] : memref<64x768xf32, #tpu.memory_space<vmem>>, vector<8x768xf32>
    %cst_38 = arith.constant dense<0.000000e+00> : vector<8x768xf32>
    %146 = tpu.matmul %141, %7, %cst_38 {dimension_numbers = #tpu.dot_dimension_numbers<[1], [0], [0], [1], [0, 0, 1, 1], [], []>} : vector<8x256xf32>, vector<256x768xf32>, vector<8x768xf32> -> vector<8x768xf32>
    %147 = vector.broadcast %8 : vector<1x768xf32> to vector<8x768xf32>
    %148 = arith.addf %146, %147 : vector<8x768xf32>
    %149 = vector.extract_strided_slice %145 {offsets = [0, 0], sizes = [8, 256], strides = [1, 1]} : vector<8x768xf32> to vector<8x256xf32>
    %150 = vector.extract_strided_slice %148 {offsets = [0, 0], sizes = [8, 256], strides = [1, 1]} : vector<8x768xf32> to vector<8x256xf32>
    %151 = arith.addf %149, %150 : vector<8x256xf32>
    %152 = arith.negf %151 : vector<8x256xf32>
    %153 = math.exp %152 : vector<8x256xf32>
    %cst_39 = arith.constant 1.000000e+00 : f32
    %154 = vector.broadcast %cst_39 : f32 to vector<8x256xf32>
    %155 = arith.addf %154, %153 : vector<8x256xf32>
    %156 = arith.divf %154, %155 : vector<8x256xf32>
    %157 = vector.extract_strided_slice %145 {offsets = [0, 256], sizes = [8, 256], strides = [1, 1]} : vector<8x768xf32> to vector<8x256xf32>
    %158 = vector.extract_strided_slice %148 {offsets = [0, 256], sizes = [8, 256], strides = [1, 1]} : vector<8x768xf32> to vector<8x256xf32>
    %159 = arith.addf %157, %158 : vector<8x256xf32>
    %160 = arith.negf %159 : vector<8x256xf32>
    %161 = math.exp %160 : vector<8x256xf32>
    %cst_40 = arith.constant 1.000000e+00 : f32
    %162 = vector.broadcast %cst_40 : f32 to vector<8x256xf32>
    %163 = arith.addf %162, %161 : vector<8x256xf32>
    %164 = arith.divf %162, %163 : vector<8x256xf32>
    %165 = vector.extract_strided_slice %145 {offsets = [0, 512], sizes = [8, 256], strides = [1, 1]} : vector<8x768xf32> to vector<8x256xf32>
    %166 = vector.extract_strided_slice %148 {offsets = [0, 512], sizes = [8, 256], strides = [1, 1]} : vector<8x768xf32> to vector<8x256xf32>
    %167 = arith.mulf %156, %166 : vector<8x256xf32>
    %168 = arith.addf %165, %167 : vector<8x256xf32>
    %169 = math.tanh %168 : vector<8x256xf32>
    %cst_41 = arith.constant 1.000000e+00 : f32
    %170 = vector.broadcast %cst_41 : f32 to vector<8x256xf32>
    %171 = arith.subf %170, %164 : vector<8x256xf32>
    %172 = arith.mulf %171, %169 : vector<8x256xf32>
    %173 = arith.mulf %164, %141 : vector<8x256xf32>
    %174 = arith.addf %172, %173 : vector<8x256xf32>
    %c5_i32 = arith.constant 5 : i32
    %c8_i32_42 = arith.constant 8 : i32
    %175 = arith.muli %c5_i32, %c8_i32_42 : i32
    %176 = tpu.assume_multiple %175, 8 : i32
    %177 = arith.index_cast %176 : i32 to index
    %c0_43 = arith.constant 0 : index
    %178 = vector.load %arg8[%177, %c0_43] : memref<64x768xf32, #tpu.memory_space<vmem>>, vector<8x768xf32>
    %cst_44 = arith.constant dense<0.000000e+00> : vector<8x768xf32>
    %179 = tpu.matmul %174, %7, %cst_44 {dimension_numbers = #tpu.dot_dimension_numbers<[1], [0], [0], [1], [0, 0, 1, 1], [], []>} : vector<8x256xf32>, vector<256x768xf32>, vector<8x768xf32> -> vector<8x768xf32>
    %180 = vector.broadcast %8 : vector<1x768xf32> to vector<8x768xf32>
    %181 = arith.addf %179, %180 : vector<8x768xf32>
    %182 = vector.extract_strided_slice %178 {offsets = [0, 0], sizes = [8, 256], strides = [1, 1]} : vector<8x768xf32> to vector<8x256xf32>
    %183 = vector.extract_strided_slice %181 {offsets = [0, 0], sizes = [8, 256], strides = [1, 1]} : vector<8x768xf32> to vector<8x256xf32>
    %184 = arith.addf %182, %183 : vector<8x256xf32>
    %185 = arith.negf %184 : vector<8x256xf32>
    %186 = math.exp %185 : vector<8x256xf32>
    %cst_45 = arith.constant 1.000000e+00 : f32
    %187 = vector.broadcast %cst_45 : f32 to vector<8x256xf32>
    %188 = arith.addf %187, %186 : vector<8x256xf32>
    %189 = arith.divf %187, %188 : vector<8x256xf32>
    %190 = vector.extract_strided_slice %178 {offsets = [0, 256], sizes = [8, 256], strides = [1, 1]} : vector<8x768xf32> to vector<8x256xf32>
    %191 = vector.extract_strided_slice %181 {offsets = [0, 256], sizes = [8, 256], strides = [1, 1]} : vector<8x768xf32> to vector<8x256xf32>
    %192 = arith.addf %190, %191 : vector<8x256xf32>
    %193 = arith.negf %192 : vector<8x256xf32>
    %194 = math.exp %193 : vector<8x256xf32>
    %cst_46 = arith.constant 1.000000e+00 : f32
    %195 = vector.broadcast %cst_46 : f32 to vector<8x256xf32>
    %196 = arith.addf %195, %194 : vector<8x256xf32>
    %197 = arith.divf %195, %196 : vector<8x256xf32>
    %198 = vector.extract_strided_slice %178 {offsets = [0, 512], sizes = [8, 256], strides = [1, 1]} : vector<8x768xf32> to vector<8x256xf32>
    %199 = vector.extract_strided_slice %181 {offsets = [0, 512], sizes = [8, 256], strides = [1, 1]} : vector<8x768xf32> to vector<8x256xf32>
    %200 = arith.mulf %189, %199 : vector<8x256xf32>
    %201 = arith.addf %198, %200 : vector<8x256xf32>
    %202 = math.tanh %201 : vector<8x256xf32>
    %cst_47 = arith.constant 1.000000e+00 : f32
    %203 = vector.broadcast %cst_47 : f32 to vector<8x256xf32>
    %204 = arith.subf %203, %197 : vector<8x256xf32>
    %205 = arith.mulf %204, %202 : vector<8x256xf32>
    %206 = arith.mulf %197, %174 : vector<8x256xf32>
    %207 = arith.addf %205, %206 : vector<8x256xf32>
    %c6_i32 = arith.constant 6 : i32
    %c8_i32_48 = arith.constant 8 : i32
    %208 = arith.muli %c6_i32, %c8_i32_48 : i32
    %209 = tpu.assume_multiple %208, 8 : i32
    %210 = arith.index_cast %209 : i32 to index
    %c0_49 = arith.constant 0 : index
    %211 = vector.load %arg8[%210, %c0_49] : memref<64x768xf32, #tpu.memory_space<vmem>>, vector<8x768xf32>
    %cst_50 = arith.constant dense<0.000000e+00> : vector<8x768xf32>
    %212 = tpu.matmul %207, %7, %cst_50 {dimension_numbers = #tpu.dot_dimension_numbers<[1], [0], [0], [1], [0, 0, 1, 1], [], []>} : vector<8x256xf32>, vector<256x768xf32>, vector<8x768xf32> -> vector<8x768xf32>
    %213 = vector.broadcast %8 : vector<1x768xf32> to vector<8x768xf32>
    %214 = arith.addf %212, %213 : vector<8x768xf32>
    %215 = vector.extract_strided_slice %211 {offsets = [0, 0], sizes = [8, 256], strides = [1, 1]} : vector<8x768xf32> to vector<8x256xf32>
    %216 = vector.extract_strided_slice %214 {offsets = [0, 0], sizes = [8, 256], strides = [1, 1]} : vector<8x768xf32> to vector<8x256xf32>
    %217 = arith.addf %215, %216 : vector<8x256xf32>
    %218 = arith.negf %217 : vector<8x256xf32>
    %219 = math.exp %218 : vector<8x256xf32>
    %cst_51 = arith.constant 1.000000e+00 : f32
    %220 = vector.broadcast %cst_51 : f32 to vector<8x256xf32>
    %221 = arith.addf %220, %219 : vector<8x256xf32>
    %222 = arith.divf %220, %221 : vector<8x256xf32>
    %223 = vector.extract_strided_slice %211 {offsets = [0, 256], sizes = [8, 256], strides = [1, 1]} : vector<8x768xf32> to vector<8x256xf32>
    %224 = vector.extract_strided_slice %214 {offsets = [0, 256], sizes = [8, 256], strides = [1, 1]} : vector<8x768xf32> to vector<8x256xf32>
    %225 = arith.addf %223, %224 : vector<8x256xf32>
    %226 = arith.negf %225 : vector<8x256xf32>
    %227 = math.exp %226 : vector<8x256xf32>
    %cst_52 = arith.constant 1.000000e+00 : f32
    %228 = vector.broadcast %cst_52 : f32 to vector<8x256xf32>
    %229 = arith.addf %228, %227 : vector<8x256xf32>
    %230 = arith.divf %228, %229 : vector<8x256xf32>
    %231 = vector.extract_strided_slice %211 {offsets = [0, 512], sizes = [8, 256], strides = [1, 1]} : vector<8x768xf32> to vector<8x256xf32>
    %232 = vector.extract_strided_slice %214 {offsets = [0, 512], sizes = [8, 256], strides = [1, 1]} : vector<8x768xf32> to vector<8x256xf32>
    %233 = arith.mulf %222, %232 : vector<8x256xf32>
    %234 = arith.addf %231, %233 : vector<8x256xf32>
    %235 = math.tanh %234 : vector<8x256xf32>
    %cst_53 = arith.constant 1.000000e+00 : f32
    %236 = vector.broadcast %cst_53 : f32 to vector<8x256xf32>
    %237 = arith.subf %236, %230 : vector<8x256xf32>
    %238 = arith.mulf %237, %235 : vector<8x256xf32>
    %239 = arith.mulf %230, %207 : vector<8x256xf32>
    %240 = arith.addf %238, %239 : vector<8x256xf32>
    %c7_i32 = arith.constant 7 : i32
    %c8_i32_54 = arith.constant 8 : i32
    %241 = arith.muli %c7_i32, %c8_i32_54 : i32
    %242 = tpu.assume_multiple %241, 8 : i32
    %243 = arith.index_cast %242 : i32 to index
    %c0_55 = arith.constant 0 : index
    %244 = vector.load %arg8[%243, %c0_55] : memref<64x768xf32, #tpu.memory_space<vmem>>, vector<8x768xf32>
    %cst_56 = arith.constant dense<0.000000e+00> : vector<8x768xf32>
    %245 = tpu.matmul %240, %7, %cst_56 {dimension_numbers = #tpu.dot_dimension_numbers<[1], [0], [0], [1], [0, 0, 1, 1], [], []>} : vector<8x256xf32>, vector<256x768xf32>, vector<8x768xf32> -> vector<8x768xf32>
    %246 = vector.broadcast %8 : vector<1x768xf32> to vector<8x768xf32>
    %247 = arith.addf %245, %246 : vector<8x768xf32>
    %248 = vector.extract_strided_slice %244 {offsets = [0, 0], sizes = [8, 256], strides = [1, 1]} : vector<8x768xf32> to vector<8x256xf32>
    %249 = vector.extract_strided_slice %247 {offsets = [0, 0], sizes = [8, 256], strides = [1, 1]} : vector<8x768xf32> to vector<8x256xf32>
    %250 = arith.addf %248, %249 : vector<8x256xf32>
    %251 = arith.negf %250 : vector<8x256xf32>
    %252 = math.exp %251 : vector<8x256xf32>
    %cst_57 = arith.constant 1.000000e+00 : f32
    %253 = vector.broadcast %cst_57 : f32 to vector<8x256xf32>
    %254 = arith.addf %253, %252 : vector<8x256xf32>
    %255 = arith.divf %253, %254 : vector<8x256xf32>
    %256 = vector.extract_strided_slice %244 {offsets = [0, 256], sizes = [8, 256], strides = [1, 1]} : vector<8x768xf32> to vector<8x256xf32>
    %257 = vector.extract_strided_slice %247 {offsets = [0, 256], sizes = [8, 256], strides = [1, 1]} : vector<8x768xf32> to vector<8x256xf32>
    %258 = arith.addf %256, %257 : vector<8x256xf32>
    %259 = arith.negf %258 : vector<8x256xf32>
    %260 = math.exp %259 : vector<8x256xf32>
    %cst_58 = arith.constant 1.000000e+00 : f32
    %261 = vector.broadcast %cst_58 : f32 to vector<8x256xf32>
    %262 = arith.addf %261, %260 : vector<8x256xf32>
    %263 = arith.divf %261, %262 : vector<8x256xf32>
    %264 = vector.extract_strided_slice %244 {offsets = [0, 512], sizes = [8, 256], strides = [1, 1]} : vector<8x768xf32> to vector<8x256xf32>
    %265 = vector.extract_strided_slice %247 {offsets = [0, 512], sizes = [8, 256], strides = [1, 1]} : vector<8x768xf32> to vector<8x256xf32>
    %266 = arith.mulf %255, %265 : vector<8x256xf32>
    %267 = arith.addf %264, %266 : vector<8x256xf32>
    %268 = math.tanh %267 : vector<8x256xf32>
    %cst_59 = arith.constant 1.000000e+00 : f32
    %269 = vector.broadcast %cst_59 : f32 to vector<8x256xf32>
    %270 = arith.subf %269, %263 : vector<8x256xf32>
    %271 = arith.mulf %270, %268 : vector<8x256xf32>
    %272 = arith.mulf %263, %240 : vector<8x256xf32>
    %273 = arith.addf %271, %272 : vector<8x256xf32>
    %c8_i32_60 = arith.constant 8 : i32
    %c0_61 = arith.constant 0 : index
    %c0_62 = arith.constant 0 : index
    %274 = vector.load %arg7[%c0_61, %c0_62] : memref<8x256xf32, #tpu.memory_space<vmem>>, vector<8x256xf32>
    tpu.vector_store %arg7[%c0_61, %c0_62], %273 {strides = array<i32>} : memref<8x256xf32, #tpu.memory_space<vmem>>, vector<8x256xf32>,
    return
  }
  func.func @transform_0(%arg0: i32) -> (i32, i32) {
    %c0_i32 = arith.constant 0 : i32
    %c0_i32_0 = arith.constant 0 : i32
    %c0_i32_1 = arith.constant 0 : i32
    return %c0_i32, %c0_i32_0 : i32, i32
  }
  func.func @transform_1(%arg0: i32) -> (i32, i32) {
    %c0_i32 = arith.constant 0 : i32
    %c0_i32_0 = arith.constant 0 : i32
    %c0_i32_1 = arith.constant 0 : i32
    return %c0_i32, %c0_i32_0 : i32, i32
  }
  func.func @transform_2(%arg0: i32) -> (i32, i32) {
    %c0_i32 = arith.constant 0 : i32
    %c0_i32_0 = arith.constant 0 : i32
    %c0_i32_1 = arith.constant 0 : i32
    return %c0_i32, %c0_i32_0 : i32, i32
  }
  func.func @transform_3(%arg0: i32) -> (i32, i32) {
    %c0_i32 = arith.constant 0 : i32
    %c0_i32_0 = arith.constant 0 : i32
    %c0_i32_1 = arith.constant 0 : i32
    return %c0_i32, %c0_i32_0 : i32, i32
  }
  func.func @transform_4(%arg0: i32) -> (i32, i32) {
    %c0_i32 = arith.constant 0 : i32
    %c0_i32_0 = arith.constant 0 : i32
    %c0_i32_1 = arith.constant 0 : i32
    return %c0_i32, %c0_i32_0 : i32, i32
  }
  func.func @transform_5(%arg0: i32) -> (i32, i32) {
    %c0_i32 = arith.constant 0 : i32
    %c0_i32_0 = arith.constant 0 : i32
    %c0_i32_1 = arith.constant 0 : i32
    return %c0_i32, %c0_i32_0 : i32, i32
  }
  func.func @transform_6(%arg0: i32) -> (i32, i32) {
    %c0_i32 = arith.constant 0 : i32
    %c0_i32_0 = arith.constant 0 : i32
    %c0_i32_1 = arith.constant 0 : i32
    return %c0_i32, %c0_i32_0 : i32, i32
  }
}

</mosaic_0001>

<llo_original>
// kernel: char_embedding_forward.1
$region0: #{char_embedding_forward.1}
  #allocation0 [shape = 'u32[]', space=smem, size = 0x4, offset = 0x4, fixed_abs, tag = 'smem constant byte address 0x4 - core index']
  #allocation1 [shape = 'u32[144,128]{1,0:T(1,128)}', space=vmem, size = 0x12000, scoped, tag = 'internal scratch']
  #allocation2 [shape = 'f32[64,768]{1,0:T(8,128)}', space=vmem, size = 0x30000, scoped, tag = 'scratch operand']
  %s0 = inlined_call_operand.hbm [shape: f32[64,768], index: 0, kind: input, shape index: {}]
  %s1 = inlined_call_operand.hbm [shape: f32[768,768], index: 1, kind: input, shape index: {}]
  %s2 = inlined_call_operand.hbm [shape: f32[1,768], index: 2, kind: input, shape index: {}]
  %s3 = inlined_call_operand.hbm [shape: f32[256,768], index: 3, kind: input, shape index: {}]
  %s4 = inlined_call_operand.hbm [shape: f32[1,768], index: 4, kind: input, shape index: {}]
  %s5 = inlined_call_operand.hbm [shape: f32[8,256], index: 5, kind: input, shape index: {}]
  %s6 = inlined_call_operand.hbm [shape: f32[8,256], index: 6, kind: output, shape index: {}]
  %s7 = sld [smem:[#allocation0]]
  $region58: #{char_embedding_forward.1} parent=0
    _
  %s9 = ssub.s32 1, %s7
  %s10 = scalar_select 0, %s9, %s7
  $region1: #{char_embedding_forward.1} parent=0
    #allocation3 [shape = 'u8[196608]{0}', space=vmem, size = 0x30000, scoped, tag = 'input window, operand 0, single buffered']
    #allocation4 [shape = 's32[1]{0}', space=sflag, size = 0x4, scoped, tag = 'scoped memory for char_embedding_forward.1']
    #allocation5 [shape = 's32[1]{0}', space=sflag, size = 0x4, scoped, tag = 'scoped memory for char_embedding_forward.1']
    #allocation6 [shape = 'u8[2359296]{0}', space=vmem, size = 0x240000, scoped, tag = 'input window, operand 1, single buffered']
    #allocation7 [shape = 's32[1]{0}', space=sflag, size = 0x4, scoped, tag = 'scoped memory for char_embedding_forward.1']
    #allocation8 [shape = 'u8[3072]{0}', space=vmem, size = 0xc00, scoped, tag = 'input window, operand 2, single buffered']
    #allocation9 [shape = 'u8[786432]{0}', space=vmem, size = 0xc0000, scoped, tag = 'input window, operand 3, single buffered']
    #allocation10 [shape = 's32[1]{0}', space=sflag, size = 0x4, scoped, tag = 'scoped memory for char_embedding_forward.1']
    #allocation11 [shape = 'u8[3072]{0}', space=vmem, size = 0xc00, scoped, tag = 'input window, operand 4, single buffered']
    #allocation12 [shape = 'u8[8192]{0}', space=vmem, size = 0x2000, scoped, tag = 'input window, operand 5, single buffered']
    #allocation13 [shape = 's32[1]{0}', space=sflag, size = 0x4, scoped, tag = 'scoped memory for char_embedding_forward.1']
    #allocation14 [shape = 'u8[8192]{0}', space=vmem, size = 0x2000, scoped, tag = 'output window, operand 0, single buffered']
    %11 = vsyncpa [#allocation4], 0
    %12 = vsyncpa [#allocation7], 0
    %13 = vsyncpa [#allocation10], 0
    %14 = vsyncpa [#allocation13], 0
    %15 = vsyncpa [#allocation5], 0
    // Predicated region
    $region2: #{char_embedding_forward.1} parent=1 // pred_check
      _
    $region3: #{char_embedding_forward.1} parent=1 // pred_check_branch
      %17 = sbr.rel (0) target = $region5
    $region4: #{char_embedding_forward.1} parent=1 // pred_region
      %s19 = ssub.s32 6144, 6144
      %20 = vsyncadd [#allocation4], %s19
      %s21 = sshll.u32 [#allocation3], 4
      %s22 = int_to_ptr.vmem [resolvable:$true] %s21
      %27 = dma.hbm_to_vmem [thread:$0]  %s0, 6144, %s22, [#allocation4], 768, 768, 48
    $region5: #{char_embedding_forward.1} parent=1 // pred_fallthru
      _
    // Predicated region
    $region6: #{char_embedding_forward.1} parent=1 // pred_check
      _
    $region7: #{char_embedding_forward.1} parent=1 // pred_check_branch
      %29 = sbr.rel (0) target = $region9
    $region8: #{char_embedding_forward.1} parent=1 // pred_region
      %s31 = ssub.s32 73728, 73728
      %32 = vsyncadd [#allocation7], %s31
      %s33 = sshll.u32 [#allocation6], 4
      %s34 = int_to_ptr.vmem [resolvable:$true] %s33
      %39 = dma.hbm_to_vmem [thread:$0]  %s1, 73728, %s34, [#allocation7], 768, 768, 48
    $region9: #{char_embedding_forward.1} parent=1 // pred_fallthru
      _
    // Predicated region
    $region10: #{char_embedding_forward.1} parent=1 // pred_check
      _
    $region11: #{char_embedding_forward.1} parent=1 // pred_check_branch
      %41 = sbr.rel (0) target = $region13
    $region12: #{char_embedding_forward.1} parent=1 // pred_region
      %s43 = ssub.s32 96, 96
      %44 = vsyncadd [#allocation7], %s43
      %s46 = sshll.u32 [#allocation8], 4
      %s47 = int_to_ptr.vmem [resolvable:$true] %s46
      %49 = dma.hbm_to_vmem [thread:$0]  %s2, 96, %s47, [#allocation7]
    $region13: #{char_embedding_forward.1} parent=1 // pred_fallthru
      _
    // Predicated region
    $region14: #{char_embedding_forward.1} parent=1 // pred_check
      _
    $region15: #{char_embedding_forward.1} parent=1 // pred_check_branch
      %51 = sbr.rel (0) target = $region17
    $region16: #{char_embedding_forward.1} parent=1 // pred_region
      %s53 = ssub.s32 24576, 24576
      %54 = vsyncadd [#allocation10], %s53
      %s55 = sshll.u32 [#allocation9], 4
      %s56 = int_to_ptr.vmem [resolvable:$true] %s55
      %61 = dma.hbm_to_vmem [thread:$0]  %s3, 24576, %s56, [#allocation10], 768, 768, 48
    $region17: #{char_embedding_forward.1} parent=1 // pred_fallthru
      _
    // Predicated region
    $region18: #{char_embedding_forward.1} parent=1 // pred_check
      _
    $region19: #{char_embedding_forward.1} parent=1 // pred_check_branch
      %63 = sbr.rel (0) target = $region21
    $region20: #{char_embedding_forward.1} parent=1 // pred_region
      %s65 = ssub.s32 96, 96
      %66 = vsyncadd [#allocation10], %s65
      %s68 = sshll.u32 [#allocation11], 4
      %s69 = int_to_ptr.vmem [resolvable:$true] %s68
      %71 = dma.hbm_to_vmem [thread:$0]  %s4, 96, %s69, [#allocation10]
    $region21: #{char_embedding_forward.1} parent=1 // pred_fallthru
      _
    // Predicated region
    $region22: #{char_embedding_forward.1} parent=1 // pred_check
      _
    $region23: #{char_embedding_forward.1} parent=1 // pred_check_branch
      %73 = sbr.rel (0) target = $region25
    $region24: #{char_embedding_forward.1} parent=1 // pred_region
      %s75 = ssub.s32 256, 256
      %76 = vsyncadd [#allocation13], %s75
      %s78 = sshll.u32 [#allocation12], 4
      %s79 = int_to_ptr.vmem [resolvable:$true] %s78
      %81 = dma.hbm_to_vmem [thread:$0]  %s5, 256, %s79, [#allocation13]
    $region25: #{char_embedding_forward.1} parent=1 // pred_fallthru
      _
    // Predicated region
    $region26: #{char_embedding_forward.1} parent=1 // pred_check
      _
    $region27: #{char_embedding_forward.1} parent=1 // pred_check_branch
      %83 = sbr.rel (0) target = $region29
    $region28: #{char_embedding_forward.1} parent=1 // pred_region
      %84 = dma.done [#allocation4], 6144
    $region29: #{char_embedding_forward.1} parent=1 // pred_fallthru
      _
    // Predicated region
    $region30: #{char_embedding_forward.1} parent=1 // pred_check
      _
    $region31: #{char_embedding_forward.1} parent=1 // pred_check_branch
      %86 = sbr.rel (0) target = $region33
    $region32: #{char_embedding_forward.1} parent=1 // pred_region
      %87 = dma.done [#allocation7], 73728
    $region33: #{char_embedding_forward.1} parent=1 // pred_fallthru
      _
    // Predicated region
    $region34: #{char_embedding_forward.1} parent=1 // pred_check
      _
    $region35: #{char_embedding_forward.1} parent=1 // pred_check_branch
      %89 = sbr.rel (0) target = $region37
    $region36: #{char_embedding_forward.1} parent=1 // pred_region
      %90 = dma.done [#allocation7], 96
    $region37: #{char_embedding_forward.1} parent=1 // pred_fallthru
      _
    // Predicated region
    $region38: #{char_embedding_forward.1} parent=1 // pred_check
      _
    $region39: #{char_embedding_forward.1} parent=1 // pred_check_branch
      %92 = sbr.rel (0) target = $region41
    $region40: #{char_embedding_forward.1} parent=1 // pred_region
      %93 = dma.done [#allocation10], 24576
    $region41: #{char_embedding_forward.1} parent=1 // pred_fallthru
      _
    // Predicated region
    $region42: #{char_embedding_forward.1} parent=1 // pred_check
      _
    $region43: #{char_embedding_forward.1} parent=1 // pred_check_branch
      %95 = sbr.rel (0) target = $region45
    $region44: #{char_embedding_forward.1} parent=1 // pred_region
      %96 = dma.done [#allocation10], 96
    $region45: #{char_embedding_forward.1} parent=1 // pred_fallthru
      _
    // Predicated region
    $region46: #{char_embedding_forward.1} parent=1 // pred_check
      _
    $region47: #{char_embedding_forward.1} parent=1 // pred_check_branch
      %98 = sbr.rel (0) target = $region49
    $region48: #{char_embedding_forward.1} parent=1 // pred_region
      %99 = dma.done [#allocation13], 256
    $region49: #{char_embedding_forward.1} parent=1 // pred_fallthru
      _
    %v100 = vld [vmem:[#allocation3] sm:$0xff]
    %v101 = vld [vmem:[#allocation3 + $0x8] sm:$0xff]
    %v102 = vld [vmem:[#allocation3 + $0x10] sm:$0xff]
    %v103 = vld [vmem:[#allocation3 + $0x18] sm:$0xff]
    %v104 = vld [vmem:[#allocation3 + $0x20] sm:$0xff]
    %v105 = vld [vmem:[#allocation3 + $0x28] sm:$0xff]
    %v106 = vld [vmem:[#allocation3 + $0x30] sm:$0xff]
    %v107 = vld [vmem:[#allocation3 + $0x38] sm:$0xff]
    %v108 = vld [vmem:[#allocation3 + $0x40] sm:$0xff]
    %v109 = vld [vmem:[#allocation3 + $0x48] sm:$0xff]
    %v110 = vld [vmem:[#allocation3 + $0x50] sm:$0xff]
    %v111 = vld [vmem:[#allocation3 + $0x58] sm:$0xff]
    %v112 = vld [vmem:[#allocation3 + $0x60] sm:$0xff]
    %v113 = vld [vmem:[#allocation3 + $0x68] sm:$0xff]
    %v114 = vld [vmem:[#allocation3 + $0x70] sm:$0xff]
    %v115 = vld [vmem:[#allocation3 + $0x78] sm:$0xff]
    %v116 = vld [vmem:[#allocation3 + $0x80] sm:$0xff]
    %v117 = vld [vmem:[#allocation3 + $0x88] sm:$0xff]
    %v118 = vld [vmem:[#allocation3 + $0x90] sm:$0xff]
    %v119 = vld [vmem:[#allocation3 + $0x98] sm:$0xff]
    %v120 = vld [vmem:[#allocation3 + $0xa0] sm:$0xff]
    %v121 = vld [vmem:[#allocation3 + $0xa8] sm:$0xff]
    %v122 = vld [vmem:[#allocation3 + $0xb0] sm:$0xff]
    %v123 = vld [vmem:[#allocation3 + $0xb8] sm:$0xff]
    %v124 = vld [vmem:[#allocation3 + $0xc0] sm:$0xff]
    %v125 = vld [vmem:[#allocation3 + $0xc8] sm:$0xff]
    %v126 = vld [vmem:[#allocation3 + $0xd0] sm:$0xff]
    %v127 = vld [vmem:[#allocation3 + $0xd8] sm:$0xff]
    %v128 = vld [vmem:[#allocation3 + $0xe0] sm:$0xff]
    %v129 = vld [vmem:[#allocation3 + $0xe8] sm:$0xff]
    %v130 = vld [vmem:[#allocation3 + $0xf0] sm:$0xff]
    %v131 = vld [vmem:[#allocation3 + $0xf8] sm:$0xff]
    %v132 = vld [vmem:[#allocation3 + $0x100] sm:$0xff]
    %v133 = vld [vmem:[#allocation3 + $0x108] sm:$0xff]
    %v134 = vld [vmem:[#allocation3 + $0x110] sm:$0xff]
    %v135 = vld [vmem:[#allocation3 + $0x118] sm:$0xff]
    %v136 = vld [vmem:[#allocation3 + $0x120] sm:$0xff]
    %v137 = vld [vmem:[#allocation3 + $0x128] sm:$0xff]
    %v138 = vld [vmem:[#allocation3 + $0x130] sm:$0xff]
    %v139 = vld [vmem:[#allocation3 + $0x138] sm:$0xff]
    %v140 = vld [vmem:[#allocation3 + $0x140] sm:$0xff]
    %v141 = vld [vmem:[#allocation3 + $0x148] sm:$0xff]
    %v142 = vld [vmem:[#allocation3 + $0x150] sm:$0xff]
    %v143 = vld [vmem:[#allocation3 + $0x158] sm:$0xff]
    %v144 = vld [vmem:[#allocation3 + $0x160] sm:$0xff]
    %v145 = vld [vmem:[#allocation3 + $0x168] sm:$0xff]
    %v146 = vld [vmem:[#allocation3 + $0x170] sm:$0xff]
    %v147 = vld [vmem:[#allocation3 + $0x178] sm:$0xff]
    %v148 = vld [vmem:[#allocation6] sm:$0xff]
    %v149 = vld [vmem:[#allocation6 + $0x8] sm:$0xff]
    %v150 = vld [vmem:[#allocation6 + $0x10] sm:$0xff]
    %v151 = vld [vmem:[#allocation6 + $0x18] sm:$0xff]
    %v152 = vld [vmem:[#allocation6 + $0x20] sm:$0xff]
    %v153 = vld [vmem:[#allocation6 + $0x28] sm:$0xff]
    %v154 = vld [vmem:[#allocation6 + $0x30] sm:$0xff]
    %v155 = vld [vmem:[#allocation6 + $0x38] sm:$0xff]
    %v156 = vld [vmem:[#allocation6 + $0x40] sm:$0xff]
    %v157 = vld [vmem:[#allocation6 + $0x48] sm:$0xff]
    %v158 = vld [vmem:[#allocation6 + $0x50] sm:$0xff]
    %v159 = vld [vmem:[#allocation6 + $0x58] sm:$0xff]
    %v160 = vld [vmem:[#allocation6 + $0x60] sm:$0xff]
    %v161 = vld [vmem:[#allocation6 + $0x68] sm:$0xff]
    %v162 = vld [vmem:[#allocation6 + $0x70] sm:$0xff]
    %v163 = vld [vmem:[#allocation6 + $0x78] sm:$0xff]
    %v164 = vld [vmem:[#allocation6 + $0x80] sm:$0xff]
    %v165 = vld [vmem:[#allocation6 + $0x88] sm:$0xff]
    %v166 = vld [vmem:[#allocation6 + $0x90] sm:$0xff]
    %v167 = vld [vmem:[#allocation6 + $0x98] sm:$0xff]
    %v168 = vld [vmem:[#allocation6 + $0xa0] sm:$0xff]
    %v169 = vld [vmem:[#allocation6 + $0xa8] sm:$0xff]
    %v170 = vld [vmem:[#allocation6 + $0xb0] sm:$0xff]
    %v171 = vld [vmem:[#allocation6 + $0xb8] sm:$0xff]
    %v172 = vld [vmem:[#allocation6 + $0xc0] sm:$0xff]
    %v173 = vld [vmem:[#allocation6 + $0xc8] sm:$0xff]
    %v174 = vld [vmem:[#allocation6 + $0xd0] sm:$0xff]
    %v175 = vld [vmem:[#allocation6 + $0xd8] sm:$0xff]
    %v176 = vld [vmem:[#allocation6 + $0xe0] sm:$0xff]
    %v177 = vld [vmem:[#allocation6 + $0xe8] sm:$0xff]
    %v178 = vld [vmem:[#allocation6 + $0xf0] sm:$0xff]
    %v179 = vld [vmem:[#allocation6 + $0xf8] sm:$0xff]
    %v180 = vld [vmem:[#allocation6 + $0x100] sm:$0xff]
    %v181 = vld [vmem:[#allocation6 + $0x108] sm:$0xff]
    %v182 = vld [vmem:[#allocation6 + $0x110] sm:$0xff]
    %v183 = vld [vmem:[#allocation6 + $0x118] sm:$0xff]
    %v184 = vld [vmem:[#allocation6 + $0x120] sm:$0xff]
    %v185 = vld [vmem:[#allocation6 + $0x128] sm:$0xff]
    %v186 = vld [vmem:[#allocation6 + $0x130] sm:$0xff]
    %v187 = vld [vmem:[#allocation6 + $0x138] sm:$0xff]
    %v188 = vld [vmem:[#allocation6 + $0x140] sm:$0xff]
    %v189 = vld [vmem:[#allocation6 + $0x148] sm:$0xff]
    %v190 = vld [vmem:[#allocation6 + $0x150] sm:$0xff]
    %v191 = vld [vmem:[#allocation6 + $0x158] sm:$0xff]
    %v192 = vld [vmem:[#allocation6 + $0x160] sm:$0xff]
    %v193 = vld [vmem:[#allocation6 + $0x168] sm:$0xff]
    %v194 = vld [vmem:[#allocation6 + $0x170] sm:$0xff]
    %v195 = vld [vmem:[#allocation6 + $0x178] sm:$0xff]
    %v196 = vld [vmem:[#allocation6 + $0x180] sm:$0xff]
    %v197 = vld [vmem:[#allocation6 + $0x188] sm:$0xff]
    %v198 = vld [vmem:[#allocation6 + $0x190] sm:$0xff]
    %v199 = vld [vmem:[#allocation6 + $0x198] sm:$0xff]
    %v200 = vld [vmem:[#allocation6 + $0x1a0] sm:$0xff]
    %v201 = vld [vmem:[#allocation6 + $0x1a8] sm:$0xff]
    %v202 = vld [vmem:[#allocation6 + $0x1b0] sm:$0xff]
    %v203 = vld [vmem:[#allocation6 + $0x1b8] sm:$0xff]
    %v204 = vld [vmem:[#allocation6 + $0x1c0] sm:$0xff]
    %v205 = vld [vmem:[#allocation6 + $0x1c8] sm:$0xff]
    %v206 = vld [vmem:[#allocation6 + $0x1d0] sm:$0xff]
    %v207 = vld [vmem:[#allocation6 + $0x1d8] sm:$0xff]
    %v208 = vld [vmem:[#allocation6 + $0x1e0] sm:$0xff]
    %v209 = vld [vmem:[#allocation6 + $0x1e8] sm:$0xff]
    %v210 = vld [vmem:[#allocation6 + $0x1f0] sm:$0xff]
    %v211 = vld [vmem:[#allocation6 + $0x1f8] sm:$0xff]
    %v212 = vld [vmem:[#allocation6 + $0x200] sm:$0xff]
    %v213 = vld [vmem:[#allocation6 + $0x208] sm:$0xff]
    %v214 = vld [vmem:[#allocation6 + $0x210] sm:$0xff]
    %v215 = vld [vmem:[#allocation6 + $0x218] sm:$0xff]
    %v216 = vld [vmem:[#allocation6 + $0x220] sm:$0xff]
    %v217 = vld [vmem:[#allocation6 + $0x228] sm:$0xff]
    %v218 = vld [vmem:[#allocation6 + $0x230] sm:$0xff]
    %v219 = vld [vmem:[#allocation6 + $0x238] sm:$0xff]
    %v220 = vld [vmem:[#allocation6 + $0x240] sm:$0xff]
    %v221 = vld [vmem:[#allocation6 + $0x248] sm:$0xff]
    %v222 = vld [vmem:[#allocation6 + $0x250] sm:$0xff]
    %v223 = vld [vmem:[#allocation6 + $0x258] sm:$0xff]
    %v224 = vld [vmem:[#allocation6 + $0x260] sm:$0xff]
    %v225 = vld [vmem:[#allocation6 + $0x268] sm:$0xff]
    %v226 = vld [vmem:[#allocation6 + $0x270] sm:$0xff]
    %v227 = vld [vmem:[#allocation6 + $0x278] sm:$0xff]
    %v228 = vld [vmem:[#allocation6 + $0x280] sm:$0xff]
    %v229 = vld [vmem:[#allocation6 + $0x288] sm:$0xff]
    %v230 = vld [vmem:[#allocation6 + $0x290] sm:$0xff]
    %v231 = vld [vmem:[#allocation6 + $0x298] sm:$0xff]
    %v232 = vld [vmem:[#allocation6 + $0x2a0] sm:$0xff]
    %v233 = vld [vmem:[#allocation6 + $0x2a8] sm:$0xff]
    %v234 = vld [vmem:[#allocation6 + $0x2b0] sm:$0xff]
    %v235 = vld [vmem:[#allocation6 + $0x2b8] sm:$0xff]
    %v236 = vld [vmem:[#allocation6 + $0x2c0] sm:$0xff]
    %v237 = vld [vmem:[#allocation6 + $0x2c8] sm:$0xff]
    %v238 = vld [vmem:[#allocation6 + $0x2d0] sm:$0xff]
    %v239 = vld [vmem:[#allocation6 + $0x2d8] sm:$0xff]
    %v240 = vld [vmem:[#allocation6 + $0x2e0] sm:$0xff]
    %v241 = vld [vmem:[#allocation6 + $0x2e8] sm:$0xff]
    %v242 = vld [vmem:[#allocation6 + $0x2f0] sm:$0xff]
    %v243 = vld [vmem:[#allocation6 + $0x2f8] sm:$0xff]
    %v244 = vld [vmem:[#allocation6 + $0x300] sm:$0xff]
    %v245 = vld [vmem:[#allocation6 + $0x308] sm:$0xff]
    %v246 = vld [vmem:[#allocation6 + $0x310] sm:$0xff]
    %v247 = vld [vmem:[#allocation6 + $0x318] sm:$0xff]
    %v248 = vld [vmem:[#allocation6 + $0x320] sm:$0xff]
    %v249 = vld [vmem:[#allocation6 + $0x328] sm:$0xff]
    %v250 = vld [vmem:[#allocation6 + $0x330] sm:$0xff]
    %v251 = vld [vmem:[#allocation6 + $0x338] sm:$0xff]
    %v252 = vld [vmem:[#allocation6 + $0x340] sm:$0xff]
    %v253 = vld [vmem:[#allocation6 + $0x348] sm:$0xff]
    %v254 = vld [vmem:[#allocation6 + $0x350] sm:$0xff]
    %v255 = vld [vmem:[#allocation6 + $0x358] sm:$0xff]
    %v256 = vld [vmem:[#allocation6 + $0x360] sm:$0xff]
    %v257 = vld [vmem:[#allocation6 + $0x368] sm:$0xff]
    %v258 = vld [vmem:[#allocation6 + $0x370] sm:$0xff]
    %v259 = vld [vmem:[#allocation6 + $0x378] sm:$0xff]
    %v260 = vld [vmem:[#allocation6 + $0x380] sm:$0xff]
    %v261 = vld [vmem:[#allocation6 + $0x388] sm:$0xff]
    %v262 = vld [vmem:[#allocation6 + $0x390] sm:$0xff]
    %v263 = vld [vmem:[#allocation6 + $0x398] sm:$0xff]
    %v264 = vld [vmem:[#allocation6 + $0x3a0] sm:$0xff]
    %v265 = vld [vmem:[#allocation6 + $0x3a8] sm:$0xff]
    %v266 = vld [vmem:[#allocation6 + $0x3b0] sm:$0xff]
    %v267 = vld [vmem:[#allocation6 + $0x3b8] sm:$0xff]
    %v268 = vld [vmem:[#allocation6 + $0x3c0] sm:$0xff]
    %v269 = vld [vmem:[#allocation6 + $0x3c8] sm:$0xff]
    %v270 = vld [vmem:[#allocation6 + $0x3d0] sm:$0xff]
    %v271 = vld [vmem:[#allocation6 + $0x3d8] sm:$0xff]
    %v272 = vld [vmem:[#allocation6 + $0x3e0] sm:$0xff]
    %v273 = vld [vmem:[#allocation6 + $0x3e8] sm:$0xff]
    %v274 = vld [vmem:[#allocation6 + $0x3f0] sm:$0xff]
    %v275 = vld [vmem:[#allocation6 + $0x3f8] sm:$0xff]
    %v276 = vld [vmem:[#allocation6 + $0x400] sm:$0xff]
    %v277 = vld [vmem:[#allocation6 + $0x408] sm:$0xff]
    %v278 = vld [vmem:[#allocation6 + $0x410] sm:$0xff]
    %v279 = vld [vmem:[#allocation6 + $0x418] sm:$0xff]
    %v280 = vld [vmem:[#allocation6 + $0x420] sm:$0xff]
    %v281 = vld [vmem:[#allocation6 + $0x428] sm:$0xff]
    %v282 = vld [vmem:[#allocation6 + $0x430] sm:$0xff]
    %v283 = vld [vmem:[#allocation6 + $0x438] sm:$0xff]
    %v284 = vld [vmem:[#allocation6 + $0x440] sm:$0xff]
    %v285 = vld [vmem:[#allocation6 + $0x448] sm:$0xff]
    %v286 = vld [vmem:[#allocation6 + $0x450] sm:$0xff]
    %v287 = vld [vmem:[#allocation6 + $0x458] sm:$0xff]
    %v288 = vld [vmem:[#allocation6 + $0x460] sm:$0xff]
    %v289 = vld [vmem:[#allocation6 + $0x468] sm:$0xff]
    %v290 = vld [vmem:[#allocation6 + $0x470] sm:$0xff]
    %v291 = vld [vmem:[#allocation6 + $0x478] sm:$0xff]
    %v292 = vld [vmem:[#allocation6 + $0x480] sm:$0xff]
    %v293 = vld [vmem:[#allocation6 + $0x488] sm:$0xff]
    %v294 = vld [vmem:[#allocation6 + $0x490] sm:$0xff]
    %v295 = vld [vmem:[#allocation6 + $0x498] sm:$0xff]
    %v296 = vld [vmem:[#allocation6 + $0x4a0] sm:$0xff]
    %v297 = vld [vmem:[#allocation6 + $0x4a8] sm:$0xff]
    %v298 = vld [vmem:[#allocation6 + $0x4b0] sm:$0xff]
    %v299 = vld [vmem:[#allocation6 + $0x4b8] sm:$0xff]
    %v300 = vld [vmem:[#allocation6 + $0x4c0] sm:$0xff]
    %v301 = vld [vmem:[#allocation6 + $0x4c8] sm:$0xff]
    %v302 = vld [vmem:[#allocation6 + $0x4d0] sm:$0xff]
    %v303 = vld [vmem:[#allocation6 + $0x4d8] sm:$0xff]
    %v304 = vld [vmem:[#allocation6 + $0x4e0] sm:$0xff]
    %v305 = vld [vmem:[#allocation6 + $0x4e8] sm:$0xff]
    %v306 = vld [vmem:[#allocation6 + $0x4f0] sm:$0xff]
    %v307 = vld [vmem:[#allocation6 + $0x4f8] sm:$0xff]
    %v308 = vld [vmem:[#allocation6 + $0x500] sm:$0xff]
    %v309 = vld [vmem:[#allocation6 + $0x508] sm:$0xff]
    %v310 = vld [vmem:[#allocation6 + $0x510] sm:$0xff]
    %v311 = vld [vmem:[#allocation6 + $0x518] sm:$0xff]
    %v312 = vld [vmem:[#allocation6 + $0x520] sm:$0xff]
    %v313 = vld [vmem:[#allocation6 + $0x528] sm:$0xff]
    %v314 = vld [vmem:[#allocation6 + $0x530] sm:$0xff]
    %v315 = vld [vmem:[#allocation6 + $0x538] sm:$0xff]
    %v316 = vld [vmem:[#allocation6 + $0x540] sm:$0xff]
    %v317 = vld [vmem:[#allocation6 + $0x548] sm:$0xff]
    %v318 = vld [vmem:[#allocation6 + $0x550] sm:$0xff]
    %v319 = vld [vmem:[#allocation6 + $0x558] sm:$0xff]
    %v320 = vld [vmem:[#allocation6 + $0x560] sm:$0xff]
    %v321 = vld [vmem:[#allocation6 + $0x568] sm:$0xff]
    %v322 = vld [vmem:[#allocation6 + $0x570] sm:$0xff]
    %v323 = vld [vmem:[#allocation6 + $0x578] sm:$0xff]
    %v324 = vld [vmem:[#allocation6 + $0x580] sm:$0xff]
    %v325 = vld [vmem:[#allocation6 + $0x588] sm:$0xff]
    %v326 = vld [vmem:[#allocation6 + $0x590] sm:$0xff]
    %v327 = vld [vmem:[#allocation6 + $0x598] sm:$0xff]
    %v328 = vld [vmem:[#allocation6 + $0x5a0] sm:$0xff]
    %v329 = vld [vmem:[#allocation6 + $0x5a8] sm:$0xff]
    %v330 = vld [vmem:[#allocation6 + $0x5b0] sm:$0xff]
    %v331 = vld [vmem:[#allocation6 + $0x5b8] sm:$0xff]
    %v332 = vld [vmem:[#allocation6 + $0x5c0] sm:$0xff]
    %v333 = vld [vmem:[#allocation6 + $0x5c8] sm:$0xff]
    %v334 = vld [vmem:[#allocation6 + $0x5d0] sm:$0xff]
    %v335 = vld [vmem:[#allocation6 + $0x5d8] sm:$0xff]
    %v336 = vld [vmem:[#allocation6 + $0x5e0] sm:$0xff]
    %v337 = vld [vmem:[#allocation6 + $0x5e8] sm:$0xff]
    %v338 = vld [vmem:[#allocation6 + $0x5f0] sm:$0xff]
    %v339 = vld [vmem:[#allocation6 + $0x5f8] sm:$0xff]
    %v340 = vld [vmem:[#allocation6 + $0x600] sm:$0xff]
    %v341 = vld [vmem:[#allocation6 + $0x608] sm:$0xff]
    %v342 = vld [vmem:[#allocation6 + $0x610] sm:$0xff]
    %v343 = vld [vmem:[#allocation6 + $0x618] sm:$0xff]
    %v344 = vld [vmem:[#allocation6 + $0x620] sm:$0xff]
    %v345 = vld [vmem:[#allocation6 + $0x628] sm:$0xff]
    %v346 = vld [vmem:[#allocation6 + $0x630] sm:$0xff]
    %v347 = vld [vmem:[#allocation6 + $0x638] sm:$0xff]
    %v348 = vld [vmem:[#allocation6 + $0x640] sm:$0xff]
    %v349 = vld [vmem:[#allocation6 + $0x648] sm:$0xff]
    %v350 = vld [vmem:[#allocation6 + $0x650] sm:$0xff]
    %v351 = vld [vmem:[#allocation6 + $0x658] sm:$0xff]
    %v352 = vld [vmem:[#allocation6 + $0x660] sm:$0xff]
    %v353 = vld [vmem:[#allocation6 + $0x668] sm:$0xff]
    %v354 = vld [vmem:[#allocation6 + $0x670] sm:$0xff]
    %v355 = vld [vmem:[#allocation6 + $0x678] sm:$0xff]
    %v356 = vld [vmem:[#allocation6 + $0x680] sm:$0xff]
    %v357 = vld [vmem:[#allocation6 + $0x688] sm:$0xff]
    %v358 = vld [vmem:[#allocation6 + $0x690] sm:$0xff]
    %v359 = vld [vmem:[#allocation6 + $0x698] sm:$0xff]
    %v360 = vld [vmem:[#allocation6 + $0x6a0] sm:$0xff]
    %v361 = vld [vmem:[#allocation6 + $0x6a8] sm:$0xff]
    %v362 = vld [vmem:[#allocation6 + $0x6b0] sm:$0xff]
    %v363 = vld [vmem:[#allocation6 + $0x6b8] sm:$0xff]
    %v364 = vld [vmem:[#allocation6 + $0x6c0] sm:$0xff]
    %v365 = vld [vmem:[#allocation6 + $0x6c8] sm:$0xff]
    %v366 = vld [vmem:[#allocation6 + $0x6d0] sm:$0xff]
    %v367 = vld [vmem:[#allocation6 + $0x6d8] sm:$0xff]
    %v368 = vld [vmem:[#allocation6 + $0x6e0] sm:$0xff]
    %v369 = vld [vmem:[#allocation6 + $0x6e8] sm:$0xff]
    %v370 = vld [vmem:[#allocation6 + $0x6f0] sm:$0xff]
    %v371 = vld [vmem:[#allocation6 + $0x6f8] sm:$0xff]
    %v372 = vld [vmem:[#allocation6 + $0x700] sm:$0xff]
    %v373 = vld [vmem:[#allocation6 + $0x708] sm:$0xff]
    %v374 = vld [vmem:[#allocation6 + $0x710] sm:$0xff]
    %v375 = vld [vmem:[#allocation6 + $0x718] sm:$0xff]
    %v376 = vld [vmem:[#allocation6 + $0x720] sm:$0xff]
    %v377 = vld [vmem:[#allocation6 + $0x728] sm:$0xff]
    %v378 = vld [vmem:[#allocation6 + $0x730] sm:$0xff]
    %v379 = vld [vmem:[#allocation6 + $0x738] sm:$0xff]
    %v380 = vld [vmem:[#allocation6 + $0x740] sm:$0xff]
    %v381 = vld [vmem:[#allocation6 + $0x748] sm:$0xff]
    %v382 = vld [vmem:[#allocation6 + $0x750] sm:$0xff]
    %v383 = vld [vmem:[#allocation6 + $0x758] sm:$0xff]
    %v384 = vld [vmem:[#allocation6 + $0x760] sm:$0xff]
    %v385 = vld [vmem:[#allocation6 + $0x768] sm:$0xff]
    %v386 = vld [vmem:[#allocation6 + $0x770] sm:$0xff]
    %v387 = vld [vmem:[#allocation6 + $0x778] sm:$0xff]
    %v388 = vld [vmem:[#allocation6 + $0x780] sm:$0xff]
    %v389 = vld [vmem:[#allocation6 + $0x788] sm:$0xff]
    %v390 = vld [vmem:[#allocation6 + $0x790] sm:$0xff]
    %v391 = vld [vmem:[#allocation6 + $0x798] sm:$0xff]
    %v392 = vld [vmem:[#allocation6 + $0x7a0] sm:$0xff]
    %v393 = vld [vmem:[#allocation6 + $0x7a8] sm:$0xff]
    %v394 = vld [vmem:[#allocation6 + $0x7b0] sm:$0xff]
    %v395 = vld [vmem:[#allocation6 + $0x7b8] sm:$0xff]
    %v396 = vld [vmem:[#allocation6 + $0x7c0] sm:$0xff]
    %v397 = vld [vmem:[#allocation6 + $0x7c8] sm:$0xff]
    %v398 = vld [vmem:[#allocation6 + $0x7d0] sm:$0xff]
    %v399 = vld [vmem:[#allocation6 + $0x7d8] sm:$0xff]
    %v400 = vld [vmem:[#allocation6 + $0x7e0] sm:$0xff]
    %v401 = vld [vmem:[#allocation6 + $0x7e8] sm:$0xff]
    %v402 = vld [vmem:[#allocation6 + $0x7f0] sm:$0xff]
    %v403 = vld [vmem:[#allocation6 + $0x7f8] sm:$0xff]
    %v404 = vld [vmem:[#allocation6 + $0x800] sm:$0xff]
    %v405 = vld [vmem:[#allocation6 + $0x808] sm:$0xff]
    %v406 = vld [vmem:[#allocation6 + $0x810] sm:$0xff]
    %v407 = vld [vmem:[#allocation6 + $0x818] sm:$0xff]
    %v408 = vld [vmem:[#allocation6 + $0x820] sm:$0xff]
    %v409 = vld [vmem:[#allocation6 + $0x828] sm:$0xff]
    %v410 = vld [vmem:[#allocation6 + $0x830] sm:$0xff]
    %v411 = vld [vmem:[#allocation6 + $0x838] sm:$0xff]
    %v412 = vld [vmem:[#allocation6 + $0x840] sm:$0xff]
    %v413 = vld [vmem:[#allocation6 + $0x848] sm:$0xff]
    %v414 = vld [vmem:[#allocation6 + $0x850] sm:$0xff]
    %v415 = vld [vmem:[#allocation6 + $0x858] sm:$0xff]
    %v416 = vld [vmem:[#allocation6 + $0x860] sm:$0xff]
    %v417 = vld [vmem:[#allocation6 + $0x868] sm:$0xff]
    %v418 = vld [vmem:[#allocation6 + $0x870] sm:$0xff]
    %v419 = vld [vmem:[#allocation6 + $0x878] sm:$0xff]
    %v420 = vld [vmem:[#allocation6 + $0x880] sm:$0xff]
    %v421 = vld [vmem:[#allocation6 + $0x888] sm:$0xff]
    %v422 = vld [vmem:[#allocation6 + $0x890] sm:$0xff]
    %v423 = vld [vmem:[#allocation6 + $0x898] sm:$0xff]
    %v424 = vld [vmem:[#allocation6 + $0x8a0] sm:$0xff]
    %v425 = vld [vmem:[#allocation6 + $0x8a8] sm:$0xff]
    %v426 = vld [vmem:[#allocation6 + $0x8b0] sm:$0xff]
    %v427 = vld [vmem:[#allocation6 + $0x8b8] sm:$0xff]
    %v428 = vld [vmem:[#allocation6 + $0x8c0] sm:$0xff]
    %v429 = vld [vmem:[#allocation6 + $0x8c8] sm:$0xff]
    %v430 = vld [vmem:[#allocation6 + $0x8d0] sm:$0xff]
    %v431 = vld [vmem:[#allocation6 + $0x8d8] sm:$0xff]
    %v432 = vld [vmem:[#allocation6 + $0x8e0] sm:$0xff]
    %v433 = vld [vmem:[#allocation6 + $0x8e8] sm:$0xff]
    %v434 = vld [vmem:[#allocation6 + $0x8f0] sm:$0xff]
    %v435 = vld [vmem:[#allocation6 + $0x8f8] sm:$0xff]
    %v436 = vld [vmem:[#allocation6 + $0x900] sm:$0xff]
    %v437 = vld [vmem:[#allocation6 + $0x908] sm:$0xff]
    %v438 = vld [vmem:[#allocation6 + $0x910] sm:$0xff]
    %v439 = vld [vmem:[#allocation6 + $0x918] sm:$0xff]
    %v440 = vld [vmem:[#allocation6 + $0x920] sm:$0xff]
    %v441 = vld [vmem:[#allocation6 + $0x928] sm:$0xff]
    %v442 = vld [vmem:[#allocation6 + $0x930] sm:$0xff]
    %v443 = vld [vmem:[#allocation6 + $0x938] sm:$0xff]
    %v444 = vld [vmem:[#allocation6 + $0x940] sm:$0xff]
    %v445 = vld [vmem:[#allocation6 + $0x948] sm:$0xff]
    %v446 = vld [vmem:[#allocation6 + $0x950] sm:$0xff]
    %v447 = vld [vmem:[#allocation6 + $0x958] sm:$0xff]
    %v448 = vld [vmem:[#allocation6 + $0x960] sm:$0xff]
    %v449 = vld [vmem:[#allocation6 + $0x968] sm:$0xff]
    %v450 = vld [vmem:[#allocation6 + $0x970] sm:$0xff]
    %v451 = vld [vmem:[#allocation6 + $0x978] sm:$0xff]
    %v452 = vld [vmem:[#allocation6 + $0x980] sm:$0xff]
    %v453 = vld [vmem:[#allocation6 + $0x988] sm:$0xff]
    %v454 = vld [vmem:[#allocation6 + $0x990] sm:$0xff]
    %v455 = vld [vmem:[#allocation6 + $0x998] sm:$0xff]
    %v456 = vld [vmem:[#allocation6 + $0x9a0] sm:$0xff]
    %v457 = vld [vmem:[#allocation6 + $0x9a8] sm:$0xff]
    %v458 = vld [vmem:[#allocation6 + $0x9b0] sm:$0xff]
    %v459 = vld [vmem:[#allocation6 + $0x9b8] sm:$0xff]
    %v460 = vld [vmem:[#allocation6 + $0x9c0] sm:$0xff]
    %v461 = vld [vmem:[#allocation6 + $0x9c8] sm:$0xff]
    %v462 = vld [vmem:[#allocation6 + $0x9d0] sm:$0xff]
    %v463 = vld [vmem:[#allocation6 + $0x9d8] sm:$0xff]
    %v464 = vld [vmem:[#allocation6 + $0x9e0] sm:$0xff]
    %v465 = vld [vmem:[#allocation6 + $0x9e8] sm:$0xff]
    %v466 = vld [vmem:[#allocation6 + $0x9f0] sm:$0xff]
    %v467 = vld [vmem:[#allocation6 + $0x9f8] sm:$0xff]
    %v468 = vld [vmem:[#allocation6 + $0xa00] sm:$0xff]
    %v469 = vld [vmem:[#allocation6 + $0xa08] sm:$0xff]
    %v470 = vld [vmem:[#allocation6 + $0xa10] sm:$0xff]
    %v471 = vld [vmem:[#allocation6 + $0xa18] sm:$0xff]
    %v472 = vld [vmem:[#allocation6 + $0xa20] sm:$0xff]
    %v473 = vld [vmem:[#allocation6 + $0xa28] sm:$0xff]
    %v474 = vld [vmem:[#allocation6 + $0xa30] sm:$0xff]
    %v475 = vld [vmem:[#allocation6 + $0xa38] sm:$0xff]
    %v476 = vld [vmem:[#allocation6 + $0xa40] sm:$0xff]
    %v477 = vld [vmem:[#allocation6 + $0xa48] sm:$0xff]
    %v478 = vld [vmem:[#allocation6 + $0xa50] sm:$0xff]
    %v479 = vld [vmem:[#allocation6 + $0xa58] sm:$0xff]
    %v480 = vld [vmem:[#allocation6 + $0xa60] sm:$0xff]
    %v481 = vld [vmem:[#allocation6 + $0xa68] sm:$0xff]
    %v482 = vld [vmem:[#allocation6 + $0xa70] sm:$0xff]
    %v483 = vld [vmem:[#allocation6 + $0xa78] sm:$0xff]
    %v484 = vld [vmem:[#allocation6 + $0xa80] sm:$0xff]
    %v485 = vld [vmem:[#allocation6 + $0xa88] sm:$0xff]
    %v486 = vld [vmem:[#allocation6 + $0xa90] sm:$0xff]
    %v487 = vld [vmem:[#allocation6 + $0xa98] sm:$0xff]
    %v488 = vld [vmem:[#allocation6 + $0xaa0] sm:$0xff]
    %v489 = vld [vmem:[#allocation6 + $0xaa8] sm:$0xff]
    %v490 = vld [vmem:[#allocation6 + $0xab0] sm:$0xff]
    %v491 = vld [vmem:[#allocation6 + $0xab8] sm:$0xff]
    %v492 = vld [vmem:[#allocation6 + $0xac0] sm:$0xff]
    %v493 = vld [vmem:[#allocation6 + $0xac8] sm:$0xff]
    %v494 = vld [vmem:[#allocation6 + $0xad0] sm:$0xff]
    %v495 = vld [vmem:[#allocation6 + $0xad8] sm:$0xff]
    %v496 = vld [vmem:[#allocation6 + $0xae0] sm:$0xff]
    %v497 = vld [vmem:[#allocation6 + $0xae8] sm:$0xff]
    %v498 = vld [vmem:[#allocation6 + $0xaf0] sm:$0xff]
    %v499 = vld [vmem:[#allocation6 + $0xaf8] sm:$0xff]
    %v500 = vld [vmem:[#allocation6 + $0xb00] sm:$0xff]
    %v501 = vld [vmem:[#allocation6 + $0xb08] sm:$0xff]
    %v502 = vld [vmem:[#allocation6 + $0xb10] sm:$0xff]
    %v503 = vld [vmem:[#allocation6 + $0xb18] sm:$0xff]
    %v504 = vld [vmem:[#allocation6 + $0xb20] sm:$0xff]
    %v505 = vld [vmem:[#allocation6 + $0xb28] sm:$0xff]
    %v506 = vld [vmem:[#allocation6 + $0xb30] sm:$0xff]
    %v507 = vld [vmem:[#allocation6 + $0xb38] sm:$0xff]
    %v508 = vld [vmem:[#allocation6 + $0xb40] sm:$0xff]
    %v509 = vld [vmem:[#allocation6 + $0xb48] sm:$0xff]
    %v510 = vld [vmem:[#allocation6 + $0xb50] sm:$0xff]
    %v511 = vld [vmem:[#allocation6 + $0xb58] sm:$0xff]
    %v512 = vld [vmem:[#allocation6 + $0xb60] sm:$0xff]
    %v513 = vld [vmem:[#allocation6 + $0xb68] sm:$0xff]
    %v514 = vld [vmem:[#allocation6 + $0xb70] sm:$0xff]
    %v515 = vld [vmem:[#allocation6 + $0xb78] sm:$0xff]
    %v516 = vld [vmem:[#allocation6 + $0xb80] sm:$0xff]
    %v517 = vld [vmem:[#allocation6 + $0xb88] sm:$0xff]
    %v518 = vld [vmem:[#allocation6 + $0xb90] sm:$0xff]
    %v519 = vld [vmem:[#allocation6 + $0xb98] sm:$0xff]
    %v520 = vld [vmem:[#allocation6 + $0xba0] sm:$0xff]
    %v521 = vld [vmem:[#allocation6 + $0xba8] sm:$0xff]
    %v522 = vld [vmem:[#allocation6 + $0xbb0] sm:$0xff]
    %v523 = vld [vmem:[#allocation6 + $0xbb8] sm:$0xff]
    %v524 = vld [vmem:[#allocation6 + $0xbc0] sm:$0xff]
    %v525 = vld [vmem:[#allocation6 + $0xbc8] sm:$0xff]
    %v526 = vld [vmem:[#allocation6 + $0xbd0] sm:$0xff]
    %v527 = vld [vmem:[#allocation6 + $0xbd8] sm:$0xff]
    %v528 = vld [vmem:[#allocation6 + $0xbe0] sm:$0xff]
    %v529 = vld [vmem:[#allocation6 + $0xbe8] sm:$0xff]
    %v530 = vld [vmem:[#allocation6 + $0xbf0] sm:$0xff]
    %v531 = vld [vmem:[#allocation6 + $0xbf8] sm:$0xff]
    %v532 = vld [vmem:[#allocation6 + $0xc00] sm:$0xff]
    %v533 = vld [vmem:[#allocation6 + $0xc08] sm:$0xff]
    %v534 = vld [vmem:[#allocation6 + $0xc10] sm:$0xff]
    %v535 = vld [vmem:[#allocation6 + $0xc18] sm:$0xff]
    %v536 = vld [vmem:[#allocation6 + $0xc20] sm:$0xff]
    %v537 = vld [vmem:[#allocation6 + $0xc28] sm:$0xff]
    %v538 = vld [vmem:[#allocation6 + $0xc30] sm:$0xff]
    %v539 = vld [vmem:[#allocation6 + $0xc38] sm:$0xff]
    %v540 = vld [vmem:[#allocation6 + $0xc40] sm:$0xff]
    %v541 = vld [vmem:[#allocation6 + $0xc48] sm:$0xff]
    %v542 = vld [vmem:[#allocation6 + $0xc50] sm:$0xff]
    %v543 = vld [vmem:[#allocation6 + $0xc58] sm:$0xff]
    %v544 = vld [vmem:[#allocation6 + $0xc60] sm:$0xff]
    %v545 = vld [vmem:[#allocation6 + $0xc68] sm:$0xff]
    %v546 = vld [vmem:[#allocation6 + $0xc70] sm:$0xff]
    %v547 = vld [vmem:[#allocation6 + $0xc78] sm:$0xff]
    %v548 = vld [vmem:[#allocation6 + $0xc80] sm:$0xff]
    %v549 = vld [vmem:[#allocation6 + $0xc88] sm:$0xff]
    %v550 = vld [vmem:[#allocation6 + $0xc90] sm:$0xff]
    %v551 = vld [vmem:[#allocation6 + $0xc98] sm:$0xff]
    %v552 = vld [vmem:[#allocation6 + $0xca0] sm:$0xff]
    %v553 = vld [vmem:[#allocation6 + $0xca8] sm:$0xff]
    %v554 = vld [vmem:[#allocation6 + $0xcb0] sm:$0xff]
    %v555 = vld [vmem:[#allocation6 + $0xcb8] sm:$0xff]
    %v556 = vld [vmem:[#allocation6 + $0xcc0] sm:$0xff]
    %v557 = vld [vmem:[#allocation6 + $0xcc8] sm:$0xff]
    %v558 = vld [vmem:[#allocation6 + $0xcd0] sm:$0xff]
    %v559 = vld [vmem:[#allocation6 + $0xcd8] sm:$0xff]
    %v560 = vld [vmem:[#allocation6 + $0xce0] sm:$0xff]
    %v561 = vld [vmem:[#allocation6 + $0xce8] sm:$0xff]
    %v562 = vld [vmem:[#allocation6 + $0xcf0] sm:$0xff]
    %v563 = vld [vmem:[#allocation6 + $0xcf8] sm:$0xff]
    %v564 = vld [vmem:[#allocation6 + $0xd00] sm:$0xff]
    %v565 = vld [vmem:[#allocation6 + $0xd08] sm:$0xff]
    %v566 = vld [vmem:[#allocation6 + $0xd10] sm:$0xff]
    %v567 = vld [vmem:[#allocation6 + $0xd18] sm:$0xff]
    %v568 = vld [vmem:[#allocation6 + $0xd20] sm:$0xff]
    %v569 = vld [vmem:[#allocation6 + $0xd28] sm:$0xff]
    %v570 = vld [vmem:[#allocation6 + $0xd30] sm:$0xff]
    %v571 = vld [vmem:[#allocation6 + $0xd38] sm:$0xff]
    %v572 = vld [vmem:[#allocation6 + $0xd40] sm:$0xff]
    %v573 = vld [vmem:[#allocation6 + $0xd48] sm:$0xff]
    %v574 = vld [vmem:[#allocation6 + $0xd50] sm:$0xff]
    %v575 = vld [vmem:[#allocation6 + $0xd58] sm:$0xff]
    %v576 = vld [vmem:[#allocation6 + $0xd60] sm:$0xff]
    %v577 = vld [vmem:[#allocation6 + $0xd68] sm:$0xff]
    %v578 = vld [vmem:[#allocation6 + $0xd70] sm:$0xff]
    %v579 = vld [vmem:[#allocation6 + $0xd78] sm:$0xff]
    %v580 = vld [vmem:[#allocation6 + $0xd80] sm:$0xff]
    %v581 = vld [vmem:[#allocation6 + $0xd88] sm:$0xff]
    %v582 = vld [vmem:[#allocation6 + $0xd90] sm:$0xff]
    %v583 = vld [vmem:[#allocation6 + $0xd98] sm:$0xff]
    %v584 = vld [vmem:[#allocation6 + $0xda0] sm:$0xff]
    %v585 = vld [vmem:[#allocation6 + $0xda8] sm:$0xff]
    %v586 = vld [vmem:[#allocation6 + $0xdb0] sm:$0xff]
    %v587 = vld [vmem:[#allocation6 + $0xdb8] sm:$0xff]
    %v588 = vld [vmem:[#allocation6 + $0xdc0] sm:$0xff]
    %v589 = vld [vmem:[#allocation6 + $0xdc8] sm:$0xff]
    %v590 = vld [vmem:[#allocation6 + $0xdd0] sm:$0xff]
    %v591 = vld [vmem:[#allocation6 + $0xdd8] sm:$0xff]
    %v592 = vld [vmem:[#allocation6 + $0xde0] sm:$0xff]
    %v593 = vld [vmem:[#allocation6 + $0xde8] sm:$0xff]
    %v594 = vld [vmem:[#allocation6 + $0xdf0] sm:$0xff]
    %v595 = vld [vmem:[#allocation6 + $0xdf8] sm:$0xff]
    %v596 = vld [vmem:[#allocation6 + $0xe00] sm:$0xff]
    %v597 = vld [vmem:[#allocation6 + $0xe08] sm:$0xff]
    %v598 = vld [vmem:[#allocation6 + $0xe10] sm:$0xff]
    %v599 = vld [vmem:[#allocation6 + $0xe18] sm:$0xff]
    %v600 = vld [vmem:[#allocation6 + $0xe20] sm:$0xff]
    %v601 = vld [vmem:[#allocation6 + $0xe28] sm:$0xff]
    %v602 = vld [vmem:[#allocation6 + $0xe30] sm:$0xff]
    %v603 = vld [vmem:[#allocation6 + $0xe38] sm:$0xff]
    %v604 = vld [vmem:[#allocation6 + $0xe40] sm:$0xff]
    %v605 = vld [vmem:[#allocation6 + $0xe48] sm:$0xff]
    %v606 = vld [vmem:[#allocation6 + $0xe50] sm:$0xff]
    %v607 = vld [vmem:[#allocation6 + $0xe58] sm:$0xff]
    %v608 = vld [vmem:[#allocation6 + $0xe60] sm:$0xff]
    %v609 = vld [vmem:[#allocation6 + $0xe68] sm:$0xff]
    %v610 = vld [vmem:[#allocation6 + $0xe70] sm:$0xff]
    %v611 = vld [vmem:[#allocation6 + $0xe78] sm:$0xff]
    %v612 = vld [vmem:[#allocation6 + $0xe80] sm:$0xff]
    %v613 = vld [vmem:[#allocation6 + $0xe88] sm:$0xff]
    %v614 = vld [vmem:[#allocation6 + $0xe90] sm:$0xff]
    %v615 = vld [vmem:[#allocation6 + $0xe98] sm:$0xff]
    %v616 = vld [vmem:[#allocation6 + $0xea0] sm:$0xff]
    %v617 = vld [vmem:[#allocation6 + $0xea8] sm:$0xff]
    %v618 = vld [vmem:[#allocation6 + $0xeb0] sm:$0xff]
    %v619 = vld [vmem:[#allocation6 + $0xeb8] sm:$0xff]
    %v620 = vld [vmem:[#allocation6 + $0xec0] sm:$0xff]
    %v621 = vld [vmem:[#allocation6 + $0xec8] sm:$0xff]
    %v622 = vld [vmem:[#allocation6 + $0xed0] sm:$0xff]
    %v623 = vld [vmem:[#allocation6 + $0xed8] sm:$0xff]
    %v624 = vld [vmem:[#allocation6 + $0xee0] sm:$0xff]
    %v625 = vld [vmem:[#allocation6 + $0xee8] sm:$0xff]
    %v626 = vld [vmem:[#allocation6 + $0xef0] sm:$0xff]
    %v627 = vld [vmem:[#allocation6 + $0xef8] sm:$0xff]
    %v628 = vld [vmem:[#allocation6 + $0xf00] sm:$0xff]
    %v629 = vld [vmem:[#allocation6 + $0xf08] sm:$0xff]
    %v630 = vld [vmem:[#allocation6 + $0xf10] sm:$0xff]
    %v631 = vld [vmem:[#allocation6 + $0xf18] sm:$0xff]
    %v632 = vld [vmem:[#allocation6 + $0xf20] sm:$0xff]
    %v633 = vld [vmem:[#allocation6 + $0xf28] sm:$0xff]
    %v634 = vld [vmem:[#allocation6 + $0xf30] sm:$0xff]
    %v635 = vld [vmem:[#allocation6 + $0xf38] sm:$0xff]
    %v636 = vld [vmem:[#allocation6 + $0xf40] sm:$0xff]
    %v637 = vld [vmem:[#allocation6 + $0xf48] sm:$0xff]
    %v638 = vld [vmem:[#allocation6 + $0xf50] sm:$0xff]
    %v639 = vld [vmem:[#allocation6 + $0xf58] sm:$0xff]
    %v640 = vld [vmem:[#allocation6 + $0xf60] sm:$0xff]
    %v641 = vld [vmem:[#allocation6 + $0xf68] sm:$0xff]
    %v642 = vld [vmem:[#allocation6 + $0xf70] sm:$0xff]
    %v643 = vld [vmem:[#allocation6 + $0xf78] sm:$0xff]
    %v644 = vld [vmem:[#allocation6 + $0xf80] sm:$0xff]
    %v645 = vld [vmem:[#allocation6 + $0xf88] sm:$0xff]
    %v646 = vld [vmem:[#allocation6 + $0xf90] sm:$0xff]
    %v647 = vld [vmem:[#allocation6 + $0xf98] sm:$0xff]
    %v648 = vld [vmem:[#allocation6 + $0xfa0] sm:$0xff]
    %v649 = vld [vmem:[#allocation6 + $0xfa8] sm:$0xff]
    %v650 = vld [vmem:[#allocation6 + $0xfb0] sm:$0xff]
    %v651 = vld [vmem:[#allocation6 + $0xfb8] sm:$0xff]
    %v652 = vld [vmem:[#allocation6 + $0xfc0] sm:$0xff]
    %v653 = vld [vmem:[#allocation6 + $0xfc8] sm:$0xff]
    %v654 = vld [vmem:[#allocation6 + $0xfd0] sm:$0xff]
    %v655 = vld [vmem:[#allocation6 + $0xfd8] sm:$0xff]
    %v656 = vld [vmem:[#allocation6 + $0xfe0] sm:$0xff]
    %v657 = vld [vmem:[#allocation6 + $0xfe8] sm:$0xff]
    %v658 = vld [vmem:[#allocation6 + $0xff0] sm:$0xff]
    %v659 = vld [vmem:[#allocation6 + $0xff8] sm:$0xff]
    %v660 = vld [vmem:[#allocation6 + $0x1000] sm:$0xff]
    %v661 = vld [vmem:[#allocation6 + $0x1008] sm:$0xff]
    %v662 = vld [vmem:[#allocation6 + $0x1010] sm:$0xff]
    %v663 = vld [vmem:[#allocation6 + $0x1018] sm:$0xff]
    %v664 = vld [vmem:[#allocation6 + $0x1020] sm:$0xff]
    %v665 = vld [vmem:[#allocation6 + $0x1028] sm:$0xff]
    %v666 = vld [vmem:[#allocation6 + $0x1030] sm:$0xff]
    %v667 = vld [vmem:[#allocation6 + $0x1038] sm:$0xff]
    %v668 = vld [vmem:[#allocation6 + $0x1040] sm:$0xff]
    %v669 = vld [vmem:[#allocation6 + $0x1048] sm:$0xff]
    %v670 = vld [vmem:[#allocation6 + $0x1050] sm:$0xff]
    %v671 = vld [vmem:[#allocation6 + $0x1058] sm:$0xff]
    %v672 = vld [vmem:[#allocation6 + $0x1060] sm:$0xff]
    %v673 = vld [vmem:[#allocation6 + $0x1068] sm:$0xff]
    %v674 = vld [vmem:[#allocation6 + $0x1070] sm:$0xff]
    %v675 = vld [vmem:[#allocation6 + $0x1078] sm:$0xff]
    %v676 = vld [vmem:[#allocation6 + $0x1080] sm:$0xff]
    %v677 = vld [vmem:[#allocation6 + $0x1088] sm:$0xff]
    %v678 = vld [vmem:[#allocation6 + $0x1090] sm:$0xff]
    %v679 = vld [vmem:[#allocation6 + $0x1098] sm:$0xff]
    %v680 = vld [vmem:[#allocation6 + $0x10a0] sm:$0xff]
    %v681 = vld [vmem:[#allocation6 + $0x10a8] sm:$0xff]
    %v682 = vld [vmem:[#allocation6 + $0x10b0] sm:$0xff]
    %v683 = vld [vmem:[#allocation6 + $0x10b8] sm:$0xff]
    %v684 = vld [vmem:[#allocation6 + $0x10c0] sm:$0xff]
    %v685 = vld [vmem:[#allocation6 + $0x10c8] sm:$0xff]
    %v686 = vld [vmem:[#allocation6 + $0x10d0] sm:$0xff]
    %v687 = vld [vmem:[#allocation6 + $0x10d8] sm:$0xff]
    %v688 = vld [vmem:[#allocation6 + $0x10e0] sm:$0xff]
    %v689 = vld [vmem:[#allocation6 + $0x10e8] sm:$0xff]
    %v690 = vld [vmem:[#allocation6 + $0x10f0] sm:$0xff]
    %v691 = vld [vmem:[#allocation6 + $0x10f8] sm:$0xff]
    %v692 = vld [vmem:[#allocation6 + $0x1100] sm:$0xff]
    %v693 = vld [vmem:[#allocation6 + $0x1108] sm:$0xff]
    %v694 = vld [vmem:[#allocation6 + $0x1110] sm:$0xff]
    %v695 = vld [vmem:[#allocation6 + $0x1118] sm:$0xff]
    %v696 = vld [vmem:[#allocation6 + $0x1120] sm:$0xff]
    %v697 = vld [vmem:[#allocation6 + $0x1128] sm:$0xff]
    %v698 = vld [vmem:[#allocation6 + $0x1130] sm:$0xff]
    %v699 = vld [vmem:[#allocation6 + $0x1138] sm:$0xff]
    %v700 = vld [vmem:[#allocation6 + $0x1140] sm:$0xff]
    %v701 = vld [vmem:[#allocation6 + $0x1148] sm:$0xff]
    %v702 = vld [vmem:[#allocation6 + $0x1150] sm:$0xff]
    %v703 = vld [vmem:[#allocation6 + $0x1158] sm:$0xff]
    %v704 = vld [vmem:[#allocation6 + $0x1160] sm:$0xff]
    %v705 = vld [vmem:[#allocation6 + $0x1168] sm:$0xff]
    %v706 = vld [vmem:[#allocation6 + $0x1170] sm:$0xff]
    %v707 = vld [vmem:[#allocation6 + $0x1178] sm:$0xff]
    %v708 = vld [vmem:[#allocation6 + $0x1180] sm:$0xff]
    %v709 = vld [vmem:[#allocation6 + $0x1188] sm:$0xff]
    %v710 = vld [vmem:[#allocation6 + $0x1190] sm:$0xff]
    %v711 = vld [vmem:[#allocation6 + $0x1198] sm:$0xff]
    %v712 = vld [vmem:[#allocation6 + $0x11a0] sm:$0xff]
    %v713 = vld [vmem:[#allocation6 + $0x11a8] sm:$0xff]
    %v714 = vld [vmem:[#allocation6 + $0x11b0] sm:$0xff]
    %v715 = vld [vmem:[#allocation6 + $0x11b8] sm:$0xff]
    %v716 = vld [vmem:[#allocation6 + $0x11c0] sm:$0xff]
    %v717 = vld [vmem:[#allocation6 + $0x11c8] sm:$0xff]
    %v718 = vld [vmem:[#allocation6 + $0x11d0] sm:$0xff]
    %v719 = vld [vmem:[#allocation6 + $0x11d8] sm:$0xff]
    %v720 = vld [vmem:[#allocation6 + $0x11e0] sm:$0xff]
    %v721 = vld [vmem:[#allocation6 + $0x11e8] sm:$0xff]
    %v722 = vld [vmem:[#allocation6 + $0x11f0] sm:$0xff]
    %v723 = vld [vmem:[#allocation6 + $0x11f8] sm:$0xff]
    %v724 = vld [vmem:[#allocation8] sm:$0x3f]
    %v726 = vlaneseq
    %v727 = vshrl.u32 %v726, 7
    %v728 = vsub.s32 0, %v727
    %v729 = vrot.slane %v724, %v728
    %v730 = vlaneseq
    %v731 = vshrl.u32 %v730, 7
    %v732 = vsub.s32 1, %v731
    %v733 = vrot.slane %v724, %v732
    %v734 = vlaneseq
    %v735 = vshrl.u32 %v734, 7
    %v736 = vsub.s32 2, %v735
    %v737 = vrot.slane %v724, %v736
    %v738 = vlaneseq
    %v739 = vshrl.u32 %v738, 7
    %v740 = vsub.s32 3, %v739
    %v741 = vrot.slane %v724, %v740
    %v742 = vlaneseq
    %v743 = vshrl.u32 %v742, 7
    %v744 = vsub.s32 4, %v743
    %v745 = vrot.slane %v724, %v744
    %v746 = vlaneseq
    %v747 = vshrl.u32 %v746, 7
    %v748 = vsub.s32 5, %v747
    %v749 = vrot.slane %v724, %v748
    %756 = vmatprep.subr.mxu0 %v149
    %757 = vmatpush1.msra.mxu0 %v148
    %758 = vmatprep.subr.mxu0 %v155
    %759 = vmatpush1.msra.mxu0 %v154
    %760 = vmatprep.subr.mxu0 %v161
    %761 = vmatpush1.msra.mxu0 %v160
    %762 = vmatprep.subr.mxu0 %v167
    %763 = vmatpush1.msra.mxu0 %v166
    %764 = vmatprep.subr.mxu0 %v173
    %765 = vmatpush1.msra.mxu0 %v172
    %766 = vmatprep.subr.mxu0 %v179
    %767 = vmatpush1.msra.mxu0 %v178
    %768 = vmatprep.subr.mxu0 %v185
    %769 = vmatpush1.msra.mxu0 %v184
    %770 = vmatprep.subr.mxu0 %v191
    %771 = vmatpush1.msra.mxu0 %v190
    %772 = vmatprep.subr.mxu0 %v197
    %773 = vmatpush1.msra.mxu0 %v196
    %774 = vmatprep.subr.mxu0 %v203
    %775 = vmatpush1.msra.mxu0 %v202
    %776 = vmatprep.subr.mxu0 %v209
    %777 = vmatpush1.msra.mxu0 %v208
    %778 = vmatprep.subr.mxu0 %v215
    %779 = vmatpush1.msra.mxu0 %v214
    %780 = vmatprep.subr.mxu0 %v221
    %781 = vmatpush1.msra.mxu0 %v220
    %782 = vmatprep.subr.mxu0 %v227
    %783 = vmatpush1.msra.mxu0 %v226
    %784 = vmatprep.subr.mxu0 %v233
    %785 = vmatpush1.msra.mxu0 %v232
    %786 = vmatprep.subr.mxu0 %v239
    %787 = vmatpush1.msra.mxu0 %v238
    %788 = vmatprep.subr.mxu0 %v245
    %789 = vmatpush1.msra.mxu0 %v244
    %790 = vmatprep.subr.mxu0 %v251
    %791 = vmatpush1.msra.mxu0 %v250
    %792 = vmatprep.subr.mxu0 %v257
    %793 = vmatpush1.msra.mxu0 %v256
    %794 = vmatprep.subr.mxu0 %v263
    %795 = vmatpush1.msra.mxu0 %v262
    %796 = vmatprep.subr.mxu0 %v269
    %797 = vmatpush1.msra.mxu0 %v268
    %798 = vmatprep.subr.mxu0 %v275
    %799 = vmatpush1.msra.mxu0 %v274
    %800 = vmatprep.subr.mxu0 %v281
    %801 = vmatpush1.msra.mxu0 %v280
    %802 = vmatprep.subr.mxu0 %v287
    %803 = vmatpush1.msra.mxu0 %v286
    %804 = vmatprep.subr.mxu0 %v293
    %805 = vmatpush1.msra.mxu0 %v292
    %806 = vmatprep.subr.mxu0 %v299
    %807 = vmatpush1.msra.mxu0 %v298
    %808 = vmatprep.subr.mxu0 %v305
    %809 = vmatpush1.msra.mxu0 %v304
    %810 = vmatprep.subr.mxu0 %v311
    %811 = vmatpush1.msra.mxu0 %v310
    %812 = vmatprep.subr.mxu0 %v317
    %813 = vmatpush1.msra.mxu0 %v316
    %814 = vmatprep.subr.mxu0 %v323
    %815 = vmatpush1.msra.mxu0 %v322
    %816 = vmatprep.subr.mxu0 %v329
    %817 = vmatpush1.msra.mxu0 %v328
    %818 = vmatprep.subr.mxu0 %v335
    %819 = vmatpush1.msra.mxu0 %v334
    %820 = vmatprep.mubr.f32.mxu0 %v101
    %821 = vmatmul.mubr.f32.gmra.mrb[0].mxu0 %v100
    %v822 = vpop.f32.mrb[0].mxu0
    %v823 = vadd.f32 %v729, %v822
    %v824 = vpop.f32.mrb[0].mxu0
    %v825 = vadd.f32 %v733, %v824
    %826 = vmatprep.mubr.f32.mxu0 %v107
    %827 = vmatmul.mubr.f32.gmra.mrb[0].mxu0 %v106
    %v828 = vpop.f32.mrb[0].mxu0
    %v829 = vadd.f32 %v729, %v828
    %v830 = vpop.f32.mrb[0].mxu0
    %v831 = vadd.f32 %v733, %v830
    %832 = vmatprep.mubr.f32.mxu0 %v113
    %833 = vmatmul.mubr.f32.gmra.mrb[0].mxu0 %v112
    %v834 = vpop.f32.mrb[0].mxu0
    %v835 = vadd.f32 %v729, %v834
    %v836 = vpop.f32.mrb[0].mxu0
    %v837 = vadd.f32 %v733, %v836
    %838 = vmatprep.mubr.f32.mxu0 %v119
    %839 = vmatmul.mubr.f32.gmra.mrb[0].mxu0 %v118
    %v840 = vpop.f32.mrb[0].mxu0
    %v841 = vadd.f32 %v729, %v840
    %v842 = vpop.f32.mrb[0].mxu0
    %v843 = vadd.f32 %v733, %v842
    %844 = vmatprep.mubr.f32.mxu0 %v125
    %845 = vmatmul.mubr.f32.gmra.mrb[0].mxu0 %v124
    %v846 = vpop.f32.mrb[0].mxu0
    %v847 = vadd.f32 %v729, %v846
    %v848 = vpop.f32.mrb[0].mxu0
    %v849 = vadd.f32 %v733, %v848
    %850 = vmatprep.mubr.f32.mxu0 %v131
    %851 = vmatmul.mubr.f32.gmra.mrb[0].mxu0 %v130
    %v852 = vpop.f32.mrb[0].mxu0
    %v853 = vadd.f32 %v729, %v852
    %v854 = vpop.f32.mrb[0].mxu0
    %v855 = vadd.f32 %v733, %v854
    %856 = vmatprep.mubr.f32.mxu0 %v137
    %857 = vmatmul.mubr.f32.gmra.mrb[0].mxu0 %v136
    %v858 = vpop.f32.mrb[0].mxu0
    %v859 = vadd.f32 %v729, %v858
    %v860 = vpop.f32.mrb[0].mxu0
    %v861 = vadd.f32 %v733, %v860
    %862 = vmatprep.mubr.f32.mxu0 %v143
    %863 = vmatmul.mubr.f32.gmra.mrb[0].mxu0 %v142
    %v864 = vpop.f32.mrb[0].mxu0
    %v865 = vadd.f32 %v729, %v864
    %v866 = vpop.f32.mrb[0].mxu0
    %v867 = vadd.f32 %v733, %v866
    %868 = vdwg.mxu0
    %869 = vmatprep.subr.mxu0 %v341
    %870 = vmatpush1.msra.mxu0 %v340
    %871 = vmatprep.subr.mxu0 %v347
    %872 = vmatpush1.msra.mxu0 %v346
    %873 = vmatprep.subr.mxu0 %v353
    %874 = vmatpush1.msra.mxu0 %v352
    %875 = vmatprep.subr.mxu0 %v359
    %876 = vmatpush1.msra.mxu0 %v358
    %877 = vmatprep.subr.mxu0 %v365
    %878 = vmatpush1.msra.mxu0 %v364
    %879 = vmatprep.subr.mxu0 %v371
    %880 = vmatpush1.msra.mxu0 %v370
    %881 = vmatprep.subr.mxu0 %v377
    %882 = vmatpush1.msra.mxu0 %v376
    %883 = vmatprep.subr.mxu0 %v383
    %884 = vmatpush1.msra.mxu0 %v382
    %885 = vmatprep.subr.mxu0 %v389
    %886 = vmatpush1.msra.mxu0 %v388
    %887 = vmatprep.subr.mxu0 %v395
    %888 = vmatpush1.msra.mxu0 %v394
    %889 = vmatprep.subr.mxu0 %v401
    %890 = vmatpush1.msra.mxu0 %v400
    %891 = vmatprep.subr.mxu0 %v407
    %892 = vmatpush1.msra.mxu0 %v406
    %893 = vmatprep.subr.mxu0 %v413
    %894 = vmatpush1.msra.mxu0 %v412
    %895 = vmatprep.subr.mxu0 %v419
    %896 = vmatpush1.msra.mxu0 %v418
    %897 = vmatprep.subr.mxu0 %v425
    %898 = vmatpush1.msra.mxu0 %v424
    %899 = vmatprep.subr.mxu0 %v431
    %900 = vmatpush1.msra.mxu0 %v430
    %901 = vmatprep.subr.mxu0 %v437
    %902 = vmatpush1.msra.mxu0 %v436
    %903 = vmatprep.subr.mxu0 %v443
    %904 = vmatpush1.msra.mxu0 %v442
    %905 = vmatprep.subr.mxu0 %v449
    %906 = vmatpush1.msra.mxu0 %v448
    %907 = vmatprep.subr.mxu0 %v455
    %908 = vmatpush1.msra.mxu0 %v454
    %909 = vmatprep.subr.mxu0 %v461
    %910 = vmatpush1.msra.mxu0 %v460
    %911 = vmatprep.subr.mxu0 %v467
    %912 = vmatpush1.msra.mxu0 %v466
    %913 = vmatprep.subr.mxu0 %v473
    %914 = vmatpush1.msra.mxu0 %v472
    %915 = vmatprep.subr.mxu0 %v479
    %916 = vmatpush1.msra.mxu0 %v478
    %917 = vmatprep.subr.mxu0 %v485
    %918 = vmatpush1.msra.mxu0 %v484
    %919 = vmatprep.subr.mxu0 %v491
    %920 = vmatpush1.msra.mxu0 %v490
    %921 = vmatprep.subr.mxu0 %v497
    %922 = vmatpush1.msra.mxu0 %v496
    %923 = vmatprep.subr.mxu0 %v503
    %924 = vmatpush1.msra.mxu0 %v502
    %925 = vmatprep.subr.mxu0 %v509
    %926 = vmatpush1.msra.mxu0 %v508
    %927 = vmatprep.subr.mxu0 %v515
    %928 = vmatpush1.msra.mxu0 %v514
    %929 = vmatprep.subr.mxu0 %v521
    %930 = vmatpush1.msra.mxu0 %v520
    %931 = vmatprep.subr.mxu0 %v527
    %932 = vmatpush1.msra.mxu0 %v526
    %933 = vmatprep.mubr.f32.mxu0 %v103
    %934 = vmatmul.mubr.f32.gmra.mrb[0].mxu0 %v102
    %v935 = vpop.f32.mrb[0].mxu0
    %v936 = vadd.f32 %v823, %v935
    %v937 = vpop.f32.mrb[0].mxu0
    %v938 = vadd.f32 %v825, %v937
    %939 = vmatprep.mubr.f32.mxu0 %v109
    %940 = vmatmul.mubr.f32.gmra.mrb[0].mxu0 %v108
    %v941 = vpop.f32.mrb[0].mxu0
    %v942 = vadd.f32 %v829, %v941
    %v943 = vpop.f32.mrb[0].mxu0
    %v944 = vadd.f32 %v831, %v943
    %945 = vmatprep.mubr.f32.mxu0 %v115
    %946 = vmatmul.mubr.f32.gmra.mrb[0].mxu0 %v114
    %v947 = vpop.f32.mrb[0].mxu0
    %v948 = vadd.f32 %v835, %v947
    %v949 = vpop.f32.mrb[0].mxu0
    %v950 = vadd.f32 %v837, %v949
    %951 = vmatprep.mubr.f32.mxu0 %v121
    %952 = vmatmul.mubr.f32.gmra.mrb[0].mxu0 %v120
    %v953 = vpop.f32.mrb[0].mxu0
    %v954 = vadd.f32 %v841, %v953
    %v955 = vpop.f32.mrb[0].mxu0
    %v956 = vadd.f32 %v843, %v955
    %957 = vmatprep.mubr.f32.mxu0 %v127
    %958 = vmatmul.mubr.f32.gmra.mrb[0].mxu0 %v126
    %v959 = vpop.f32.mrb[0].mxu0
    %v960 = vadd.f32 %v847, %v959
    %v961 = vpop.f32.mrb[0].mxu0
    %v962 = vadd.f32 %v849, %v961
    %963 = vmatprep.mubr.f32.mxu0 %v133
    %964 = vmatmul.mubr.f32.gmra.mrb[0].mxu0 %v132
    %v965 = vpop.f32.mrb[0].mxu0
    %v966 = vadd.f32 %v853, %v965
    %v967 = vpop.f32.mrb[0].mxu0
    %v968 = vadd.f32 %v855, %v967
    %969 = vmatprep.mubr.f32.mxu0 %v139
    %970 = vmatmul.mubr.f32.gmra.mrb[0].mxu0 %v138
    %v971 = vpop.f32.mrb[0].mxu0
    %v972 = vadd.f32 %v859, %v971
    %v973 = vpop.f32.mrb[0].mxu0
    %v974 = vadd.f32 %v861, %v973
    %975 = vmatprep.mubr.f32.mxu0 %v145
    %976 = vmatmul.mubr.f32.gmra.mrb[0].mxu0 %v144
    %v977 = vpop.f32.mrb[0].mxu0
    %v978 = vadd.f32 %v865, %v977
    %v979 = vpop.f32.mrb[0].mxu0
    %v980 = vadd.f32 %v867, %v979
    %981 = vdwg.mxu0
    %982 = vmatprep.subr.mxu0 %v533
    %983 = vmatpush1.msra.mxu0 %v532
    %984 = vmatprep.subr.mxu0 %v539
    %985 = vmatpush1.msra.mxu0 %v538
    %986 = vmatprep.subr.mxu0 %v545
    %987 = vmatpush1.msra.mxu0 %v544
    %988 = vmatprep.subr.mxu0 %v551
    %989 = vmatpush1.msra.mxu0 %v550
    %990 = vmatprep.subr.mxu0 %v557
    %991 = vmatpush1.msra.mxu0 %v556
    %992 = vmatprep.subr.mxu0 %v563
    %993 = vmatpush1.msra.mxu0 %v562
    %994 = vmatprep.subr.mxu0 %v569
    %995 = vmatpush1.msra.mxu0 %v568
    %996 = vmatprep.subr.mxu0 %v575
    %997 = vmatpush1.msra.mxu0 %v574
    %998 = vmatprep.subr.mxu0 %v581
    %999 = vmatpush1.msra.mxu0 %v580
    %1000 = vmatprep.subr.mxu0 %v587
    %1001 = vmatpush1.msra.mxu0 %v586
    %1002 = vmatprep.subr.mxu0 %v593
    %1003 = vmatpush1.msra.mxu0 %v592
    %1004 = vmatprep.subr.mxu0 %v599
    %1005 = vmatpush1.msra.mxu0 %v598
    %1006 = vmatprep.subr.mxu0 %v605
    %1007 = vmatpush1.msra.mxu0 %v604
    %1008 = vmatprep.subr.mxu0 %v611
    %1009 = vmatpush1.msra.mxu0 %v610
    %1010 = vmatprep.subr.mxu0 %v617
    %1011 = vmatpush1.msra.mxu0 %v616
    %1012 = vmatprep.subr.mxu0 %v623
    %1013 = vmatpush1.msra.mxu0 %v622
    %1014 = vmatprep.subr.mxu0 %v629
    %1015 = vmatpush1.msra.mxu0 %v628
    %1016 = vmatprep.subr.mxu0 %v635
    %1017 = vmatpush1.msra.mxu0 %v634
    %1018 = vmatprep.subr.mxu0 %v641
    %1019 = vmatpush1.msra.mxu0 %v640
    %1020 = vmatprep.subr.mxu0 %v647
    %1021 = vmatpush1.msra.mxu0 %v646
    %1022 = vmatprep.subr.mxu0 %v653
    %1023 = vmatpush1.msra.mxu0 %v652
    %1024 = vmatprep.subr.mxu0 %v659
    %1025 = vmatpush1.msra.mxu0 %v658
    %1026 = vmatprep.subr.mxu0 %v665
    %1027 = vmatpush1.msra.mxu0 %v664
    %1028 = vmatprep.subr.mxu0 %v671
    %1029 = vmatpush1.msra.mxu0 %v670
    %1030 = vmatprep.subr.mxu0 %v677
    %1031 = vmatpush1.msra.mxu0 %v676
    %1032 = vmatprep.subr.mxu0 %v683
    %1033 = vmatpush1.msra.mxu0 %v682
    %1034 = vmatprep.subr.mxu0 %v689
    %1035 = vmatpush1.msra.mxu0 %v688
    %1036 = vmatprep.subr.mxu0 %v695
    %1037 = vmatpush1.msra.mxu0 %v694
    %1038 = vmatprep.subr.mxu0 %v701
    %1039 = vmatpush1.msra.mxu0 %v700
    %1040 = vmatprep.subr.mxu0 %v707
    %1041 = vmatpush1.msra.mxu0 %v706
    %1042 = vmatprep.subr.mxu0 %v713
    %1043 = vmatpush1.msra.mxu0 %v712
    %1044 = vmatprep.subr.mxu0 %v719
    %1045 = vmatpush1.msra.mxu0 %v718
    %1046 = vmatprep.mubr.f32.mxu0 %v105
    %1047 = vmatmul.mubr.f32.gmra.mrb[0].mxu0 %v104
    %v1048 = vpop.f32.mrb[0].mxu0
    %v1049 = vadd.f32 %v936, %v1048
    %v1050 = vpop.f32.mrb[0].mxu0
    %v1051 = vadd.f32 %v938, %v1050
    %1052 = vmatprep.mubr.f32.mxu0 %v111
    %1053 = vmatmul.mubr.f32.gmra.mrb[0].mxu0 %v110
    %v1054 = vpop.f32.mrb[0].mxu0
    %v1055 = vadd.f32 %v942, %v1054
    %v1056 = vpop.f32.mrb[0].mxu0
    %v1057 = vadd.f32 %v944, %v1056
    %1058 = vmatprep.mubr.f32.mxu0 %v117
    %1059 = vmatmul.mubr.f32.gmra.mrb[0].mxu0 %v116
    %v1060 = vpop.f32.mrb[0].mxu0
    %v1061 = vadd.f32 %v948, %v1060
    %v1062 = vpop.f32.mrb[0].mxu0
    %v1063 = vadd.f32 %v950, %v1062
    %1064 = vmatprep.mubr.f32.mxu0 %v123
    %1065 = vmatmul.mubr.f32.gmra.mrb[0].mxu0 %v122
    %v1066 = vpop.f32.mrb[0].mxu0
    %v1067 = vadd.f32 %v954, %v1066
    %v1068 = vpop.f32.mrb[0].mxu0
    %v1069 = vadd.f32 %v956, %v1068
    %1070 = vmatprep.mubr.f32.mxu0 %v129
    %1071 = vmatmul.mubr.f32.gmra.mrb[0].mxu0 %v128
    %v1072 = vpop.f32.mrb[0].mxu0
    %v1073 = vadd.f32 %v960, %v1072
    %v1074 = vpop.f32.mrb[0].mxu0
    %v1075 = vadd.f32 %v962, %v1074
    %1076 = vmatprep.mubr.f32.mxu0 %v135
    %1077 = vmatmul.mubr.f32.gmra.mrb[0].mxu0 %v134
    %v1078 = vpop.f32.mrb[0].mxu0
    %v1079 = vadd.f32 %v966, %v1078
    %v1080 = vpop.f32.mrb[0].mxu0
    %v1081 = vadd.f32 %v968, %v1080
    %1082 = vmatprep.mubr.f32.mxu0 %v141
    %1083 = vmatmul.mubr.f32.gmra.mrb[0].mxu0 %v140
    %v1084 = vpop.f32.mrb[0].mxu0
    %v1085 = vadd.f32 %v972, %v1084
    %v1086 = vpop.f32.mrb[0].mxu0
    %v1087 = vadd.f32 %v974, %v1086
    %1088 = vmatprep.mubr.f32.mxu0 %v147
    %1089 = vmatmul.mubr.f32.gmra.mrb[0].mxu0 %v146
    %v1090 = vpop.f32.mrb[0].mxu0
    %v1091 = vadd.f32 %v978, %v1090
    %v1092 = vpop.f32.mrb[0].mxu0
    %v1093 = vadd.f32 %v980, %v1092
    %1094 = vdwg.mxu0
    %1095 = vmatprep.subr.mxu0 %v151
    %1096 = vmatpush1.msra.mxu0 %v150
    %1097 = vmatprep.subr.mxu0 %v157
    %1098 = vmatpush1.msra.mxu0 %v156
    %1099 = vmatprep.subr.mxu0 %v163
    %1100 = vmatpush1.msra.mxu0 %v162
    %1101 = vmatprep.subr.mxu0 %v169
    %1102 = vmatpush1.msra.mxu0 %v168
    %1103 = vmatprep.subr.mxu0 %v175
    %1104 = vmatpush1.msra.mxu0 %v174
    %1105 = vmatprep.subr.mxu0 %v181
    %1106 = vmatpush1.msra.mxu0 %v180
    %1107 = vmatprep.subr.mxu0 %v187
    %1108 = vmatpush1.msra.mxu0 %v186
    %1109 = vmatprep.subr.mxu0 %v193
    %1110 = vmatpush1.msra.mxu0 %v192
    %1111 = vmatprep.subr.mxu0 %v199
    %1112 = vmatpush1.msra.mxu0 %v198
    %1113 = vmatprep.subr.mxu0 %v205
    %1114 = vmatpush1.msra.mxu0 %v204
    %1115 = vmatprep.subr.mxu0 %v211
    %1116 = vmatpush1.msra.mxu0 %v210
    %1117 = vmatprep.subr.mxu0 %v217
    %1118 = vmatpush1.msra.mxu0 %v216
    %1119 = vmatprep.subr.mxu0 %v223
    %1120 = vmatpush1.msra.mxu0 %v222
    %1121 = vmatprep.subr.mxu0 %v229
    %1122 = vmatpush1.msra.mxu0 %v228
    %1123 = vmatprep.subr.mxu0 %v235
    %1124 = vmatpush1.msra.mxu0 %v234
    %1125 = vmatprep.subr.mxu0 %v241
    %1126 = vmatpush1.msra.mxu0 %v240
    %1127 = vmatprep.subr.mxu0 %v247
    %1128 = vmatpush1.msra.mxu0 %v246
    %1129 = vmatprep.subr.mxu0 %v253
    %1130 = vmatpush1.msra.mxu0 %v252
    %1131 = vmatprep.subr.mxu0 %v259
    %1132 = vmatpush1.msra.mxu0 %v258
    %1133 = vmatprep.subr.mxu0 %v265
    %1134 = vmatpush1.msra.mxu0 %v264
    %1135 = vmatprep.subr.mxu0 %v271
    %1136 = vmatpush1.msra.mxu0 %v270
    %1137 = vmatprep.subr.mxu0 %v277
    %1138 = vmatpush1.msra.mxu0 %v276
    %1139 = vmatprep.subr.mxu0 %v283
    %1140 = vmatpush1.msra.mxu0 %v282
    %1141 = vmatprep.subr.mxu0 %v289
    %1142 = vmatpush1.msra.mxu0 %v288
    %1143 = vmatprep.subr.mxu0 %v295
    %1144 = vmatpush1.msra.mxu0 %v294
    %1145 = vmatprep.subr.mxu0 %v301
    %1146 = vmatpush1.msra.mxu0 %v300
    %1147 = vmatprep.subr.mxu0 %v307
    %1148 = vmatpush1.msra.mxu0 %v306
    %1149 = vmatprep.subr.mxu0 %v313
    %1150 = vmatpush1.msra.mxu0 %v312
    %1151 = vmatprep.subr.mxu0 %v319
    %1152 = vmatpush1.msra.mxu0 %v318
    %1153 = vmatprep.subr.mxu0 %v325
    %1154 = vmatpush1.msra.mxu0 %v324
    %1155 = vmatprep.subr.mxu0 %v331
    %1156 = vmatpush1.msra.mxu0 %v330
    %1157 = vmatprep.subr.mxu0 %v337
    %1158 = vmatpush1.msra.mxu0 %v336
    %1159 = vmatprep.mubr.f32.mxu0 %v101
    %1160 = vmatmul.mubr.f32.gmra.mrb[0].mxu0 %v100
    %v1161 = vpop.f32.mrb[0].mxu0
    %v1162 = vadd.f32 %v737, %v1161
    %v1163 = vpop.f32.mrb[0].mxu0
    %v1164 = vadd.f32 %v741, %v1163
    %1165 = vmatprep.mubr.f32.mxu0 %v107
    %1166 = vmatmul.mubr.f32.gmra.mrb[0].mxu0 %v106
    %v1167 = vpop.f32.mrb[0].mxu0
    %v1168 = vadd.f32 %v737, %v1167
    %v1169 = vpop.f32.mrb[0].mxu0
    %v1170 = vadd.f32 %v741, %v1169
    %1171 = vmatprep.mubr.f32.mxu0 %v113
    %1172 = vmatmul.mubr.f32.gmra.mrb[0].mxu0 %v112
    %v1173 = vpop.f32.mrb[0].mxu0
    %v1174 = vadd.f32 %v737, %v1173
    %v1175 = vpop.f32.mrb[0].mxu0
    %v1176 = vadd.f32 %v741, %v1175
    %1177 = vmatprep.mubr.f32.mxu0 %v119
    %1178 = vmatmul.mubr.f32.gmra.mrb[0].mxu0 %v118
    %v1179 = vpop.f32.mrb[0].mxu0
    %v1180 = vadd.f32 %v737, %v1179
    %v1181 = vpop.f32.mrb[0].mxu0
    %v1182 = vadd.f32 %v741, %v1181
    %1183 = vmatprep.mubr.f32.mxu0 %v125
    %1184 = vmatmul.mubr.f32.gmra.mrb[0].mxu0 %v124
    %v1185 = vpop.f32.mrb[0].mxu0
    %v1186 = vadd.f32 %v737, %v1185
    %v1187 = vpop.f32.mrb[0].mxu0
    %v1188 = vadd.f32 %v741, %v1187
    %1189 = vmatprep.mubr.f32.mxu0 %v131
    %1190 = vmatmul.mubr.f32.gmra.mrb[0].mxu0 %v130
    %v1191 = vpop.f32.mrb[0].mxu0
    %v1192 = vadd.f32 %v737, %v1191
    %v1193 = vpop.f32.mrb[0].mxu0
    %v1194 = vadd.f32 %v741, %v1193
    %1195 = vmatprep.mubr.f32.mxu0 %v137
    %1196 = vmatmul.mubr.f32.gmra.mrb[0].mxu0 %v136
    %v1197 = vpop.f32.mrb[0].mxu0
    %v1198 = vadd.f32 %v737, %v1197
    %v1199 = vpop.f32.mrb[0].mxu0
    %v1200 = vadd.f32 %v741, %v1199
    %1201 = vmatprep.mubr.f32.mxu0 %v143
    %1202 = vmatmul.mubr.f32.gmra.mrb[0].mxu0 %v142
    %v1203 = vpop.f32.mrb[0].mxu0
    %v1204 = vadd.f32 %v737, %v1203
    %v1205 = vpop.f32.mrb[0].mxu0
    %v1206 = vadd.f32 %v741, %v1205
    %1207 = vdwg.mxu0
    %1208 = vmatprep.subr.mxu0 %v343
    %1209 = vmatpush1.msra.mxu0 %v342
    %1210 = vmatprep.subr.mxu0 %v349
    %1211 = vmatpush1.msra.mxu0 %v348
    %1212 = vmatprep.subr.mxu0 %v355
    %1213 = vmatpush1.msra.mxu0 %v354
    %1214 = vmatprep.subr.mxu0 %v361
    %1215 = vmatpush1.msra.mxu0 %v360
    %1216 = vmatprep.subr.mxu0 %v367
    %1217 = vmatpush1.msra.mxu0 %v366
    %1218 = vmatprep.subr.mxu0 %v373
    %1219 = vmatpush1.msra.mxu0 %v372
    %1220 = vmatprep.subr.mxu0 %v379
    %1221 = vmatpush1.msra.mxu0 %v378
    %1222 = vmatprep.subr.mxu0 %v385
    %1223 = vmatpush1.msra.mxu0 %v384
    %1224 = vmatprep.subr.mxu0 %v391
    %1225 = vmatpush1.msra.mxu0 %v390
    %1226 = vmatprep.subr.mxu0 %v397
    %1227 = vmatpush1.msra.mxu0 %v396
    %1228 = vmatprep.subr.mxu0 %v403
    %1229 = vmatpush1.msra.mxu0 %v402
    %1230 = vmatprep.subr.mxu0 %v409
    %1231 = vmatpush1.msra.mxu0 %v408
    %1232 = vmatprep.subr.mxu0 %v415
    %1233 = vmatpush1.msra.mxu0 %v414
    %1234 = vmatprep.subr.mxu0 %v421
    %1235 = vmatpush1.msra.mxu0 %v420
    %1236 = vmatprep.subr.mxu0 %v427
    %1237 = vmatpush1.msra.mxu0 %v426
    %1238 = vmatprep.subr.mxu0 %v433
    %1239 = vmatpush1.msra.mxu0 %v432
    %1240 = vmatprep.subr.mxu0 %v439
    %1241 = vmatpush1.msra.mxu0 %v438
    %1242 = vmatprep.subr.mxu0 %v445
    %1243 = vmatpush1.msra.mxu0 %v444
    %1244 = vmatprep.subr.mxu0 %v451
    %1245 = vmatpush1.msra.mxu0 %v450
    %1246 = vmatprep.subr.mxu0 %v457
    %1247 = vmatpush1.msra.mxu0 %v456
    %1248 = vmatprep.subr.mxu0 %v463
    %1249 = vmatpush1.msra.mxu0 %v462
    %1250 = vmatprep.subr.mxu0 %v469
    %1251 = vmatpush1.msra.mxu0 %v468
    %1252 = vmatprep.subr.mxu0 %v475
    %1253 = vmatpush1.msra.mxu0 %v474
    %1254 = vmatprep.subr.mxu0 %v481
    %1255 = vmatpush1.msra.mxu0 %v480
    %1256 = vmatprep.subr.mxu0 %v487
    %1257 = vmatpush1.msra.mxu0 %v486
    %1258 = vmatprep.subr.mxu0 %v493
    %1259 = vmatpush1.msra.mxu0 %v492
    %1260 = vmatprep.subr.mxu0 %v499
    %1261 = vmatpush1.msra.mxu0 %v498
    %1262 = vmatprep.subr.mxu0 %v505
    %1263 = vmatpush1.msra.mxu0 %v504
    %1264 = vmatprep.subr.mxu0 %v511
    %1265 = vmatpush1.msra.mxu0 %v510
    %1266 = vmatprep.subr.mxu0 %v517
    %1267 = vmatpush1.msra.mxu0 %v516
    %1268 = vmatprep.subr.mxu0 %v523
    %1269 = vmatpush1.msra.mxu0 %v522
    %1270 = vmatprep.subr.mxu0 %v529
    %1271 = vmatpush1.msra.mxu0 %v528
    %1272 = vmatprep.mubr.f32.mxu0 %v103
    %1273 = vmatmul.mubr.f32.gmra.mrb[0].mxu0 %v102
    %v1274 = vpop.f32.mrb[0].mxu0
    %v1275 = vadd.f32 %v1162, %v1274
    %v1276 = vpop.f32.mrb[0].mxu0
    %v1277 = vadd.f32 %v1164, %v1276
    %1278 = vmatprep.mubr.f32.mxu0 %v109
    %1279 = vmatmul.mubr.f32.gmra.mrb[0].mxu0 %v108
    %v1280 = vpop.f32.mrb[0].mxu0
    %v1281 = vadd.f32 %v1168, %v1280
    %v1282 = vpop.f32.mrb[0].mxu0
    %v1283 = vadd.f32 %v1170, %v1282
    %1284 = vmatprep.mubr.f32.mxu0 %v115
    %1285 = vmatmul.mubr.f32.gmra.mrb[0].mxu0 %v114
    %v1286 = vpop.f32.mrb[0].mxu0
    %v1287 = vadd.f32 %v1174, %v1286
    %v1288 = vpop.f32.mrb[0].mxu0
    %v1289 = vadd.f32 %v1176, %v1288
    %1290 = vmatprep.mubr.f32.mxu0 %v121
    %1291 = vmatmul.mubr.f32.gmra.mrb[0].mxu0 %v120
    %v1292 = vpop.f32.mrb[0].mxu0
    %v1293 = vadd.f32 %v1180, %v1292
    %v1294 = vpop.f32.mrb[0].mxu0
    %v1295 = vadd.f32 %v1182, %v1294
    %1296 = vmatprep.mubr.f32.mxu0 %v127
    %1297 = vmatmul.mubr.f32.gmra.mrb[0].mxu0 %v126
    %v1298 = vpop.f32.mrb[0].mxu0
    %v1299 = vadd.f32 %v1186, %v1298
    %v1300 = vpop.f32.mrb[0].mxu0
    %v1301 = vadd.f32 %v1188, %v1300
    %1302 = vmatprep.mubr.f32.mxu0 %v133
    %1303 = vmatmul.mubr.f32.gmra.mrb[0].mxu0 %v132
    %v1304 = vpop.f32.mrb[0].mxu0
    %v1305 = vadd.f32 %v1192, %v1304
    %v1306 = vpop.f32.mrb[0].mxu0
    %v1307 = vadd.f32 %v1194, %v1306
    %1308 = vmatprep.mubr.f32.mxu0 %v139
    %1309 = vmatmul.mubr.f32.gmra.mrb[0].mxu0 %v138
    %v1310 = vpop.f32.mrb[0].mxu0
    %v1311 = vadd.f32 %v1198, %v1310
    %v1312 = vpop.f32.mrb[0].mxu0
    %v1313 = vadd.f32 %v1200, %v1312
    %1314 = vmatprep.mubr.f32.mxu0 %v145
    %1315 = vmatmul.mubr.f32.gmra.mrb[0].mxu0 %v144
    %v1316 = vpop.f32.mrb[0].mxu0
    %v1317 = vadd.f32 %v1204, %v1316
    %v1318 = vpop.f32.mrb[0].mxu0
    %v1319 = vadd.f32 %v1206, %v1318
    %1320 = vdwg.mxu0
    %1321 = vmatprep.subr.mxu0 %v535
    %1322 = vmatpush1.msra.mxu0 %v534
    %1323 = vmatprep.subr.mxu0 %v541
    %1324 = vmatpush1.msra.mxu0 %v540
    %1325 = vmatprep.subr.mxu0 %v547
    %1326 = vmatpush1.msra.mxu0 %v546
    %1327 = vmatprep.subr.mxu0 %v553
    %1328 = vmatpush1.msra.mxu0 %v552
    %1329 = vmatprep.subr.mxu0 %v559
    %1330 = vmatpush1.msra.mxu0 %v558
    %1331 = vmatprep.subr.mxu0 %v565
    %1332 = vmatpush1.msra.mxu0 %v564
    %1333 = vmatprep.subr.mxu0 %v571
    %1334 = vmatpush1.msra.mxu0 %v570
    %1335 = vmatprep.subr.mxu0 %v577
    %1336 = vmatpush1.msra.mxu0 %v576
    %1337 = vmatprep.subr.mxu0 %v583
    %1338 = vmatpush1.msra.mxu0 %v582
    %1339 = vmatprep.subr.mxu0 %v589
    %1340 = vmatpush1.msra.mxu0 %v588
    %1341 = vmatprep.subr.mxu0 %v595
    %1342 = vmatpush1.msra.mxu0 %v594
    %1343 = vmatprep.subr.mxu0 %v601
    %1344 = vmatpush1.msra.mxu0 %v600
    %1345 = vmatprep.subr.mxu0 %v607
    %1346 = vmatpush1.msra.mxu0 %v606
    %1347 = vmatprep.subr.mxu0 %v613
    %1348 = vmatpush1.msra.mxu0 %v612
    %1349 = vmatprep.subr.mxu0 %v619
    %1350 = vmatpush1.msra.mxu0 %v618
    %1351 = vmatprep.subr.mxu0 %v625
    %1352 = vmatpush1.msra.mxu0 %v624
    %1353 = vmatprep.subr.mxu0 %v631
    %1354 = vmatpush1.msra.mxu0 %v630
    %1355 = vmatprep.subr.mxu0 %v637
    %1356 = vmatpush1.msra.mxu0 %v636
    %1357 = vmatprep.subr.mxu0 %v643
    %1358 = vmatpush1.msra.mxu0 %v642
    %1359 = vmatprep.subr.mxu0 %v649
    %1360 = vmatpush1.msra.mxu0 %v648
    %1361 = vmatprep.subr.mxu0 %v655
    %1362 = vmatpush1.msra.mxu0 %v654
    %1363 = vmatprep.subr.mxu0 %v661
    %1364 = vmatpush1.msra.mxu0 %v660
    %1365 = vmatprep.subr.mxu0 %v667
    %1366 = vmatpush1.msra.mxu0 %v666
    %1367 = vmatprep.subr.mxu0 %v673
    %1368 = vmatpush1.msra.mxu0 %v672
    %1369 = vmatprep.subr.mxu0 %v679
    %1370 = vmatpush1.msra.mxu0 %v678
    %1371 = vmatprep.subr.mxu0 %v685
    %1372 = vmatpush1.msra.mxu0 %v684
    %1373 = vmatprep.subr.mxu0 %v691
    %1374 = vmatpush1.msra.mxu0 %v690
    %1375 = vmatprep.subr.mxu0 %v697
    %1376 = vmatpush1.msra.mxu0 %v696
    %1377 = vmatprep.subr.mxu0 %v703
    %1378 = vmatpush1.msra.mxu0 %v702
    %1379 = vmatprep.subr.mxu0 %v709
    %1380 = vmatpush1.msra.mxu0 %v708
    %1381 = vmatprep.subr.mxu0 %v715
    %1382 = vmatpush1.msra.mxu0 %v714
    %1383 = vmatprep.subr.mxu0 %v721
    %1384 = vmatpush1.msra.mxu0 %v720
    %1385 = vmatprep.mubr.f32.mxu0 %v105
    %1386 = vmatmul.mubr.f32.gmra.mrb[0].mxu0 %v104
    %v1387 = vpop.f32.mrb[0].mxu0
    %v1388 = vadd.f32 %v1275, %v1387
    %v1389 = vpop.f32.mrb[0].mxu0
    %v1390 = vadd.f32 %v1277, %v1389
    %1391 = vmatprep.mubr.f32.mxu0 %v111
    %1392 = vmatmul.mubr.f32.gmra.mrb[0].mxu0 %v110
    %v1393 = vpop.f32.mrb[0].mxu0
    %v1394 = vadd.f32 %v1281, %v1393
    %v1395 = vpop.f32.mrb[0].mxu0
    %v1396 = vadd.f32 %v1283, %v1395
    %1397 = vmatprep.mubr.f32.mxu0 %v117
    %1398 = vmatmul.mubr.f32.gmra.mrb[0].mxu0 %v116
    %v1399 = vpop.f32.mrb[0].mxu0
    %v1400 = vadd.f32 %v1287, %v1399
    %v1401 = vpop.f32.mrb[0].mxu0
    %v1402 = vadd.f32 %v1289, %v1401
    %1403 = vmatprep.mubr.f32.mxu0 %v123
    %1404 = vmatmul.mubr.f32.gmra.mrb[0].mxu0 %v122
    %v1405 = vpop.f32.mrb[0].mxu0
    %v1406 = vadd.f32 %v1293, %v1405
    %v1407 = vpop.f32.mrb[0].mxu0
    %v1408 = vadd.f32 %v1295, %v1407
    %1409 = vmatprep.mubr.f32.mxu0 %v129
    %1410 = vmatmul.mubr.f32.gmra.mrb[0].mxu0 %v128
    %v1411 = vpop.f32.mrb[0].mxu0
    %v1412 = vadd.f32 %v1299, %v1411
    %v1413 = vpop.f32.mrb[0].mxu0
    %v1414 = vadd.f32 %v1301, %v1413
    %1415 = vmatprep.mubr.f32.mxu0 %v135
    %1416 = vmatmul.mubr.f32.gmra.mrb[0].mxu0 %v134
    %v1417 = vpop.f32.mrb[0].mxu0
    %v1418 = vadd.f32 %v1305, %v1417
    %v1419 = vpop.f32.mrb[0].mxu0
    %v1420 = vadd.f32 %v1307, %v1419
    %1421 = vmatprep.mubr.f32.mxu0 %v141
    %1422 = vmatmul.mubr.f32.gmra.mrb[0].mxu0 %v140
    %v1423 = vpop.f32.mrb[0].mxu0
    %v1424 = vadd.f32 %v1311, %v1423
    %v1425 = vpop.f32.mrb[0].mxu0
    %v1426 = vadd.f32 %v1313, %v1425
    %1427 = vmatprep.mubr.f32.mxu0 %v147
    %1428 = vmatmul.mubr.f32.gmra.mrb[0].mxu0 %v146
    %v1429 = vpop.f32.mrb[0].mxu0
    %v1430 = vadd.f32 %v1317, %v1429
    %v1431 = vpop.f32.mrb[0].mxu0
    %v1432 = vadd.f32 %v1319, %v1431
    %1433 = vdwg.mxu0
    %1434 = vmatprep.subr.mxu0 %v153
    %1435 = vmatpush1.msra.mxu0 %v152
    %1436 = vmatprep.subr.mxu0 %v159
    %1437 = vmatpush1.msra.mxu0 %v158
    %1438 = vmatprep.subr.mxu0 %v165
    %1439 = vmatpush1.msra.mxu0 %v164
    %1440 = vmatprep.subr.mxu0 %v171
    %1441 = vmatpush1.msra.mxu0 %v170
    %1442 = vmatprep.subr.mxu0 %v177
    %1443 = vmatpush1.msra.mxu0 %v176
    %1444 = vmatprep.subr.mxu0 %v183
    %1445 = vmatpush1.msra.mxu0 %v182
    %1446 = vmatprep.subr.mxu0 %v189
    %1447 = vmatpush1.msra.mxu0 %v188
    %1448 = vmatprep.subr.mxu0 %v195
    %1449 = vmatpush1.msra.mxu0 %v194
    %1450 = vmatprep.subr.mxu0 %v201
    %1451 = vmatpush1.msra.mxu0 %v200
    %1452 = vmatprep.subr.mxu0 %v207
    %1453 = vmatpush1.msra.mxu0 %v206
    %1454 = vmatprep.subr.mxu0 %v213
    %1455 = vmatpush1.msra.mxu0 %v212
    %1456 = vmatprep.subr.mxu0 %v219
    %1457 = vmatpush1.msra.mxu0 %v218
    %1458 = vmatprep.subr.mxu0 %v225
    %1459 = vmatpush1.msra.mxu0 %v224
    %1460 = vmatprep.subr.mxu0 %v231
    %1461 = vmatpush1.msra.mxu0 %v230
    %1462 = vmatprep.subr.mxu0 %v237
    %1463 = vmatpush1.msra.mxu0 %v236
    %1464 = vmatprep.subr.mxu0 %v243
    %1465 = vmatpush1.msra.mxu0 %v242
    %1466 = vmatprep.subr.mxu0 %v249
    %1467 = vmatpush1.msra.mxu0 %v248
    %1468 = vmatprep.subr.mxu0 %v255
    %1469 = vmatpush1.msra.mxu0 %v254
    %1470 = vmatprep.subr.mxu0 %v261
    %1471 = vmatpush1.msra.mxu0 %v260
    %1472 = vmatprep.subr.mxu0 %v267
    %1473 = vmatpush1.msra.mxu0 %v266
    %1474 = vmatprep.subr.mxu0 %v273
    %1475 = vmatpush1.msra.mxu0 %v272
    %1476 = vmatprep.subr.mxu0 %v279
    %1477 = vmatpush1.msra.mxu0 %v278
    %1478 = vmatprep.subr.mxu0 %v285
    %1479 = vmatpush1.msra.mxu0 %v284
    %1480 = vmatprep.subr.mxu0 %v291
    %1481 = vmatpush1.msra.mxu0 %v290
    %1482 = vmatprep.subr.mxu0 %v297
    %1483 = vmatpush1.msra.mxu0 %v296
    %1484 = vmatprep.subr.mxu0 %v303
    %1485 = vmatpush1.msra.mxu0 %v302
    %1486 = vmatprep.subr.mxu0 %v309
    %1487 = vmatpush1.msra.mxu0 %v308
    %1488 = vmatprep.subr.mxu0 %v315
    %1489 = vmatpush1.msra.mxu0 %v314
    %1490 = vmatprep.subr.mxu0 %v321
    %1491 = vmatpush1.msra.mxu0 %v320
    %1492 = vmatprep.subr.mxu0 %v327
    %1493 = vmatpush1.msra.mxu0 %v326
    %1494 = vmatprep.subr.mxu0 %v333
    %1495 = vmatpush1.msra.mxu0 %v332
    %1496 = vmatprep.subr.mxu0 %v339
    %1497 = vmatpush1.msra.mxu0 %v338
    %1498 = vmatprep.mubr.f32.mxu0 %v101
    %1499 = vmatmul.mubr.f32.gmra.mrb[0].mxu0 %v100
    %v1500 = vpop.f32.mrb[0].mxu0
    %v1501 = vadd.f32 %v745, %v1500
    %v1502 = vpop.f32.mrb[0].mxu0
    %v1503 = vadd.f32 %v749, %v1502
    %1504 = vmatprep.mubr.f32.mxu0 %v107
    %1505 = vmatmul.mubr.f32.gmra.mrb[0].mxu0 %v106
    %v1506 = vpop.f32.mrb[0].mxu0
    %v1507 = vadd.f32 %v745, %v1506
    %v1508 = vpop.f32.mrb[0].mxu0
    %v1509 = vadd.f32 %v749, %v1508
    %1510 = vmatprep.mubr.f32.mxu0 %v113
    %1511 = vmatmul.mubr.f32.gmra.mrb[0].mxu0 %v112
    %v1512 = vpop.f32.mrb[0].mxu0
    %v1513 = vadd.f32 %v745, %v1512
    %v1514 = vpop.f32.mrb[0].mxu0
    %v1515 = vadd.f32 %v749, %v1514
    %1516 = vmatprep.mubr.f32.mxu0 %v119
    %1517 = vmatmul.mubr.f32.gmra.mrb[0].mxu0 %v118
    %v1518 = vpop.f32.mrb[0].mxu0
    %v1519 = vadd.f32 %v745, %v1518
    %v1520 = vpop.f32.mrb[0].mxu0
    %v1521 = vadd.f32 %v749, %v1520
    %1522 = vmatprep.mubr.f32.mxu0 %v125
    %1523 = vmatmul.mubr.f32.gmra.mrb[0].mxu0 %v124
    %v1524 = vpop.f32.mrb[0].mxu0
    %v1525 = vadd.f32 %v745, %v1524
    %v1526 = vpop.f32.mrb[0].mxu0
    %v1527 = vadd.f32 %v749, %v1526
    %1528 = vmatprep.mubr.f32.mxu0 %v131
    %1529 = vmatmul.mubr.f32.gmra.mrb[0].mxu0 %v130
    %v1530 = vpop.f32.mrb[0].mxu0
    %v1531 = vadd.f32 %v745, %v1530
    %v1532 = vpop.f32.mrb[0].mxu0
    %v1533 = vadd.f32 %v749, %v1532
    %1534 = vmatprep.mubr.f32.mxu0 %v137
    %1535 = vmatmul.mubr.f32.gmra.mrb[0].mxu0 %v136
    %v1536 = vpop.f32.mrb[0].mxu0
    %v1537 = vadd.f32 %v745, %v1536
    %v1538 = vpop.f32.mrb[0].mxu0
    %v1539 = vadd.f32 %v749, %v1538
    %1540 = vmatprep.mubr.f32.mxu0 %v143
    %1541 = vmatmul.mubr.f32.gmra.mrb[0].mxu0 %v142
    %v1542 = vpop.f32.mrb[0].mxu0
    %v1543 = vadd.f32 %v745, %v1542
    %v1544 = vpop.f32.mrb[0].mxu0
    %v1545 = vadd.f32 %v749, %v1544
    %1546 = vdwg.mxu0
    %1547 = vmatprep.subr.mxu0 %v345
    %1548 = vmatpush1.msra.mxu0 %v344
    %1549 = vmatprep.subr.mxu0 %v351
    %1550 = vmatpush1.msra.mxu0 %v350
    %1551 = vmatprep.subr.mxu0 %v357
    %1552 = vmatpush1.msra.mxu0 %v356
    %1553 = vmatprep.subr.mxu0 %v363
    %1554 = vmatpush1.msra.mxu0 %v362
    %1555 = vmatprep.subr.mxu0 %v369
    %1556 = vmatpush1.msra.mxu0 %v368
    %1557 = vmatprep.subr.mxu0 %v375
    %1558 = vmatpush1.msra.mxu0 %v374
    %1559 = vmatprep.subr.mxu0 %v381
    %1560 = vmatpush1.msra.mxu0 %v380
    %1561 = vmatprep.subr.mxu0 %v387
    %1562 = vmatpush1.msra.mxu0 %v386
    %1563 = vmatprep.subr.mxu0 %v393
    %1564 = vmatpush1.msra.mxu0 %v392
    %1565 = vmatprep.subr.mxu0 %v399
    %1566 = vmatpush1.msra.mxu0 %v398
    %1567 = vmatprep.subr.mxu0 %v405
    %1568 = vmatpush1.msra.mxu0 %v404
    %1569 = vmatprep.subr.mxu0 %v411
    %1570 = vmatpush1.msra.mxu0 %v410
    %1571 = vmatprep.subr.mxu0 %v417
    %1572 = vmatpush1.msra.mxu0 %v416
    %1573 = vmatprep.subr.mxu0 %v423
    %1574 = vmatpush1.msra.mxu0 %v422
    %1575 = vmatprep.subr.mxu0 %v429
    %1576 = vmatpush1.msra.mxu0 %v428
    %1577 = vmatprep.subr.mxu0 %v435
    %1578 = vmatpush1.msra.mxu0 %v434
    %1579 = vmatprep.subr.mxu0 %v441
    %1580 = vmatpush1.msra.mxu0 %v440
    %1581 = vmatprep.subr.mxu0 %v447
    %1582 = vmatpush1.msra.mxu0 %v446
    %1583 = vmatprep.subr.mxu0 %v453
    %1584 = vmatpush1.msra.mxu0 %v452
    %1585 = vmatprep.subr.mxu0 %v459
    %1586 = vmatpush1.msra.mxu0 %v458
    %1587 = vmatprep.subr.mxu0 %v465
    %1588 = vmatpush1.msra.mxu0 %v464
    %1589 = vmatprep.subr.mxu0 %v471
    %1590 = vmatpush1.msra.mxu0 %v470
    %1591 = vmatprep.subr.mxu0 %v477
    %1592 = vmatpush1.msra.mxu0 %v476
    %1593 = vmatprep.subr.mxu0 %v483
    %1594 = vmatpush1.msra.mxu0 %v482
    %1595 = vmatprep.subr.mxu0 %v489
    %1596 = vmatpush1.msra.mxu0 %v488
    %1597 = vmatprep.subr.mxu0 %v495
    %1598 = vmatpush1.msra.mxu0 %v494
    %1599 = vmatprep.subr.mxu0 %v501
    %1600 = vmatpush1.msra.mxu0 %v500
    %1601 = vmatprep.subr.mxu0 %v507
    %1602 = vmatpush1.msra.mxu0 %v506
    %1603 = vmatprep.subr.mxu0 %v513
    %1604 = vmatpush1.msra.mxu0 %v512
    %1605 = vmatprep.subr.mxu0 %v519
    %1606 = vmatpush1.msra.mxu0 %v518
    %1607 = vmatprep.subr.mxu0 %v525
    %1608 = vmatpush1.msra.mxu0 %v524
    %1609 = vmatprep.subr.mxu0 %v531
    %1610 = vmatpush1.msra.mxu0 %v530
    %1611 = vmatprep.mubr.f32.mxu0 %v103
    %1612 = vmatmul.mubr.f32.gmra.mrb[0].mxu0 %v102
    %v1613 = vpop.f32.mrb[0].mxu0
    %v1614 = vadd.f32 %v1501, %v1613
    %v1615 = vpop.f32.mrb[0].mxu0
    %v1616 = vadd.f32 %v1503, %v1615
    %1617 = vmatprep.mubr.f32.mxu0 %v109
    %1618 = vmatmul.mubr.f32.gmra.mrb[0].mxu0 %v108
    %v1619 = vpop.f32.mrb[0].mxu0
    %v1620 = vadd.f32 %v1507, %v1619
    %v1621 = vpop.f32.mrb[0].mxu0
    %v1622 = vadd.f32 %v1509, %v1621
    %1623 = vmatprep.mubr.f32.mxu0 %v115
    %1624 = vmatmul.mubr.f32.gmra.mrb[0].mxu0 %v114
    %v1625 = vpop.f32.mrb[0].mxu0
    %v1626 = vadd.f32 %v1513, %v1625
    %v1627 = vpop.f32.mrb[0].mxu0
    %v1628 = vadd.f32 %v1515, %v1627
    %1629 = vmatprep.mubr.f32.mxu0 %v121
    %1630 = vmatmul.mubr.f32.gmra.mrb[0].mxu0 %v120
    %v1631 = vpop.f32.mrb[0].mxu0
    %v1632 = vadd.f32 %v1519, %v1631
    %v1633 = vpop.f32.mrb[0].mxu0
    %v1634 = vadd.f32 %v1521, %v1633
    %1635 = vmatprep.mubr.f32.mxu0 %v127
    %1636 = vmatmul.mubr.f32.gmra.mrb[0].mxu0 %v126
    %v1637 = vpop.f32.mrb[0].mxu0
    %v1638 = vadd.f32 %v1525, %v1637
    %v1639 = vpop.f32.mrb[0].mxu0
    %v1640 = vadd.f32 %v1527, %v1639
    %1641 = vmatprep.mubr.f32.mxu0 %v133
    %1642 = vmatmul.mubr.f32.gmra.mrb[0].mxu0 %v132
    %v1643 = vpop.f32.mrb[0].mxu0
    %v1644 = vadd.f32 %v1531, %v1643
    %v1645 = vpop.f32.mrb[0].mxu0
    %v1646 = vadd.f32 %v1533, %v1645
    %1647 = vmatprep.mubr.f32.mxu0 %v139
    %1648 = vmatmul.mubr.f32.gmra.mrb[0].mxu0 %v138
    %v1649 = vpop.f32.mrb[0].mxu0
    %v1650 = vadd.f32 %v1537, %v1649
    %v1651 = vpop.f32.mrb[0].mxu0
    %v1652 = vadd.f32 %v1539, %v1651
    %1653 = vmatprep.mubr.f32.mxu0 %v145
    %1654 = vmatmul.mubr.f32.gmra.mrb[0].mxu0 %v144
    %v1655 = vpop.f32.mrb[0].mxu0
    %v1656 = vadd.f32 %v1543, %v1655
    %v1657 = vpop.f32.mrb[0].mxu0
    %v1658 = vadd.f32 %v1545, %v1657
    %1659 = vdwg.mxu0
    %1660 = vmatprep.subr.mxu0 %v537
    %1661 = vmatpush1.msra.mxu0 %v536
    %1662 = vmatprep.subr.mxu0 %v543
    %1663 = vmatpush1.msra.mxu0 %v542
    %1664 = vmatprep.subr.mxu0 %v549
    %1665 = vmatpush1.msra.mxu0 %v548
    %1666 = vmatprep.subr.mxu0 %v555
    %1667 = vmatpush1.msra.mxu0 %v554
    %1668 = vmatprep.subr.mxu0 %v561
    %1669 = vmatpush1.msra.mxu0 %v560
    %1670 = vmatprep.subr.mxu0 %v567
    %1671 = vmatpush1.msra.mxu0 %v566
    %1672 = vmatprep.subr.mxu0 %v573
    %1673 = vmatpush1.msra.mxu0 %v572
    %1674 = vmatprep.subr.mxu0 %v579
    %1675 = vmatpush1.msra.mxu0 %v578
    %1676 = vmatprep.subr.mxu0 %v585
    %1677 = vmatpush1.msra.mxu0 %v584
    %1678 = vmatprep.subr.mxu0 %v591
    %1679 = vmatpush1.msra.mxu0 %v590
    %1680 = vmatprep.subr.mxu0 %v597
    %1681 = vmatpush1.msra.mxu0 %v596
    %1682 = vmatprep.subr.mxu0 %v603
    %1683 = vmatpush1.msra.mxu0 %v602
    %1684 = vmatprep.subr.mxu0 %v609
    %1685 = vmatpush1.msra.mxu0 %v608
    %1686 = vmatprep.subr.mxu0 %v615
    %1687 = vmatpush1.msra.mxu0 %v614
    %1688 = vmatprep.subr.mxu0 %v621
    %1689 = vmatpush1.msra.mxu0 %v620
    %1690 = vmatprep.subr.mxu0 %v627
    %1691 = vmatpush1.msra.mxu0 %v626
    %1692 = vmatprep.subr.mxu0 %v633
    %1693 = vmatpush1.msra.mxu0 %v632
    %1694 = vmatprep.subr.mxu0 %v639
    %1695 = vmatpush1.msra.mxu0 %v638
    %1696 = vmatprep.subr.mxu0 %v645
    %1697 = vmatpush1.msra.mxu0 %v644
    %1698 = vmatprep.subr.mxu0 %v651
    %1699 = vmatpush1.msra.mxu0 %v650
    %1700 = vmatprep.subr.mxu0 %v657
    %1701 = vmatpush1.msra.mxu0 %v656
    %1702 = vmatprep.subr.mxu0 %v663
    %1703 = vmatpush1.msra.mxu0 %v662
    %1704 = vmatprep.subr.mxu0 %v669
    %1705 = vmatpush1.msra.mxu0 %v668
    %1706 = vmatprep.subr.mxu0 %v675
    %1707 = vmatpush1.msra.mxu0 %v674
    %1708 = vmatprep.subr.mxu0 %v681
    %1709 = vmatpush1.msra.mxu0 %v680
    %1710 = vmatprep.subr.mxu0 %v687
    %1711 = vmatpush1.msra.mxu0 %v686
    %1712 = vmatprep.subr.mxu0 %v693
    %1713 = vmatpush1.msra.mxu0 %v692
    %1714 = vmatprep.subr.mxu0 %v699
    %1715 = vmatpush1.msra.mxu0 %v698
    %1716 = vmatprep.subr.mxu0 %v705
    %1717 = vmatpush1.msra.mxu0 %v704
    %1718 = vmatprep.subr.mxu0 %v711
    %1719 = vmatpush1.msra.mxu0 %v710
    %1720 = vmatprep.subr.mxu0 %v717
    %1721 = vmatpush1.msra.mxu0 %v716
    %1722 = vmatprep.subr.mxu0 %v723
    %1723 = vmatpush1.msra.mxu0 %v722
    %1724 = vmatprep.mubr.f32.mxu0 %v105
    %1725 = vmatmul.mubr.f32.gmra.mrb[0].mxu0 %v104
    %v1726 = vpop.f32.mrb[0].mxu0
    %v1727 = vadd.f32 %v1614, %v1726
    %v1728 = vpop.f32.mrb[0].mxu0
    %v1729 = vadd.f32 %v1616, %v1728
    %1730 = vmatprep.mubr.f32.mxu0 %v111
    %1731 = vmatmul.mubr.f32.gmra.mrb[0].mxu0 %v110
    %v1732 = vpop.f32.mrb[0].mxu0
    %v1733 = vadd.f32 %v1620, %v1732
    %v1734 = vpop.f32.mrb[0].mxu0
    %v1735 = vadd.f32 %v1622, %v1734
    %1736 = vmatprep.mubr.f32.mxu0 %v117
    %1737 = vmatmul.mubr.f32.gmra.mrb[0].mxu0 %v116
    %v1738 = vpop.f32.mrb[0].mxu0
    %v1739 = vadd.f32 %v1626, %v1738
    %v1740 = vpop.f32.mrb[0].mxu0
    %v1741 = vadd.f32 %v1628, %v1740
    %1742 = vmatprep.mubr.f32.mxu0 %v123
    %1743 = vmatmul.mubr.f32.gmra.mrb[0].mxu0 %v122
    %v1744 = vpop.f32.mrb[0].mxu0
    %v1745 = vadd.f32 %v1632, %v1744
    %v1746 = vpop.f32.mrb[0].mxu0
    %v1747 = vadd.f32 %v1634, %v1746
    %1748 = vmatprep.mubr.f32.mxu0 %v129
    %1749 = vmatmul.mubr.f32.gmra.mrb[0].mxu0 %v128
    %v1750 = vpop.f32.mrb[0].mxu0
    %v1751 = vadd.f32 %v1638, %v1750
    %v1752 = vpop.f32.mrb[0].mxu0
    %v1753 = vadd.f32 %v1640, %v1752
    %1754 = vmatprep.mubr.f32.mxu0 %v135
    %1755 = vmatmul.mubr.f32.gmra.mrb[0].mxu0 %v134
    %v1756 = vpop.f32.mrb[0].mxu0
    %v1757 = vadd.f32 %v1644, %v1756
    %v1758 = vpop.f32.mrb[0].mxu0
    %v1759 = vadd.f32 %v1646, %v1758
    %1760 = vmatprep.mubr.f32.mxu0 %v141
    %1761 = vmatmul.mubr.f32.gmra.mrb[0].mxu0 %v140
    %v1762 = vpop.f32.mrb[0].mxu0
    %v1763 = vadd.f32 %v1650, %v1762
    %v1764 = vpop.f32.mrb[0].mxu0
    %v1765 = vadd.f32 %v1652, %v1764
    %1766 = vmatprep.mubr.f32.mxu0 %v147
    %1767 = vmatmul.mubr.f32.gmra.mrb[0].mxu0 %v146
    %v1768 = vpop.f32.mrb[0].mxu0
    %v1769 = vadd.f32 %v1656, %v1768
    %v1770 = vpop.f32.mrb[0].mxu0
    %v1771 = vadd.f32 %v1658, %v1770
    %1772 = vdwg.mxu0
    %1773 = vst [vmem:[#allocation2] sm:$0xff] %v1049
    %1774 = vst [vmem:[#allocation2 + $0x8] sm:$0xff] %v1051
    %1775 = vst [vmem:[#allocation2 + $0x10] sm:$0xff] %v1388
    %1776 = vst [vmem:[#allocation2 + $0x18] sm:$0xff] %v1390
    %1777 = vst [vmem:[#allocation2 + $0x20] sm:$0xff] %v1727
    %1778 = vst [vmem:[#allocation2 + $0x28] sm:$0xff] %v1729
    %1779 = vst [vmem:[#allocation2 + $0x30] sm:$0xff] %v1055
    %1780 = vst [vmem:[#allocation2 + $0x38] sm:$0xff] %v1057
    %1781 = vst [vmem:[#allocation2 + $0x40] sm:$0xff] %v1394
    %1782 = vst [vmem:[#allocation2 + $0x48] sm:$0xff] %v1396
    %1783 = vst [vmem:[#allocation2 + $0x50] sm:$0xff] %v1733
    %1784 = vst [vmem:[#allocation2 + $0x58] sm:$0xff] %v1735
    %1785 = vst [vmem:[#allocation2 + $0x60] sm:$0xff] %v1061
    %1786 = vst [vmem:[#allocation2 + $0x68] sm:$0xff] %v1063
    %1787 = vst [vmem:[#allocation2 + $0x70] sm:$0xff] %v1400
    %1788 = vst [vmem:[#allocation2 + $0x78] sm:$0xff] %v1402
    %1789 = vst [vmem:[#allocation2 + $0x80] sm:$0xff] %v1739
    %1790 = vst [vmem:[#allocation2 + $0x88] sm:$0xff] %v1741
    %1791 = vst [vmem:[#allocation2 + $0x90] sm:$0xff] %v1067
    %1792 = vst [vmem:[#allocation2 + $0x98] sm:$0xff] %v1069
    %1793 = vst [vmem:[#allocation2 + $0xa0] sm:$0xff] %v1406
    %1794 = vst [vmem:[#allocation2 + $0xa8] sm:$0xff] %v1408
    %1795 = vst [vmem:[#allocation2 + $0xb0] sm:$0xff] %v1745
    %1796 = vst [vmem:[#allocation2 + $0xb8] sm:$0xff] %v1747
    %1797 = vst [vmem:[#allocation2 + $0xc0] sm:$0xff] %v1073
    %1798 = vst [vmem:[#allocation2 + $0xc8] sm:$0xff] %v1075
    %1799 = vst [vmem:[#allocation2 + $0xd0] sm:$0xff] %v1412
    %1800 = vst [vmem:[#allocation2 + $0xd8] sm:$0xff] %v1414
    %1801 = vst [vmem:[#allocation2 + $0xe0] sm:$0xff] %v1751
    %1802 = vst [vmem:[#allocation2 + $0xe8] sm:$0xff] %v1753
    %1803 = vst [vmem:[#allocation2 + $0xf0] sm:$0xff] %v1079
    %1804 = vst [vmem:[#allocation2 + $0xf8] sm:$0xff] %v1081
    %1805 = vst [vmem:[#allocation2 + $0x100] sm:$0xff] %v1418
    %1806 = vst [vmem:[#allocation2 + $0x108] sm:$0xff] %v1420
    %1807 = vst [vmem:[#allocation2 + $0x110] sm:$0xff] %v1757
    %1808 = vst [vmem:[#allocation2 + $0x118] sm:$0xff] %v1759
    %1809 = vst [vmem:[#allocation2 + $0x120] sm:$0xff] %v1085
    %1810 = vst [vmem:[#allocation2 + $0x128] sm:$0xff] %v1087
    %1811 = vst [vmem:[#allocation2 + $0x130] sm:$0xff] %v1424
    %1812 = vst [vmem:[#allocation2 + $0x138] sm:$0xff] %v1426
    %1813 = vst [vmem:[#allocation2 + $0x140] sm:$0xff] %v1763
    %1814 = vst [vmem:[#allocation2 + $0x148] sm:$0xff] %v1765
    %1815 = vst [vmem:[#allocation2 + $0x150] sm:$0xff] %v1091
    %1816 = vst [vmem:[#allocation2 + $0x158] sm:$0xff] %v1093
    %1817 = vst [vmem:[#allocation2 + $0x160] sm:$0xff] %v1430
    %1818 = vst [vmem:[#allocation2 + $0x168] sm:$0xff] %v1432
    %1819 = vst [vmem:[#allocation2 + $0x170] sm:$0xff] %v1769
    %1820 = vst [vmem:[#allocation2 + $0x178] sm:$0xff] %v1771
    %v1821 = vld [vmem:[#allocation9] sm:$0xff]
    %v1822 = vld [vmem:[#allocation9 + $0x8] sm:$0xff]
    %v1823 = vld [vmem:[#allocation9 + $0x10] sm:$0xff]
    %v1824 = vld [vmem:[#allocation9 + $0x18] sm:$0xff]
    %v1825 = vld [vmem:[#allocation9 + $0x20] sm:$0xff]
    %v1826 = vld [vmem:[#allocation9 + $0x28] sm:$0xff]
    %v1827 = vld [vmem:[#allocation9 + $0x30] sm:$0xff]
    %v1828 = vld [vmem:[#allocation9 + $0x38] sm:$0xff]
    %v1829 = vld [vmem:[#allocation9 + $0x40] sm:$0xff]
    %v1830 = vld [vmem:[#allocation9 + $0x48] sm:$0xff]
    %v1831 = vld [vmem:[#allocation9 + $0x50] sm:$0xff]
    %v1832 = vld [vmem:[#allocation9 + $0x58] sm:$0xff]
    %v1833 = vld [vmem:[#allocation9 + $0x60] sm:$0xff]
    %v1834 = vld [vmem:[#allocation9 + $0x68] sm:$0xff]
    %v1835 = vld [vmem:[#allocation9 + $0x70] sm:$0xff]
    %v1836 = vld [vmem:[#allocation9 + $0x78] sm:$0xff]
    %v1837 = vld [vmem:[#allocation9 + $0x80] sm:$0xff]
    %v1838 = vld [vmem:[#allocation9 + $0x88] sm:$0xff]
    %v1839 = vld [vmem:[#allocation9 + $0x90] sm:$0xff]
    %v1840 = vld [vmem:[#allocation9 + $0x98] sm:$0xff]
    %v1841 = vld [vmem:[#allocation9 + $0xa0] sm:$0xff]
    %v1842 = vld [vmem:[#allocation9 + $0xa8] sm:$0xff]
    %v1843 = vld [vmem:[#allocation9 + $0xb0] sm:$0xff]
    %v1844 = vld [vmem:[#allocation9 + $0xb8] sm:$0xff]
    %v1845 = vld [vmem:[#allocation9 + $0xc0] sm:$0xff]
    %v1846 = vld [vmem:[#allocation9 + $0xc8] sm:$0xff]
    %v1847 = vld [vmem:[#allocation9 + $0xd0] sm:$0xff]
    %v1848 = vld [vmem:[#allocation9 + $0xd8] sm:$0xff]
    %v1849 = vld [vmem:[#allocation9 + $0xe0] sm:$0xff]
    %v1850 = vld [vmem:[#allocation9 + $0xe8] sm:$0xff]
    %v1851 = vld [vmem:[#allocation9 + $0xf0] sm:$0xff]
    %v1852 = vld [vmem:[#allocation9 + $0xf8] sm:$0xff]
    %v1853 = vld [vmem:[#allocation9 + $0x100] sm:$0xff]
    %v1854 = vld [vmem:[#allocation9 + $0x108] sm:$0xff]
    %v1855 = vld [vmem:[#allocation9 + $0x110] sm:$0xff]
    %v1856 = vld [vmem:[#allocation9 + $0x118] sm:$0xff]
    %v1857 = vld [vmem:[#allocation9 + $0x120] sm:$0xff]
    %v1858 = vld [vmem:[#allocation9 + $0x128] sm:$0xff]
    %v1859 = vld [vmem:[#allocation9 + $0x130] sm:$0xff]
    %v1860 = vld [vmem:[#allocation9 + $0x138] sm:$0xff]
    %v1861 = vld [vmem:[#allocation9 + $0x140] sm:$0xff]
    %v1862 = vld [vmem:[#allocation9 + $0x148] sm:$0xff]
    %v1863 = vld [vmem:[#allocation9 + $0x150] sm:$0xff]
    %v1864 = vld [vmem:[#allocation9 + $0x158] sm:$0xff]
    %v1865 = vld [vmem:[#allocation9 + $0x160] sm:$0xff]
    %v1866 = vld [vmem:[#allocation9 + $0x168] sm:$0xff]
    %v1867 = vld [vmem:[#allocation9 + $0x170] sm:$0xff]
    %v1868 = vld [vmem:[#allocation9 + $0x178] sm:$0xff]
    %v1869 = vld [vmem:[#allocation9 + $0x180] sm:$0xff]
    %v1870 = vld [vmem:[#allocation9 + $0x188] sm:$0xff]
    %v1871 = vld [vmem:[#allocation9 + $0x190] sm:$0xff]
    %v1872 = vld [vmem:[#allocation9 + $0x198] sm:$0xff]
    %v1873 = vld [vmem:[#allocation9 + $0x1a0] sm:$0xff]
    %v1874 = vld [vmem:[#allocation9 + $0x1a8] sm:$0xff]
    %v1875 = vld [vmem:[#allocation9 + $0x1b0] sm:$0xff]
    %v1876 = vld [vmem:[#allocation9 + $0x1b8] sm:$0xff]
    %v1877 = vld [vmem:[#allocation9 + $0x1c0] sm:$0xff]
    %v1878 = vld [vmem:[#allocation9 + $0x1c8] sm:$0xff]
    %v1879 = vld [vmem:[#allocation9 + $0x1d0] sm:$0xff]
    %v1880 = vld [vmem:[#allocation9 + $0x1d8] sm:$0xff]
    %v1881 = vld [vmem:[#allocation9 + $0x1e0] sm:$0xff]
    %v1882 = vld [vmem:[#allocation9 + $0x1e8] sm:$0xff]
    %v1883 = vld [vmem:[#allocation9 + $0x1f0] sm:$0xff]
    %v1884 = vld [vmem:[#allocation9 + $0x1f8] sm:$0xff]
    %v1885 = vld [vmem:[#allocation9 + $0x200] sm:$0xff]
    %v1886 = vld [vmem:[#allocation9 + $0x208] sm:$0xff]
    %v1887 = vld [vmem:[#allocation9 + $0x210] sm:$0xff]
    %v1888 = vld [vmem:[#allocation9 + $0x218] sm:$0xff]
    %v1889 = vld [vmem:[#allocation9 + $0x220] sm:$0xff]
    %v1890 = vld [vmem:[#allocation9 + $0x228] sm:$0xff]
    %v1891 = vld [vmem:[#allocation9 + $0x230] sm:$0xff]
    %v1892 = vld [vmem:[#allocation9 + $0x238] sm:$0xff]
    %v1893 = vld [vmem:[#allocation9 + $0x240] sm:$0xff]
    %v1894 = vld [vmem:[#allocation9 + $0x248] sm:$0xff]
    %v1895 = vld [vmem:[#allocation9 + $0x250] sm:$0xff]
    %v1896 = vld [vmem:[#allocation9 + $0x258] sm:$0xff]
    %v1897 = vld [vmem:[#allocation9 + $0x260] sm:$0xff]
    %v1898 = vld [vmem:[#allocation9 + $0x268] sm:$0xff]
    %v1899 = vld [vmem:[#allocation9 + $0x270] sm:$0xff]
    %v1900 = vld [vmem:[#allocation9 + $0x278] sm:$0xff]
    %v1901 = vld [vmem:[#allocation9 + $0x280] sm:$0xff]
    %v1902 = vld [vmem:[#allocation9 + $0x288] sm:$0xff]
    %v1903 = vld [vmem:[#allocation9 + $0x290] sm:$0xff]
    %v1904 = vld [vmem:[#allocation9 + $0x298] sm:$0xff]
    %v1905 = vld [vmem:[#allocation9 + $0x2a0] sm:$0xff]
    %v1906 = vld [vmem:[#allocation9 + $0x2a8] sm:$0xff]
    %v1907 = vld [vmem:[#allocation9 + $0x2b0] sm:$0xff]
    %v1908 = vld [vmem:[#allocation9 + $0x2b8] sm:$0xff]
    %v1909 = vld [vmem:[#allocation9 + $0x2c0] sm:$0xff]
    %v1910 = vld [vmem:[#allocation9 + $0x2c8] sm:$0xff]
    %v1911 = vld [vmem:[#allocation9 + $0x2d0] sm:$0xff]
    %v1912 = vld [vmem:[#allocation9 + $0x2d8] sm:$0xff]
    %v1913 = vld [vmem:[#allocation9 + $0x2e0] sm:$0xff]
    %v1914 = vld [vmem:[#allocation9 + $0x2e8] sm:$0xff]
    %v1915 = vld [vmem:[#allocation9 + $0x2f0] sm:$0xff]
    %v1916 = vld [vmem:[#allocation9 + $0x2f8] sm:$0xff]
    %v1917 = vld [vmem:[#allocation9 + $0x300] sm:$0xff]
    %v1918 = vld [vmem:[#allocation9 + $0x308] sm:$0xff]
    %v1919 = vld [vmem:[#allocation9 + $0x310] sm:$0xff]
    %v1920 = vld [vmem:[#allocation9 + $0x318] sm:$0xff]
    %v1921 = vld [vmem:[#allocation9 + $0x320] sm:$0xff]
    %v1922 = vld [vmem:[#allocation9 + $0x328] sm:$0xff]
    %v1923 = vld [vmem:[#allocation9 + $0x330] sm:$0xff]
    %v1924 = vld [vmem:[#allocation9 + $0x338] sm:$0xff]
    %v1925 = vld [vmem:[#allocation9 + $0x340] sm:$0xff]
    %v1926 = vld [vmem:[#allocation9 + $0x348] sm:$0xff]
    %v1927 = vld [vmem:[#allocation9 + $0x350] sm:$0xff]
    %v1928 = vld [vmem:[#allocation9 + $0x358] sm:$0xff]
    %v1929 = vld [vmem:[#allocation9 + $0x360] sm:$0xff]
    %v1930 = vld [vmem:[#allocation9 + $0x368] sm:$0xff]
    %v1931 = vld [vmem:[#allocation9 + $0x370] sm:$0xff]
    %v1932 = vld [vmem:[#allocation9 + $0x378] sm:$0xff]
    %v1933 = vld [vmem:[#allocation9 + $0x380] sm:$0xff]
    %v1934 = vld [vmem:[#allocation9 + $0x388] sm:$0xff]
    %v1935 = vld [vmem:[#allocation9 + $0x390] sm:$0xff]
    %v1936 = vld [vmem:[#allocation9 + $0x398] sm:$0xff]
    %v1937 = vld [vmem:[#allocation9 + $0x3a0] sm:$0xff]
    %v1938 = vld [vmem:[#allocation9 + $0x3a8] sm:$0xff]
    %v1939 = vld [vmem:[#allocation9 + $0x3b0] sm:$0xff]
    %v1940 = vld [vmem:[#allocation9 + $0x3b8] sm:$0xff]
    %v1941 = vld [vmem:[#allocation9 + $0x3c0] sm:$0xff]
    %v1942 = vld [vmem:[#allocation9 + $0x3c8] sm:$0xff]
    %v1943 = vld [vmem:[#allocation9 + $0x3d0] sm:$0xff]
    %v1944 = vld [vmem:[#allocation9 + $0x3d8] sm:$0xff]
    %v1945 = vld [vmem:[#allocation9 + $0x3e0] sm:$0xff]
    %v1946 = vld [vmem:[#allocation9 + $0x3e8] sm:$0xff]
    %v1947 = vld [vmem:[#allocation9 + $0x3f0] sm:$0xff]
    %v1948 = vld [vmem:[#allocation9 + $0x3f8] sm:$0xff]
    %v1949 = vld [vmem:[#allocation9 + $0x400] sm:$0xff]
    %v1950 = vld [vmem:[#allocation9 + $0x408] sm:$0xff]
    %v1951 = vld [vmem:[#allocation9 + $0x410] sm:$0xff]
    %v1952 = vld [vmem:[#allocation9 + $0x418] sm:$0xff]
    %v1953 = vld [vmem:[#allocation9 + $0x420] sm:$0xff]
    %v1954 = vld [vmem:[#allocation9 + $0x428] sm:$0xff]
    %v1955 = vld [vmem:[#allocation9 + $0x430] sm:$0xff]
    %v1956 = vld [vmem:[#allocation9 + $0x438] sm:$0xff]
    %v1957 = vld [vmem:[#allocation9 + $0x440] sm:$0xff]
    %v1958 = vld [vmem:[#allocation9 + $0x448] sm:$0xff]
    %v1959 = vld [vmem:[#allocation9 + $0x450] sm:$0xff]
    %v1960 = vld [vmem:[#allocation9 + $0x458] sm:$0xff]
    %v1961 = vld [vmem:[#allocation9 + $0x460] sm:$0xff]
    %v1962 = vld [vmem:[#allocation9 + $0x468] sm:$0xff]
    %v1963 = vld [vmem:[#allocation9 + $0x470] sm:$0xff]
    %v1964 = vld [vmem:[#allocation9 + $0x478] sm:$0xff]
    %v1965 = vld [vmem:[#allocation9 + $0x480] sm:$0xff]
    %v1966 = vld [vmem:[#allocation9 + $0x488] sm:$0xff]
    %v1967 = vld [vmem:[#allocation9 + $0x490] sm:$0xff]
    %v1968 = vld [vmem:[#allocation9 + $0x498] sm:$0xff]
    %v1969 = vld [vmem:[#allocation9 + $0x4a0] sm:$0xff]
    %v1970 = vld [vmem:[#allocation9 + $0x4a8] sm:$0xff]
    %v1971 = vld [vmem:[#allocation9 + $0x4b0] sm:$0xff]
    %v1972 = vld [vmem:[#allocation9 + $0x4b8] sm:$0xff]
    %v1973 = vld [vmem:[#allocation9 + $0x4c0] sm:$0xff]
    %v1974 = vld [vmem:[#allocation9 + $0x4c8] sm:$0xff]
    %v1975 = vld [vmem:[#allocation9 + $0x4d0] sm:$0xff]
    %v1976 = vld [vmem:[#allocation9 + $0x4d8] sm:$0xff]
    %v1977 = vld [vmem:[#allocation9 + $0x4e0] sm:$0xff]
    %v1978 = vld [vmem:[#allocation9 + $0x4e8] sm:$0xff]
    %v1979 = vld [vmem:[#allocation9 + $0x4f0] sm:$0xff]
    %v1980 = vld [vmem:[#allocation9 + $0x4f8] sm:$0xff]
    %v1981 = vld [vmem:[#allocation9 + $0x500] sm:$0xff]
    %v1982 = vld [vmem:[#allocation9 + $0x508] sm:$0xff]
    %v1983 = vld [vmem:[#allocation9 + $0x510] sm:$0xff]
    %v1984 = vld [vmem:[#allocation9 + $0x518] sm:$0xff]
    %v1985 = vld [vmem:[#allocation9 + $0x520] sm:$0xff]
    %v1986 = vld [vmem:[#allocation9 + $0x528] sm:$0xff]
    %v1987 = vld [vmem:[#allocation9 + $0x530] sm:$0xff]
    %v1988 = vld [vmem:[#allocation9 + $0x538] sm:$0xff]
    %v1989 = vld [vmem:[#allocation9 + $0x540] sm:$0xff]
    %v1990 = vld [vmem:[#allocation9 + $0x548] sm:$0xff]
    %v1991 = vld [vmem:[#allocation9 + $0x550] sm:$0xff]
    %v1992 = vld [vmem:[#allocation9 + $0x558] sm:$0xff]
    %v1993 = vld [vmem:[#allocation9 + $0x560] sm:$0xff]
    %v1994 = vld [vmem:[#allocation9 + $0x568] sm:$0xff]
    %v1995 = vld [vmem:[#allocation9 + $0x570] sm:$0xff]
    %v1996 = vld [vmem:[#allocation9 + $0x578] sm:$0xff]
    %v1997 = vld [vmem:[#allocation9 + $0x580] sm:$0xff]
    %v1998 = vld [vmem:[#allocation9 + $0x588] sm:$0xff]
    %v1999 = vld [vmem:[#allocation9 + $0x590] sm:$0xff]
    %v2000 = vld [vmem:[#allocation9 + $0x598] sm:$0xff]
    %v2001 = vld [vmem:[#allocation9 + $0x5a0] sm:$0xff]
    %v2002 = vld [vmem:[#allocation9 + $0x5a8] sm:$0xff]
    %v2003 = vld [vmem:[#allocation9 + $0x5b0] sm:$0xff]
    %v2004 = vld [vmem:[#allocation9 + $0x5b8] sm:$0xff]
    %v2005 = vld [vmem:[#allocation9 + $0x5c0] sm:$0xff]
    %v2006 = vld [vmem:[#allocation9 + $0x5c8] sm:$0xff]
    %v2007 = vld [vmem:[#allocation9 + $0x5d0] sm:$0xff]
    %v2008 = vld [vmem:[#allocation9 + $0x5d8] sm:$0xff]
    %v2009 = vld [vmem:[#allocation9 + $0x5e0] sm:$0xff]
    %v2010 = vld [vmem:[#allocation9 + $0x5e8] sm:$0xff]
    %v2011 = vld [vmem:[#allocation9 + $0x5f0] sm:$0xff]
    %v2012 = vld [vmem:[#allocation9 + $0x5f8] sm:$0xff]
    %v2013 = vld [vmem:[#allocation11] sm:$0x3f]
    %v2014 = vld [vmem:[#allocation12] sm:$0xff]
    %v2015 = vld [vmem:[#allocation12 + $0x8] sm:$0xff]
    %s2016 = smul.u32 0, 6
    %s2017 = smul.addr %s2016, 8
    %s2018 = scalar_lea.vmem [#allocation2], %s2017
    %v2019 = vld [vmem:[%s2018] sm:$0xff]
    %v2020 = vld [vmem:[%s2018 + $0x8] sm:$0xff]
    %v2021 = vld [vmem:[%s2018 + $0x10] sm:$0xff]
    %v2022 = vld [vmem:[%s2018 + $0x18] sm:$0xff]
    %v2023 = vld [vmem:[%s2018 + $0x20] sm:$0xff]
    %v2024 = vld [vmem:[%s2018 + $0x28] sm:$0xff]
    %v2026 = vlaneseq
    %v2027 = vshrl.u32 %v2026, 7
    %v2028 = vsub.s32 0, %v2027
    %v2029 = vrot.slane %v2013, %v2028
    %v2030 = vlaneseq
    %v2031 = vshrl.u32 %v2030, 7
    %v2032 = vsub.s32 1, %v2031
    %v2033 = vrot.slane %v2013, %v2032
    %v2034 = vlaneseq
    %v2035 = vshrl.u32 %v2034, 7
    %v2036 = vsub.s32 2, %v2035
    %v2037 = vrot.slane %v2013, %v2036
    %v2038 = vlaneseq
    %v2039 = vshrl.u32 %v2038, 7
    %v2040 = vsub.s32 3, %v2039
    %v2041 = vrot.slane %v2013, %v2040
    %v2042 = vlaneseq
    %v2043 = vshrl.u32 %v2042, 7
    %v2044 = vsub.s32 4, %v2043
    %v2045 = vrot.slane %v2013, %v2044
    %v2046 = vlaneseq
    %v2047 = vshrl.u32 %v2046, 7
    %v2048 = vsub.s32 5, %v2047
    %v2049 = vrot.slane %v2013, %v2048
    %2056 = vmatprep.subr.mxu0 %v1822
    %2057 = vmatpush1.msra.mxu0 %v1821
    %2058 = vmatprep.subr.mxu0 %v1828
    %2059 = vmatpush1.msra.mxu0 %v1827
    %2060 = vmatprep.subr.mxu0 %v1834
    %2061 = vmatpush1.msra.mxu0 %v1833
    %2062 = vmatprep.subr.mxu0 %v1840
    %2063 = vmatpush1.msra.mxu0 %v1839
    %2064 = vmatprep.subr.mxu0 %v1846
    %2065 = vmatpush1.msra.mxu0 %v1845
    %2066 = vmatprep.subr.mxu0 %v1852
    %2067 = vmatpush1.msra.mxu0 %v1851
    %2068 = vmatprep.subr.mxu0 %v1858
    %2069 = vmatpush1.msra.mxu0 %v1857
    %2070 = vmatprep.subr.mxu0 %v1864
    %2071 = vmatpush1.msra.mxu0 %v1863
    %2072 = vmatprep.subr.mxu0 %v1870
    %2073 = vmatpush1.msra.mxu0 %v1869
    %2074 = vmatprep.subr.mxu0 %v1876
    %2075 = vmatpush1.msra.mxu0 %v1875
    %2076 = vmatprep.subr.mxu0 %v1882
    %2077 = vmatpush1.msra.mxu0 %v1881
    %2078 = vmatprep.subr.mxu0 %v1888
    %2079 = vmatpush1.msra.mxu0 %v1887
    %2080 = vmatprep.subr.mxu0 %v1894
    %2081 = vmatpush1.msra.mxu0 %v1893
    %2082 = vmatprep.subr.mxu0 %v1900
    %2083 = vmatpush1.msra.mxu0 %v1899
    %2084 = vmatprep.subr.mxu0 %v1906
    %2085 = vmatpush1.msra.mxu0 %v1905
    %2086 = vmatprep.subr.mxu0 %v1912
    %2087 = vmatpush1.msra.mxu0 %v1911
    %2088 = vmatprep.subr.mxu0 %v1918
    %2089 = vmatpush1.msra.mxu0 %v1917
    %2090 = vmatprep.subr.mxu0 %v1924
    %2091 = vmatpush1.msra.mxu0 %v1923
    %2092 = vmatprep.subr.mxu0 %v1930
    %2093 = vmatpush1.msra.mxu0 %v1929
    %2094 = vmatprep.subr.mxu0 %v1936
    %2095 = vmatpush1.msra.mxu0 %v1935
    %2096 = vmatprep.subr.mxu0 %v1942
    %2097 = vmatpush1.msra.mxu0 %v1941
    %2098 = vmatprep.subr.mxu0 %v1948
    %2099 = vmatpush1.msra.mxu0 %v1947
    %2100 = vmatprep.subr.mxu0 %v1954
    %2101 = vmatpush1.msra.mxu0 %v1953
    %2102 = vmatprep.subr.mxu0 %v1960
    %2103 = vmatpush1.msra.mxu0 %v1959
    %2104 = vmatprep.subr.mxu0 %v1966
    %2105 = vmatpush1.msra.mxu0 %v1965
    %2106 = vmatprep.subr.mxu0 %v1972
    %2107 = vmatpush1.msra.mxu0 %v1971
    %2108 = vmatprep.subr.mxu0 %v1978
    %2109 = vmatpush1.msra.mxu0 %v1977
    %2110 = vmatprep.subr.mxu0 %v1984
    %2111 = vmatpush1.msra.mxu0 %v1983
    %2112 = vmatprep.subr.mxu0 %v1990
    %2113 = vmatpush1.msra.mxu0 %v1989
    %2114 = vmatprep.subr.mxu0 %v1996
    %2115 = vmatpush1.msra.mxu0 %v1995
    %2116 = vmatprep.subr.mxu0 %v2002
    %2117 = vmatpush1.msra.mxu0 %v2001
    %2118 = vmatprep.subr.mxu0 %v2008
    %2119 = vmatpush1.msra.mxu0 %v2007
    %2120 = vmatprep.mubr.f32.mxu0 %v2015
    %2121 = vmatmul.mubr.f32.gmra.mrb[0].mxu0 %v2014
    %v2122 = vpop.f32.mrb[0].mxu0
    %v2123 = vadd.f32 %v2029, %v2122
    %v2124 = vpop.f32.mrb[0].mxu0
    %v2125 = vadd.f32 %v2033, %v2124
    %2126 = vdwg.mxu0
    %2127 = vmatprep.subr.mxu0 %v1824
    %2128 = vmatpush1.msra.mxu0 %v1823
    %2129 = vmatprep.subr.mxu0 %v1830
    %2130 = vmatpush1.msra.mxu0 %v1829
    %2131 = vmatprep.subr.mxu0 %v1836
    %2132 = vmatpush1.msra.mxu0 %v1835
    %2133 = vmatprep.subr.mxu0 %v1842
    %2134 = vmatpush1.msra.mxu0 %v1841
    %2135 = vmatprep.subr.mxu0 %v1848
    %2136 = vmatpush1.msra.mxu0 %v1847
    %2137 = vmatprep.subr.mxu0 %v1854
    %2138 = vmatpush1.msra.mxu0 %v1853
    %2139 = vmatprep.subr.mxu0 %v1860
    %2140 = vmatpush1.msra.mxu0 %v1859
    %2141 = vmatprep.subr.mxu0 %v1866
    %2142 = vmatpush1.msra.mxu0 %v1865
    %2143 = vmatprep.subr.mxu0 %v1872
    %2144 = vmatpush1.msra.mxu0 %v1871
    %2145 = vmatprep.subr.mxu0 %v1878
    %2146 = vmatpush1.msra.mxu0 %v1877
    %2147 = vmatprep.subr.mxu0 %v1884
    %2148 = vmatpush1.msra.mxu0 %v1883
    %2149 = vmatprep.subr.mxu0 %v1890
    %2150 = vmatpush1.msra.mxu0 %v1889
    %2151 = vmatprep.subr.mxu0 %v1896
    %2152 = vmatpush1.msra.mxu0 %v1895
    %2153 = vmatprep.subr.mxu0 %v1902
    %2154 = vmatpush1.msra.mxu0 %v1901
    %2155 = vmatprep.subr.mxu0 %v1908
    %2156 = vmatpush1.msra.mxu0 %v1907
    %2157 = vmatprep.subr.mxu0 %v1914
    %2158 = vmatpush1.msra.mxu0 %v1913
    %2159 = vmatprep.subr.mxu0 %v1920
    %2160 = vmatpush1.msra.mxu0 %v1919
    %2161 = vmatprep.subr.mxu0 %v1926
    %2162 = vmatpush1.msra.mxu0 %v1925
    %2163 = vmatprep.subr.mxu0 %v1932
    %2164 = vmatpush1.msra.mxu0 %v1931
    %2165 = vmatprep.subr.mxu0 %v1938
    %2166 = vmatpush1.msra.mxu0 %v1937
    %2167 = vmatprep.subr.mxu0 %v1944
    %2168 = vmatpush1.msra.mxu0 %v1943
    %2169 = vmatprep.subr.mxu0 %v1950
    %2170 = vmatpush1.msra.mxu0 %v1949
    %2171 = vmatprep.subr.mxu0 %v1956
    %2172 = vmatpush1.msra.mxu0 %v1955
    %2173 = vmatprep.subr.mxu0 %v1962
    %2174 = vmatpush1.msra.mxu0 %v1961
    %2175 = vmatprep.subr.mxu0 %v1968
    %2176 = vmatpush1.msra.mxu0 %v1967
    %2177 = vmatprep.subr.mxu0 %v1974
    %2178 = vmatpush1.msra.mxu0 %v1973
    %2179 = vmatprep.subr.mxu0 %v1980
    %2180 = vmatpush1.msra.mxu0 %v1979
    %2181 = vmatprep.subr.mxu0 %v1986
    %2182 = vmatpush1.msra.mxu0 %v1985
    %2183 = vmatprep.subr.mxu0 %v1992
    %2184 = vmatpush1.msra.mxu0 %v1991
    %2185 = vmatprep.subr.mxu0 %v1998
    %2186 = vmatpush1.msra.mxu0 %v1997
    %2187 = vmatprep.subr.mxu0 %v2004
    %2188 = vmatpush1.msra.mxu0 %v2003
    %2189 = vmatprep.subr.mxu0 %v2010
    %2190 = vmatpush1.msra.mxu0 %v2009
    %2191 = vmatprep.mubr.f32.mxu0 %v2015
    %2192 = vmatmul.mubr.f32.gmra.mrb[0].mxu0 %v2014
    %v2193 = vpop.f32.mrb[0].mxu0
    %v2194 = vadd.f32 %v2037, %v2193
    %v2195 = vpop.f32.mrb[0].mxu0
    %v2196 = vadd.f32 %v2041, %v2195
    %2197 = vdwg.mxu0
    %2198 = vmatprep.subr.mxu0 %v1826
    %2199 = vmatpush1.msra.mxu0 %v1825
    %2200 = vmatprep.subr.mxu0 %v1832
    %2201 = vmatpush1.msra.mxu0 %v1831
    %2202 = vmatprep.subr.mxu0 %v1838
    %2203 = vmatpush1.msra.mxu0 %v1837
    %2204 = vmatprep.subr.mxu0 %v1844
    %2205 = vmatpush1.msra.mxu0 %v1843
    %2206 = vmatprep.subr.mxu0 %v1850
    %2207 = vmatpush1.msra.mxu0 %v1849
    %2208 = vmatprep.subr.mxu0 %v1856
    %2209 = vmatpush1.msra.mxu0 %v1855
    %2210 = vmatprep.subr.mxu0 %v1862
    %2211 = vmatpush1.msra.mxu0 %v1861
    %2212 = vmatprep.subr.mxu0 %v1868
    %2213 = vmatpush1.msra.mxu0 %v1867
    %2214 = vmatprep.subr.mxu0 %v1874
    %2215 = vmatpush1.msra.mxu0 %v1873
    %2216 = vmatprep.subr.mxu0 %v1880
    %2217 = vmatpush1.msra.mxu0 %v1879
    %2218 = vmatprep.subr.mxu0 %v1886
    %2219 = vmatpush1.msra.mxu0 %v1885
    %2220 = vmatprep.subr.mxu0 %v1892
    %2221 = vmatpush1.msra.mxu0 %v1891
    %2222 = vmatprep.subr.mxu0 %v1898
    %2223 = vmatpush1.msra.mxu0 %v1897
    %2224 = vmatprep.subr.mxu0 %v1904
    %2225 = vmatpush1.msra.mxu0 %v1903
    %2226 = vmatprep.subr.mxu0 %v1910
    %2227 = vmatpush1.msra.mxu0 %v1909
    %2228 = vmatprep.subr.mxu0 %v1916
    %2229 = vmatpush1.msra.mxu0 %v1915
    %2230 = vmatprep.subr.mxu0 %v1922
    %2231 = vmatpush1.msra.mxu0 %v1921
    %2232 = vmatprep.subr.mxu0 %v1928
    %2233 = vmatpush1.msra.mxu0 %v1927
    %2234 = vmatprep.subr.mxu0 %v1934
    %2235 = vmatpush1.msra.mxu0 %v1933
    %2236 = vmatprep.subr.mxu0 %v1940
    %2237 = vmatpush1.msra.mxu0 %v1939
    %2238 = vmatprep.subr.mxu0 %v1946
    %2239 = vmatpush1.msra.mxu0 %v1945
    %2240 = vmatprep.subr.mxu0 %v1952
    %2241 = vmatpush1.msra.mxu0 %v1951
    %2242 = vmatprep.subr.mxu0 %v1958
    %2243 = vmatpush1.msra.mxu0 %v1957
    %2244 = vmatprep.subr.mxu0 %v1964
    %2245 = vmatpush1.msra.mxu0 %v1963
    %2246 = vmatprep.subr.mxu0 %v1970
    %2247 = vmatpush1.msra.mxu0 %v1969
    %2248 = vmatprep.subr.mxu0 %v1976
    %2249 = vmatpush1.msra.mxu0 %v1975
    %2250 = vmatprep.subr.mxu0 %v1982
    %2251 = vmatpush1.msra.mxu0 %v1981
    %2252 = vmatprep.subr.mxu0 %v1988
    %2253 = vmatpush1.msra.mxu0 %v1987
    %2254 = vmatprep.subr.mxu0 %v1994
    %2255 = vmatpush1.msra.mxu0 %v1993
    %2256 = vmatprep.subr.mxu0 %v2000
    %2257 = vmatpush1.msra.mxu0 %v1999
    %2258 = vmatprep.subr.mxu0 %v2006
    %2259 = vmatpush1.msra.mxu0 %v2005
    %2260 = vmatprep.subr.mxu0 %v2012
    %2261 = vmatpush1.msra.mxu0 %v2011
    %2262 = vmatprep.mubr.f32.mxu0 %v2015
    %2263 = vmatmul.mubr.f32.gmra.mrb[0].mxu0 %v2014
    %v2264 = vpop.f32.mrb[0].mxu0
    %v2265 = vadd.f32 %v2045, %v2264
    %v2266 = vpop.f32.mrb[0].mxu0
    %v2267 = vadd.f32 %v2049, %v2266
    %2268 = vdwg.mxu0
    %v2269 = vadd.f32 %v2019, %v2123
    %v2270 = vadd.f32 %v2020, %v2125
    %v2271 = vxor.u32 %v2269, 2147483648
    %v2272 = vxor.u32 %v2270, 2147483648
    %v2273 = vmul.f32 %v2271, 1.442695
    %v2274 = vpow.pop %v2273
    %v2275 = vmul.f32 %v2272, 1.442695
    %v2276 = vpow.pop %v2275
    %v2277 = vadd.f32 %v2274, 1.0
    %v2278 = vadd.f32 %v2276, 1.0
    %v2279 = vrcp.pop %v2277
    %v2280 = vmul.f32 1.0, %v2279
    %v2281 = vrcp.pop %v2278
    %v2282 = vmul.f32 1.0, %v2281
    %v2283 = vadd.f32 %v2021, %v2194
    %v2284 = vadd.f32 %v2022, %v2196
    %v2285 = vxor.u32 %v2283, 2147483648
    %v2286 = vxor.u32 %v2284, 2147483648
    %v2287 = vmul.f32 %v2285, 1.442695
    %v2288 = vpow.pop %v2287
    %v2289 = vmul.f32 %v2286, 1.442695
    %v2290 = vpow.pop %v2289
    %v2291 = vadd.f32 %v2288, 1.0
    %v2292 = vadd.f32 %v2290, 1.0
    %v2293 = vrcp.pop %v2291
    %v2294 = vmul.f32 1.0, %v2293
    %v2295 = vrcp.pop %v2292
    %v2296 = vmul.f32 1.0, %v2295
    %v2297 = vmul.f32 %v2280, %v2265
    %v2298 = vmul.f32 %v2282, %v2267
    %v2299 = vadd.f32 %v2023, %v2297
    %v2300 = vadd.f32 %v2024, %v2298
    %v2301 = vtanh.pop %v2299
    %v2302 = vtanh.pop %v2300
    %v2303 = vsub.f32 1.0, %v2294
    %v2304 = vsub.f32 1.0, %v2296
    %v2305 = vmul.f32 %v2303, %v2301
    %v2306 = vmul.f32 %v2304, %v2302
    %v2307 = vmul.f32 %v2294, %v2014
    %v2308 = vmul.f32 %v2296, %v2015
    %v2309 = vadd.f32 %v2305, %v2307
    %v2310 = vadd.f32 %v2306, %v2308
    %s2311 = smul.u32 1, 6
    %s2312 = smul.addr %s2311, 8
    %s2313 = scalar_lea.vmem [#allocation2], %s2312
    %v2314 = vld [vmem:[%s2313] sm:$0xff]
    %v2315 = vld [vmem:[%s2313 + $0x8] sm:$0xff]
    %v2316 = vld [vmem:[%s2313 + $0x10] sm:$0xff]
    %v2317 = vld [vmem:[%s2313 + $0x18] sm:$0xff]
    %v2318 = vld [vmem:[%s2313 + $0x20] sm:$0xff]
    %v2319 = vld [vmem:[%s2313 + $0x28] sm:$0xff]
    %2320 = vmatprep.subr.mxu0 %v1822
    %2321 = vmatpush1.msra.mxu0 %v1821
    %2322 = vmatprep.subr.mxu0 %v1828
    %2323 = vmatpush1.msra.mxu0 %v1827
    %2324 = vmatprep.subr.mxu0 %v1834
    %2325 = vmatpush1.msra.mxu0 %v1833
    %2326 = vmatprep.subr.mxu0 %v1840
    %2327 = vmatpush1.msra.mxu0 %v1839
    %2328 = vmatprep.subr.mxu0 %v1846
    %2329 = vmatpush1.msra.mxu0 %v1845
    %2330 = vmatprep.subr.mxu0 %v1852
    %2331 = vmatpush1.msra.mxu0 %v1851
    %2332 = vmatprep.subr.mxu0 %v1858
    %2333 = vmatpush1.msra.mxu0 %v1857
    %2334 = vmatprep.subr.mxu0 %v1864
    %2335 = vmatpush1.msra.mxu0 %v1863
    %2336 = vmatprep.subr.mxu0 %v1870
    %2337 = vmatpush1.msra.mxu0 %v1869
    %2338 = vmatprep.subr.mxu0 %v1876
    %2339 = vmatpush1.msra.mxu0 %v1875
    %2340 = vmatprep.subr.mxu0 %v1882
    %2341 = vmatpush1.msra.mxu0 %v1881
    %2342 = vmatprep.subr.mxu0 %v1888
    %2343 = vmatpush1.msra.mxu0 %v1887
    %2344 = vmatprep.subr.mxu0 %v1894
    %2345 = vmatpush1.msra.mxu0 %v1893
    %2346 = vmatprep.subr.mxu0 %v1900
    %2347 = vmatpush1.msra.mxu0 %v1899
    %2348 = vmatprep.subr.mxu0 %v1906
    %2349 = vmatpush1.msra.mxu0 %v1905
    %2350 = vmatprep.subr.mxu0 %v1912
    %2351 = vmatpush1.msra.mxu0 %v1911
    %2352 = vmatprep.subr.mxu0 %v1918
    %2353 = vmatpush1.msra.mxu0 %v1917
    %2354 = vmatprep.subr.mxu0 %v1924
    %2355 = vmatpush1.msra.mxu0 %v1923
    %2356 = vmatprep.subr.mxu0 %v1930
    %2357 = vmatpush1.msra.mxu0 %v1929
    %2358 = vmatprep.subr.mxu0 %v1936
    %2359 = vmatpush1.msra.mxu0 %v1935
    %2360 = vmatprep.subr.mxu0 %v1942
    %2361 = vmatpush1.msra.mxu0 %v1941
    %2362 = vmatprep.subr.mxu0 %v1948
    %2363 = vmatpush1.msra.mxu0 %v1947
    %2364 = vmatprep.subr.mxu0 %v1954
    %2365 = vmatpush1.msra.mxu0 %v1953
    %2366 = vmatprep.subr.mxu0 %v1960
    %2367 = vmatpush1.msra.mxu0 %v1959
    %2368 = vmatprep.subr.mxu0 %v1966
    %2369 = vmatpush1.msra.mxu0 %v1965
    %2370 = vmatprep.subr.mxu0 %v1972
    %2371 = vmatpush1.msra.mxu0 %v1971
    %2372 = vmatprep.subr.mxu0 %v1978
    %2373 = vmatpush1.msra.mxu0 %v1977
    %2374 = vmatprep.subr.mxu0 %v1984
    %2375 = vmatpush1.msra.mxu0 %v1983
    %2376 = vmatprep.subr.mxu0 %v1990
    %2377 = vmatpush1.msra.mxu0 %v1989
    %2378 = vmatprep.subr.mxu0 %v1996
    %2379 = vmatpush1.msra.mxu0 %v1995
    %2380 = vmatprep.subr.mxu0 %v2002
    %2381 = vmatpush1.msra.mxu0 %v2001
    %2382 = vmatprep.subr.mxu0 %v2008
    %2383 = vmatpush1.msra.mxu0 %v2007
    %2384 = vmatprep.mubr.f32.mxu0 %v2310
    %2385 = vmatmul.mubr.f32.gmra.mrb[0].mxu0 %v2309
    %v2386 = vpop.f32.mrb[0].mxu0
    %v2387 = vadd.f32 %v2029, %v2386
    %v2388 = vpop.f32.mrb[0].mxu0
    %v2389 = vadd.f32 %v2033, %v2388
    %2390 = vdwg.mxu0
    %2391 = vmatprep.subr.mxu0 %v1824
    %2392 = vmatpush1.msra.mxu0 %v1823
    %2393 = vmatprep.subr.mxu0 %v1830
    %2394 = vmatpush1.msra.mxu0 %v1829
    %2395 = vmatprep.subr.mxu0 %v1836
    %2396 = vmatpush1.msra.mxu0 %v1835
    %2397 = vmatprep.subr.mxu0 %v1842
    %2398 = vmatpush1.msra.mxu0 %v1841
    %2399 = vmatprep.subr.mxu0 %v1848
    %2400 = vmatpush1.msra.mxu0 %v1847
    %2401 = vmatprep.subr.mxu0 %v1854
    %2402 = vmatpush1.msra.mxu0 %v1853
    %2403 = vmatprep.subr.mxu0 %v1860
    %2404 = vmatpush1.msra.mxu0 %v1859
    %2405 = vmatprep.subr.mxu0 %v1866
    %2406 = vmatpush1.msra.mxu0 %v1865
    %2407 = vmatprep.subr.mxu0 %v1872
    %2408 = vmatpush1.msra.mxu0 %v1871
    %2409 = vmatprep.subr.mxu0 %v1878
    %2410 = vmatpush1.msra.mxu0 %v1877
    %2411 = vmatprep.subr.mxu0 %v1884
    %2412 = vmatpush1.msra.mxu0 %v1883
    %2413 = vmatprep.subr.mxu0 %v1890
    %2414 = vmatpush1.msra.mxu0 %v1889
    %2415 = vmatprep.subr.mxu0 %v1896
    %2416 = vmatpush1.msra.mxu0 %v1895
    %2417 = vmatprep.subr.mxu0 %v1902
    %2418 = vmatpush1.msra.mxu0 %v1901
    %2419 = vmatprep.subr.mxu0 %v1908
    %2420 = vmatpush1.msra.mxu0 %v1907
    %2421 = vmatprep.subr.mxu0 %v1914
    %2422 = vmatpush1.msra.mxu0 %v1913
    %2423 = vmatprep.subr.mxu0 %v1920
    %2424 = vmatpush1.msra.mxu0 %v1919
    %2425 = vmatprep.subr.mxu0 %v1926
    %2426 = vmatpush1.msra.mxu0 %v1925
    %2427 = vmatprep.subr.mxu0 %v1932
    %2428 = vmatpush1.msra.mxu0 %v1931
    %2429 = vmatprep.subr.mxu0 %v1938
    %2430 = vmatpush1.msra.mxu0 %v1937
    %2431 = vmatprep.subr.mxu0 %v1944
    %2432 = vmatpush1.msra.mxu0 %v1943
    %2433 = vmatprep.subr.mxu0 %v1950
    %2434 = vmatpush1.msra.mxu0 %v1949
    %2435 = vmatprep.subr.mxu0 %v1956
    %2436 = vmatpush1.msra.mxu0 %v1955
    %2437 = vmatprep.subr.mxu0 %v1962
    %2438 = vmatpush1.msra.mxu0 %v1961
    %2439 = vmatprep.subr.mxu0 %v1968
    %2440 = vmatpush1.msra.mxu0 %v1967
    %2441 = vmatprep.subr.mxu0 %v1974
    %2442 = vmatpush1.msra.mxu0 %v1973
    %2443 = vmatprep.subr.mxu0 %v1980
    %2444 = vmatpush1.msra.mxu0 %v1979
    %2445 = vmatprep.subr.mxu0 %v1986
    %2446 = vmatpush1.msra.mxu0 %v1985
    %2447 = vmatprep.subr.mxu0 %v1992
    %2448 = vmatpush1.msra.mxu0 %v1991
    %2449 = vmatprep.subr.mxu0 %v1998
    %2450 = vmatpush1.msra.mxu0 %v1997
    %2451 = vmatprep.subr.mxu0 %v2004
    %2452 = vmatpush1.msra.mxu0 %v2003
    %2453 = vmatprep.subr.mxu0 %v2010
    %2454 = vmatpush1.msra.mxu0 %v2009
    %2455 = vmatprep.mubr.f32.mxu0 %v2310
    %2456 = vmatmul.mubr.f32.gmra.mrb[0].mxu0 %v2309
    %v2457 = vpop.f32.mrb[0].mxu0
    %v2458 = vadd.f32 %v2037, %v2457
    %v2459 = vpop.f32.mrb[0].mxu0
    %v2460 = vadd.f32 %v2041, %v2459
    %2461 = vdwg.mxu0
    %2462 = vmatprep.subr.mxu0 %v1826
    %2463 = vmatpush1.msra.mxu0 %v1825
    %2464 = vmatprep.subr.mxu0 %v1832
    %2465 = vmatpush1.msra.mxu0 %v1831
    %2466 = vmatprep.subr.mxu0 %v1838
    %2467 = vmatpush1.msra.mxu0 %v1837
    %2468 = vmatprep.subr.mxu0 %v1844
    %2469 = vmatpush1.msra.mxu0 %v1843
    %2470 = vmatprep.subr.mxu0 %v1850
    %2471 = vmatpush1.msra.mxu0 %v1849
    %2472 = vmatprep.subr.mxu0 %v1856
    %2473 = vmatpush1.msra.mxu0 %v1855
    %2474 = vmatprep.subr.mxu0 %v1862
    %2475 = vmatpush1.msra.mxu0 %v1861
    %2476 = vmatprep.subr.mxu0 %v1868
    %2477 = vmatpush1.msra.mxu0 %v1867
    %2478 = vmatprep.subr.mxu0 %v1874
    %2479 = vmatpush1.msra.mxu0 %v1873
    %2480 = vmatprep.subr.mxu0 %v1880
    %2481 = vmatpush1.msra.mxu0 %v1879
    %2482 = vmatprep.subr.mxu0 %v1886
    %2483 = vmatpush1.msra.mxu0 %v1885
    %2484 = vmatprep.subr.mxu0 %v1892
    %2485 = vmatpush1.msra.mxu0 %v1891
    %2486 = vmatprep.subr.mxu0 %v1898
    %2487 = vmatpush1.msra.mxu0 %v1897
    %2488 = vmatprep.subr.mxu0 %v1904
    %2489 = vmatpush1.msra.mxu0 %v1903
    %2490 = vmatprep.subr.mxu0 %v1910
    %2491 = vmatpush1.msra.mxu0 %v1909
    %2492 = vmatprep.subr.mxu0 %v1916
    %2493 = vmatpush1.msra.mxu0 %v1915
    %2494 = vmatprep.subr.mxu0 %v1922
    %2495 = vmatpush1.msra.mxu0 %v1921
    %2496 = vmatprep.subr.mxu0 %v1928
    %2497 = vmatpush1.msra.mxu0 %v1927
    %2498 = vmatprep.subr.mxu0 %v1934
    %2499 = vmatpush1.msra.mxu0 %v1933
    %2500 = vmatprep.subr.mxu0 %v1940
    %2501 = vmatpush1.msra.mxu0 %v1939
    %2502 = vmatprep.subr.mxu0 %v1946
    %2503 = vmatpush1.msra.mxu0 %v1945
    %2504 = vmatprep.subr.mxu0 %v1952
    %2505 = vmatpush1.msra.mxu0 %v1951
    %2506 = vmatprep.subr.mxu0 %v1958
    %2507 = vmatpush1.msra.mxu0 %v1957
    %2508 = vmatprep.subr.mxu0 %v1964
    %2509 = vmatpush1.msra.mxu0 %v1963
    %2510 = vmatprep.subr.mxu0 %v1970
    %2511 = vmatpush1.msra.mxu0 %v1969
    %2512 = vmatprep.subr.mxu0 %v1976
    %2513 = vmatpush1.msra.mxu0 %v1975
    %2514 = vmatprep.subr.mxu0 %v1982
    %2515 = vmatpush1.msra.mxu0 %v1981
    %2516 = vmatprep.subr.mxu0 %v1988
    %2517 = vmatpush1.msra.mxu0 %v1987
    %2518 = vmatprep.subr.mxu0 %v1994
    %2519 = vmatpush1.msra.mxu0 %v1993
    %2520 = vmatprep.subr.mxu0 %v2000
    %2521 = vmatpush1.msra.mxu0 %v1999
    %2522 = vmatprep.subr.mxu0 %v2006
    %2523 = vmatpush1.msra.mxu0 %v2005
    %2524 = vmatprep.subr.mxu0 %v2012
    %2525 = vmatpush1.msra.mxu0 %v2011
    %2526 = vmatprep.mubr.f32.mxu0 %v2310
    %2527 = vmatmul.mubr.f32.gmra.mrb[0].mxu0 %v2309
    %v2528 = vpop.f32.mrb[0].mxu0
    %v2529 = vadd.f32 %v2045, %v2528
    %v2530 = vpop.f32.mrb[0].mxu0
    %v2531 = vadd.f32 %v2049, %v2530
    %2532 = vdwg.mxu0
    %v2533 = vadd.f32 %v2314, %v2387
    %v2534 = vadd.f32 %v2315, %v2389
    %v2535 = vxor.u32 %v2533, 2147483648
    %v2536 = vxor.u32 %v2534, 2147483648
    %v2537 = vmul.f32 %v2535, 1.442695
    %v2538 = vpow.pop %v2537
    %v2539 = vmul.f32 %v2536, 1.442695
    %v2540 = vpow.pop %v2539
    %v2541 = vadd.f32 %v2538, 1.0
    %v2542 = vadd.f32 %v2540, 1.0
    %v2543 = vrcp.pop %v2541
    %v2544 = vmul.f32 1.0, %v2543
    %v2545 = vrcp.pop %v2542
    %v2546 = vmul.f32 1.0, %v2545
    %v2547 = vadd.f32 %v2316, %v2458
    %v2548 = vadd.f32 %v2317, %v2460
    %v2549 = vxor.u32 %v2547, 2147483648
    %v2550 = vxor.u32 %v2548, 2147483648
    %v2551 = vmul.f32 %v2549, 1.442695
    %v2552 = vpow.pop %v2551
    %v2553 = vmul.f32 %v2550, 1.442695
    %v2554 = vpow.pop %v2553
    %v2555 = vadd.f32 %v2552, 1.0
    %v2556 = vadd.f32 %v2554, 1.0
    %v2557 = vrcp.pop %v2555
    %v2558 = vmul.f32 1.0, %v2557
    %v2559 = vrcp.pop %v2556
    %v2560 = vmul.f32 1.0, %v2559
    %v2561 = vmul.f32 %v2544, %v2529
    %v2562 = vmul.f32 %v2546, %v2531
    %v2563 = vadd.f32 %v2318, %v2561
    %v2564 = vadd.f32 %v2319, %v2562
    %v2565 = vtanh.pop %v2563
    %v2566 = vtanh.pop %v2564
    %v2567 = vsub.f32 1.0, %v2558
    %v2568 = vsub.f32 1.0, %v2560
    %v2569 = vmul.f32 %v2567, %v2565
    %v2570 = vmul.f32 %v2568, %v2566
    %v2571 = vmul.f32 %v2558, %v2309
    %v2572 = vmul.f32 %v2560, %v2310
    %v2573 = vadd.f32 %v2569, %v2571
    %v2574 = vadd.f32 %v2570, %v2572
    %s2575 = smul.u32 2, 6
    %s2576 = smul.addr %s2575, 8
    %s2577 = scalar_lea.vmem [#allocation2], %s2576
    %v2578 = vld [vmem:[%s2577] sm:$0xff]
    %v2579 = vld [vmem:[%s2577 + $0x8] sm:$0xff]
    %v2580 = vld [vmem:[%s2577 + $0x10] sm:$0xff]
    %v2581 = vld [vmem:[%s2577 + $0x18] sm:$0xff]
    %v2582 = vld [vmem:[%s2577 + $0x20] sm:$0xff]
    %v2583 = vld [vmem:[%s2577 + $0x28] sm:$0xff]
    %2584 = vmatprep.subr.mxu0 %v1822
    %2585 = vmatpush1.msra.mxu0 %v1821
    %2586 = vmatprep.subr.mxu0 %v1828
    %2587 = vmatpush1.msra.mxu0 %v1827
    %2588 = vmatprep.subr.mxu0 %v1834
    %2589 = vmatpush1.msra.mxu0 %v1833
    %2590 = vmatprep.subr.mxu0 %v1840
    %2591 = vmatpush1.msra.mxu0 %v1839
    %2592 = vmatprep.subr.mxu0 %v1846
    %2593 = vmatpush1.msra.mxu0 %v1845
    %2594 = vmatprep.subr.mxu0 %v1852
    %2595 = vmatpush1.msra.mxu0 %v1851
    %2596 = vmatprep.subr.mxu0 %v1858
    %2597 = vmatpush1.msra.mxu0 %v1857
    %2598 = vmatprep.subr.mxu0 %v1864
    %2599 = vmatpush1.msra.mxu0 %v1863
    %2600 = vmatprep.subr.mxu0 %v1870
    %2601 = vmatpush1.msra.mxu0 %v1869
    %2602 = vmatprep.subr.mxu0 %v1876
    %2603 = vmatpush1.msra.mxu0 %v1875
    %2604 = vmatprep.subr.mxu0 %v1882
    %2605 = vmatpush1.msra.mxu0 %v1881
    %2606 = vmatprep.subr.mxu0 %v1888
    %2607 = vmatpush1.msra.mxu0 %v1887
    %2608 = vmatprep.subr.mxu0 %v1894
    %2609 = vmatpush1.msra.mxu0 %v1893
    %2610 = vmatprep.subr.mxu0 %v1900
    %2611 = vmatpush1.msra.mxu0 %v1899
    %2612 = vmatprep.subr.mxu0 %v1906
    %2613 = vmatpush1.msra.mxu0 %v1905
    %2614 = vmatprep.subr.mxu0 %v1912
    %2615 = vmatpush1.msra.mxu0 %v1911
    %2616 = vmatprep.subr.mxu0 %v1918
    %2617 = vmatpush1.msra.mxu0 %v1917
    %2618 = vmatprep.subr.mxu0 %v1924
    %2619 = vmatpush1.msra.mxu0 %v1923
    %2620 = vmatprep.subr.mxu0 %v1930
    %2621 = vmatpush1.msra.mxu0 %v1929
    %2622 = vmatprep.subr.mxu0 %v1936
    %2623 = vmatpush1.msra.mxu0 %v1935
    %2624 = vmatprep.subr.mxu0 %v1942
    %2625 = vmatpush1.msra.mxu0 %v1941
    %2626 = vmatprep.subr.mxu0 %v1948
    %2627 = vmatpush1.msra.mxu0 %v1947
    %2628 = vmatprep.subr.mxu0 %v1954
    %2629 = vmatpush1.msra.mxu0 %v1953
    %2630 = vmatprep.subr.mxu0 %v1960
    %2631 = vmatpush1.msra.mxu0 %v1959
    %2632 = vmatprep.subr.mxu0 %v1966
    %2633 = vmatpush1.msra.mxu0 %v1965
    %2634 = vmatprep.subr.mxu0 %v1972
    %2635 = vmatpush1.msra.mxu0 %v1971
    %2636 = vmatprep.subr.mxu0 %v1978
    %2637 = vmatpush1.msra.mxu0 %v1977
    %2638 = vmatprep.subr.mxu0 %v1984
    %2639 = vmatpush1.msra.mxu0 %v1983
    %2640 = vmatprep.subr.mxu0 %v1990
    %2641 = vmatpush1.msra.mxu0 %v1989
    %2642 = vmatprep.subr.mxu0 %v1996
    %2643 = vmatpush1.msra.mxu0 %v1995
    %2644 = vmatprep.subr.mxu0 %v2002
    %2645 = vmatpush1.msra.mxu0 %v2001
    %2646 = vmatprep.subr.mxu0 %v2008
    %2647 = vmatpush1.msra.mxu0 %v2007
    %2648 = vmatprep.mubr.f32.mxu0 %v2574
    %2649 = vmatmul.mubr.f32.gmra.mrb[0].mxu0 %v2573
    %v2650 = vpop.f32.mrb[0].mxu0
    %v2651 = vadd.f32 %v2029, %v2650
    %v2652 = vpop.f32.mrb[0].mxu0
    %v2653 = vadd.f32 %v2033, %v2652
    %2654 = vdwg.mxu0
    %2655 = vmatprep.subr.mxu0 %v1824
    %2656 = vmatpush1.msra.mxu0 %v1823
    %2657 = vmatprep.subr.mxu0 %v1830
    %2658 = vmatpush1.msra.mxu0 %v1829
    %2659 = vmatprep.subr.mxu0 %v1836
    %2660 = vmatpush1.msra.mxu0 %v1835
    %2661 = vmatprep.subr.mxu0 %v1842
    %2662 = vmatpush1.msra.mxu0 %v1841
    %2663 = vmatprep.subr.mxu0 %v1848
    %2664 = vmatpush1.msra.mxu0 %v1847
    %2665 = vmatprep.subr.mxu0 %v1854
    %2666 = vmatpush1.msra.mxu0 %v1853
    %2667 = vmatprep.subr.mxu0 %v1860
    %2668 = vmatpush1.msra.mxu0 %v1859
    %2669 = vmatprep.subr.mxu0 %v1866
    %2670 = vmatpush1.msra.mxu0 %v1865
    %2671 = vmatprep.subr.mxu0 %v1872
    %2672 = vmatpush1.msra.mxu0 %v1871
    %2673 = vmatprep.subr.mxu0 %v1878
    %2674 = vmatpush1.msra.mxu0 %v1877
    %2675 = vmatprep.subr.mxu0 %v1884
    %2676 = vmatpush1.msra.mxu0 %v1883
    %2677 = vmatprep.subr.mxu0 %v1890
    %2678 = vmatpush1.msra.mxu0 %v1889
    %2679 = vmatprep.subr.mxu0 %v1896
    %2680 = vmatpush1.msra.mxu0 %v1895
    %2681 = vmatprep.subr.mxu0 %v1902
    %2682 = vmatpush1.msra.mxu0 %v1901
    %2683 = vmatprep.subr.mxu0 %v1908
    %2684 = vmatpush1.msra.mxu0 %v1907
    %2685 = vmatprep.subr.mxu0 %v1914
    %2686 = vmatpush1.msra.mxu0 %v1913
    %2687 = vmatprep.subr.mxu0 %v1920
    %2688 = vmatpush1.msra.mxu0 %v1919
    %2689 = vmatprep.subr.mxu0 %v1926
    %2690 = vmatpush1.msra.mxu0 %v1925
    %2691 = vmatprep.subr.mxu0 %v1932
    %2692 = vmatpush1.msra.mxu0 %v1931
    %2693 = vmatprep.subr.mxu0 %v1938
    %2694 = vmatpush1.msra.mxu0 %v1937
    %2695 = vmatprep.subr.mxu0 %v1944
    %2696 = vmatpush1.msra.mxu0 %v1943
    %2697 = vmatprep.subr.mxu0 %v1950
    %2698 = vmatpush1.msra.mxu0 %v1949
    %2699 = vmatprep.subr.mxu0 %v1956
    %2700 = vmatpush1.msra.mxu0 %v1955
    %2701 = vmatprep.subr.mxu0 %v1962
    %2702 = vmatpush1.msra.mxu0 %v1961
    %2703 = vmatprep.subr.mxu0 %v1968
    %2704 = vmatpush1.msra.mxu0 %v1967
    %2705 = vmatprep.subr.mxu0 %v1974
    %2706 = vmatpush1.msra.mxu0 %v1973
    %2707 = vmatprep.subr.mxu0 %v1980
    %2708 = vmatpush1.msra.mxu0 %v1979
    %2709 = vmatprep.subr.mxu0 %v1986
    %2710 = vmatpush1.msra.mxu0 %v1985
    %2711 = vmatprep.subr.mxu0 %v1992
    %2712 = vmatpush1.msra.mxu0 %v1991
    %2713 = vmatprep.subr.mxu0 %v1998
    %2714 = vmatpush1.msra.mxu0 %v1997
    %2715 = vmatprep.subr.mxu0 %v2004
    %2716 = vmatpush1.msra.mxu0 %v2003
    %2717 = vmatprep.subr.mxu0 %v2010
    %2718 = vmatpush1.msra.mxu0 %v2009
    %2719 = vmatprep.mubr.f32.mxu0 %v2574
    %2720 = vmatmul.mubr.f32.gmra.mrb[0].mxu0 %v2573
    %v2721 = vpop.f32.mrb[0].mxu0
    %v2722 = vadd.f32 %v2037, %v2721
    %v2723 = vpop.f32.mrb[0].mxu0
    %v2724 = vadd.f32 %v2041, %v2723
    %2725 = vdwg.mxu0
    %2726 = vmatprep.subr.mxu0 %v1826
    %2727 = vmatpush1.msra.mxu0 %v1825
    %2728 = vmatprep.subr.mxu0 %v1832
    %2729 = vmatpush1.msra.mxu0 %v1831
    %2730 = vmatprep.subr.mxu0 %v1838
    %2731 = vmatpush1.msra.mxu0 %v1837
    %2732 = vmatprep.subr.mxu0 %v1844
    %2733 = vmatpush1.msra.mxu0 %v1843
    %2734 = vmatprep.subr.mxu0 %v1850
    %2735 = vmatpush1.msra.mxu0 %v1849
    %2736 = vmatprep.subr.mxu0 %v1856
    %2737 = vmatpush1.msra.mxu0 %v1855
    %2738 = vmatprep.subr.mxu0 %v1862
    %2739 = vmatpush1.msra.mxu0 %v1861
    %2740 = vmatprep.subr.mxu0 %v1868
    %2741 = vmatpush1.msra.mxu0 %v1867
    %2742 = vmatprep.subr.mxu0 %v1874
    %2743 = vmatpush1.msra.mxu0 %v1873
    %2744 = vmatprep.subr.mxu0 %v1880
    %2745 = vmatpush1.msra.mxu0 %v1879
    %2746 = vmatprep.subr.mxu0 %v1886
    %2747 = vmatpush1.msra.mxu0 %v1885
    %2748 = vmatprep.subr.mxu0 %v1892
    %2749 = vmatpush1.msra.mxu0 %v1891
    %2750 = vmatprep.subr.mxu0 %v1898
    %2751 = vmatpush1.msra.mxu0 %v1897
    %2752 = vmatprep.subr.mxu0 %v1904
    %2753 = vmatpush1.msra.mxu0 %v1903
    %2754 = vmatprep.subr.mxu0 %v1910
    %2755 = vmatpush1.msra.mxu0 %v1909
    %2756 = vmatprep.subr.mxu0 %v1916
    %2757 = vmatpush1.msra.mxu0 %v1915
    %2758 = vmatprep.subr.mxu0 %v1922
    %2759 = vmatpush1.msra.mxu0 %v1921
    %2760 = vmatprep.subr.mxu0 %v1928
    %2761 = vmatpush1.msra.mxu0 %v1927
    %2762 = vmatprep.subr.mxu0 %v1934
    %2763 = vmatpush1.msra.mxu0 %v1933
    %2764 = vmatprep.subr.mxu0 %v1940
    %2765 = vmatpush1.msra.mxu0 %v1939
    %2766 = vmatprep.subr.mxu0 %v1946
    %2767 = vmatpush1.msra.mxu0 %v1945
    %2768 = vmatprep.subr.mxu0 %v1952
    %2769 = vmatpush1.msra.mxu0 %v1951
    %2770 = vmatprep.subr.mxu0 %v1958
    %2771 = vmatpush1.msra.mxu0 %v1957
    %2772 = vmatprep.subr.mxu0 %v1964
    %2773 = vmatpush1.msra.mxu0 %v1963
    %2774 = vmatprep.subr.mxu0 %v1970
    %2775 = vmatpush1.msra.mxu0 %v1969
    %2776 = vmatprep.subr.mxu0 %v1976
    %2777 = vmatpush1.msra.mxu0 %v1975
    %2778 = vmatprep.subr.mxu0 %v1982
    %2779 = vmatpush1.msra.mxu0 %v1981
    %2780 = vmatprep.subr.mxu0 %v1988
    %2781 = vmatpush1.msra.mxu0 %v1987
    %2782 = vmatprep.subr.mxu0 %v1994
    %2783 = vmatpush1.msra.mxu0 %v1993
    %2784 = vmatprep.subr.mxu0 %v2000
    %2785 = vmatpush1.msra.mxu0 %v1999
    %2786 = vmatprep.subr.mxu0 %v2006
    %2787 = vmatpush1.msra.mxu0 %v2005
    %2788 = vmatprep.subr.mxu0 %v2012
    %2789 = vmatpush1.msra.mxu0 %v2011
    %2790 = vmatprep.mubr.f32.mxu0 %v2574
    %2791 = vmatmul.mubr.f32.gmra.mrb[0].mxu0 %v2573
    %v2792 = vpop.f32.mrb[0].mxu0
    %v2793 = vadd.f32 %v2045, %v2792
    %v2794 = vpop.f32.mrb[0].mxu0
    %v2795 = vadd.f32 %v2049, %v2794
    %2796 = vdwg.mxu0
    %v2797 = vadd.f32 %v2578, %v2651
    %v2798 = vadd.f32 %v2579, %v2653
    %v2799 = vxor.u32 %v2797, 2147483648
    %v2800 = vxor.u32 %v2798, 2147483648
    %v2801 = vmul.f32 %v2799, 1.442695
    %v2802 = vpow.pop %v2801
    %v2803 = vmul.f32 %v2800, 1.442695
    %v2804 = vpow.pop %v2803
    %v2805 = vadd.f32 %v2802, 1.0
    %v2806 = vadd.f32 %v2804, 1.0
    %v2807 = vrcp.pop %v2805
    %v2808 = vmul.f32 1.0, %v2807
    %v2809 = vrcp.pop %v2806
    %v2810 = vmul.f32 1.0, %v2809
    %v2811 = vadd.f32 %v2580, %v2722
    %v2812 = vadd.f32 %v2581, %v2724
    %v2813 = vxor.u32 %v2811, 2147483648
    %v2814 = vxor.u32 %v2812, 2147483648
    %v2815 = vmul.f32 %v2813, 1.442695
    %v2816 = vpow.pop %v2815
    %v2817 = vmul.f32 %v2814, 1.442695
    %v2818 = vpow.pop %v2817
    %v2819 = vadd.f32 %v2816, 1.0
    %v2820 = vadd.f32 %v2818, 1.0
    %v2821 = vrcp.pop %v2819
    %v2822 = vmul.f32 1.0, %v2821
    %v2823 = vrcp.pop %v2820
    %v2824 = vmul.f32 1.0, %v2823
    %v2825 = vmul.f32 %v2808, %v2793
    %v2826 = vmul.f32 %v2810, %v2795
    %v2827 = vadd.f32 %v2582, %v2825
    %v2828 = vadd.f32 %v2583, %v2826
    %v2829 = vtanh.pop %v2827
    %v2830 = vtanh.pop %v2828
    %v2831 = vsub.f32 1.0, %v2822
    %v2832 = vsub.f32 1.0, %v2824
    %v2833 = vmul.f32 %v2831, %v2829
    %v2834 = vmul.f32 %v2832, %v2830
    %v2835 = vmul.f32 %v2822, %v2573
    %v2836 = vmul.f32 %v2824, %v2574
    %v2837 = vadd.f32 %v2833, %v2835
    %v2838 = vadd.f32 %v2834, %v2836
    %s2839 = smul.u32 3, 6
    %s2840 = smul.addr %s2839, 8
    %s2841 = scalar_lea.vmem [#allocation2], %s2840
    %v2842 = vld [vmem:[%s2841] sm:$0xff]
    %v2843 = vld [vmem:[%s2841 + $0x8] sm:$0xff]
    %v2844 = vld [vmem:[%s2841 + $0x10] sm:$0xff]
    %v2845 = vld [vmem:[%s2841 + $0x18] sm:$0xff]
    %v2846 = vld [vmem:[%s2841 + $0x20] sm:$0xff]
    %v2847 = vld [vmem:[%s2841 + $0x28] sm:$0xff]
    %2848 = vmatprep.subr.mxu0 %v1822
    %2849 = vmatpush1.msra.mxu0 %v1821
    %2850 = vmatprep.subr.mxu0 %v1828
    %2851 = vmatpush1.msra.mxu0 %v1827
    %2852 = vmatprep.subr.mxu0 %v1834
    %2853 = vmatpush1.msra.mxu0 %v1833
    %2854 = vmatprep.subr.mxu0 %v1840
    %2855 = vmatpush1.msra.mxu0 %v1839
    %2856 = vmatprep.subr.mxu0 %v1846
    %2857 = vmatpush1.msra.mxu0 %v1845
    %2858 = vmatprep.subr.mxu0 %v1852
    %2859 = vmatpush1.msra.mxu0 %v1851
    %2860 = vmatprep.subr.mxu0 %v1858
    %2861 = vmatpush1.msra.mxu0 %v1857
    %2862 = vmatprep.subr.mxu0 %v1864
    %2863 = vmatpush1.msra.mxu0 %v1863
    %2864 = vmatprep.subr.mxu0 %v1870
    %2865 = vmatpush1.msra.mxu0 %v1869
    %2866 = vmatprep.subr.mxu0 %v1876
    %2867 = vmatpush1.msra.mxu0 %v1875
    %2868 = vmatprep.subr.mxu0 %v1882
    %2869 = vmatpush1.msra.mxu0 %v1881
    %2870 = vmatprep.subr.mxu0 %v1888
    %2871 = vmatpush1.msra.mxu0 %v1887
    %2872 = vmatprep.subr.mxu0 %v1894
    %2873 = vmatpush1.msra.mxu0 %v1893
    %2874 = vmatprep.subr.mxu0 %v1900
    %2875 = vmatpush1.msra.mxu0 %v1899
    %2876 = vmatprep.subr.mxu0 %v1906
    %2877 = vmatpush1.msra.mxu0 %v1905
    %2878 = vmatprep.subr.mxu0 %v1912
    %2879 = vmatpush1.msra.mxu0 %v1911
    %2880 = vmatprep.subr.mxu0 %v1918
    %2881 = vmatpush1.msra.mxu0 %v1917
    %2882 = vmatprep.subr.mxu0 %v1924
    %2883 = vmatpush1.msra.mxu0 %v1923
    %2884 = vmatprep.subr.mxu0 %v1930
    %2885 = vmatpush1.msra.mxu0 %v1929
    %2886 = vmatprep.subr.mxu0 %v1936
    %2887 = vmatpush1.msra.mxu0 %v1935
    %2888 = vmatprep.subr.mxu0 %v1942
    %2889 = vmatpush1.msra.mxu0 %v1941
    %2890 = vmatprep.subr.mxu0 %v1948
    %2891 = vmatpush1.msra.mxu0 %v1947
    %2892 = vmatprep.subr.mxu0 %v1954
    %2893 = vmatpush1.msra.mxu0 %v1953
    %2894 = vmatprep.subr.mxu0 %v1960
    %2895 = vmatpush1.msra.mxu0 %v1959
    %2896 = vmatprep.subr.mxu0 %v1966
    %2897 = vmatpush1.msra.mxu0 %v1965
    %2898 = vmatprep.subr.mxu0 %v1972
    %2899 = vmatpush1.msra.mxu0 %v1971
    %2900 = vmatprep.subr.mxu0 %v1978
    %2901 = vmatpush1.msra.mxu0 %v1977
    %2902 = vmatprep.subr.mxu0 %v1984
    %2903 = vmatpush1.msra.mxu0 %v1983
    %2904 = vmatprep.subr.mxu0 %v1990
    %2905 = vmatpush1.msra.mxu0 %v1989
    %2906 = vmatprep.subr.mxu0 %v1996
    %2907 = vmatpush1.msra.mxu0 %v1995
    %2908 = vmatprep.subr.mxu0 %v2002
    %2909 = vmatpush1.msra.mxu0 %v2001
    %2910 = vmatprep.subr.mxu0 %v2008
    %2911 = vmatpush1.msra.mxu0 %v2007
    %2912 = vmatprep.mubr.f32.mxu0 %v2838
    %2913 = vmatmul.mubr.f32.gmra.mrb[0].mxu0 %v2837
    %v2914 = vpop.f32.mrb[0].mxu0
    %v2915 = vadd.f32 %v2029, %v2914
    %v2916 = vpop.f32.mrb[0].mxu0
    %v2917 = vadd.f32 %v2033, %v2916
    %2918 = vdwg.mxu0
    %2919 = vmatprep.subr.mxu0 %v1824
    %2920 = vmatpush1.msra.mxu0 %v1823
    %2921 = vmatprep.subr.mxu0 %v1830
    %2922 = vmatpush1.msra.mxu0 %v1829
    %2923 = vmatprep.subr.mxu0 %v1836
    %2924 = vmatpush1.msra.mxu0 %v1835
    %2925 = vmatprep.subr.mxu0 %v1842
    %2926 = vmatpush1.msra.mxu0 %v1841
    %2927 = vmatprep.subr.mxu0 %v1848
    %2928 = vmatpush1.msra.mxu0 %v1847
    %2929 = vmatprep.subr.mxu0 %v1854
    %2930 = vmatpush1.msra.mxu0 %v1853
    %2931 = vmatprep.subr.mxu0 %v1860
    %2932 = vmatpush1.msra.mxu0 %v1859
    %2933 = vmatprep.subr.mxu0 %v1866
    %2934 = vmatpush1.msra.mxu0 %v1865
    %2935 = vmatprep.subr.mxu0 %v1872
    %2936 = vmatpush1.msra.mxu0 %v1871
    %2937 = vmatprep.subr.mxu0 %v1878
    %2938 = vmatpush1.msra.mxu0 %v1877
    %2939 = vmatprep.subr.mxu0 %v1884
    %2940 = vmatpush1.msra.mxu0 %v1883
    %2941 = vmatprep.subr.mxu0 %v1890
    %2942 = vmatpush1.msra.mxu0 %v1889
    %2943 = vmatprep.subr.mxu0 %v1896
    %2944 = vmatpush1.msra.mxu0 %v1895
    %2945 = vmatprep.subr.mxu0 %v1902
    %2946 = vmatpush1.msra.mxu0 %v1901
    %2947 = vmatprep.subr.mxu0 %v1908
    %2948 = vmatpush1.msra.mxu0 %v1907
    %2949 = vmatprep.subr.mxu0 %v1914
    %2950 = vmatpush1.msra.mxu0 %v1913
    %2951 = vmatprep.subr.mxu0 %v1920
    %2952 = vmatpush1.msra.mxu0 %v1919
    %2953 = vmatprep.subr.mxu0 %v1926
    %2954 = vmatpush1.msra.mxu0 %v1925
    %2955 = vmatprep.subr.mxu0 %v1932
    %2956 = vmatpush1.msra.mxu0 %v1931
    %2957 = vmatprep.subr.mxu0 %v1938
    %2958 = vmatpush1.msra.mxu0 %v1937
    %2959 = vmatprep.subr.mxu0 %v1944
    %2960 = vmatpush1.msra.mxu0 %v1943
    %2961 = vmatprep.subr.mxu0 %v1950
    %2962 = vmatpush1.msra.mxu0 %v1949
    %2963 = vmatprep.subr.mxu0 %v1956
    %2964 = vmatpush1.msra.mxu0 %v1955
    %2965 = vmatprep.subr.mxu0 %v1962
    %2966 = vmatpush1.msra.mxu0 %v1961
    %2967 = vmatprep.subr.mxu0 %v1968
    %2968 = vmatpush1.msra.mxu0 %v1967
    %2969 = vmatprep.subr.mxu0 %v1974
    %2970 = vmatpush1.msra.mxu0 %v1973
    %2971 = vmatprep.subr.mxu0 %v1980
    %2972 = vmatpush1.msra.mxu0 %v1979
    %2973 = vmatprep.subr.mxu0 %v1986
    %2974 = vmatpush1.msra.mxu0 %v1985
    %2975 = vmatprep.subr.mxu0 %v1992
    %2976 = vmatpush1.msra.mxu0 %v1991
    %2977 = vmatprep.subr.mxu0 %v1998
    %2978 = vmatpush1.msra.mxu0 %v1997
    %2979 = vmatprep.subr.mxu0 %v2004
    %2980 = vmatpush1.msra.mxu0 %v2003
    %2981 = vmatprep.subr.mxu0 %v2010
    %2982 = vmatpush1.msra.mxu0 %v2009
    %2983 = vmatprep.mubr.f32.mxu0 %v2838
    %2984 = vmatmul.mubr.f32.gmra.mrb[0].mxu0 %v2837
    %v2985 = vpop.f32.mrb[0].mxu0
    %v2986 = vadd.f32 %v2037, %v2985
    %v2987 = vpop.f32.mrb[0].mxu0
    %v2988 = vadd.f32 %v2041, %v2987
    %2989 = vdwg.mxu0
    %2990 = vmatprep.subr.mxu0 %v1826
    %2991 = vmatpush1.msra.mxu0 %v1825
    %2992 = vmatprep.subr.mxu0 %v1832
    %2993 = vmatpush1.msra.mxu0 %v1831
    %2994 = vmatprep.subr.mxu0 %v1838
    %2995 = vmatpush1.msra.mxu0 %v1837
    %2996 = vmatprep.subr.mxu0 %v1844
    %2997 = vmatpush1.msra.mxu0 %v1843
    %2998 = vmatprep.subr.mxu0 %v1850
    %2999 = vmatpush1.msra.mxu0 %v1849
    %3000 = vmatprep.subr.mxu0 %v1856
    %3001 = vmatpush1.msra.mxu0 %v1855
    %3002 = vmatprep.subr.mxu0 %v1862
    %3003 = vmatpush1.msra.mxu0 %v1861
    %3004 = vmatprep.subr.mxu0 %v1868
    %3005 = vmatpush1.msra.mxu0 %v1867
    %3006 = vmatprep.subr.mxu0 %v1874
    %3007 = vmatpush1.msra.mxu0 %v1873
    %3008 = vmatprep.subr.mxu0 %v1880
    %3009 = vmatpush1.msra.mxu0 %v1879
    %3010 = vmatprep.subr.mxu0 %v1886
    %3011 = vmatpush1.msra.mxu0 %v1885
    %3012 = vmatprep.subr.mxu0 %v1892
    %3013 = vmatpush1.msra.mxu0 %v1891
    %3014 = vmatprep.subr.mxu0 %v1898
    %3015 = vmatpush1.msra.mxu0 %v1897
    %3016 = vmatprep.subr.mxu0 %v1904
    %3017 = vmatpush1.msra.mxu0 %v1903
    %3018 = vmatprep.subr.mxu0 %v1910
    %3019 = vmatpush1.msra.mxu0 %v1909
    %3020 = vmatprep.subr.mxu0 %v1916
    %3021 = vmatpush1.msra.mxu0 %v1915
    %3022 = vmatprep.subr.mxu0 %v1922
    %3023 = vmatpush1.msra.mxu0 %v1921
    %3024 = vmatprep.subr.mxu0 %v1928
    %3025 = vmatpush1.msra.mxu0 %v1927
    %3026 = vmatprep.subr.mxu0 %v1934
    %3027 = vmatpush1.msra.mxu0 %v1933
    %3028 = vmatprep.subr.mxu0 %v1940
    %3029 = vmatpush1.msra.mxu0 %v1939
    %3030 = vmatprep.subr.mxu0 %v1946
    %3031 = vmatpush1.msra.mxu0 %v1945
    %3032 = vmatprep.subr.mxu0 %v1952
    %3033 = vmatpush1.msra.mxu0 %v1951
    %3034 = vmatprep.subr.mxu0 %v1958
    %3035 = vmatpush1.msra.mxu0 %v1957
    %3036 = vmatprep.subr.mxu0 %v1964
    %3037 = vmatpush1.msra.mxu0 %v1963
    %3038 = vmatprep.subr.mxu0 %v1970
    %3039 = vmatpush1.msra.mxu0 %v1969
    %3040 = vmatprep.subr.mxu0 %v1976
    %3041 = vmatpush1.msra.mxu0 %v1975
    %3042 = vmatprep.subr.mxu0 %v1982
    %3043 = vmatpush1.msra.mxu0 %v1981
    %3044 = vmatprep.subr.mxu0 %v1988
    %3045 = vmatpush1.msra.mxu0 %v1987
    %3046 = vmatprep.subr.mxu0 %v1994
    %3047 = vmatpush1.msra.mxu0 %v1993
    %3048 = vmatprep.subr.mxu0 %v2000
    %3049 = vmatpush1.msra.mxu0 %v1999
    %3050 = vmatprep.subr.mxu0 %v2006
    %3051 = vmatpush1.msra.mxu0 %v2005
    %3052 = vmatprep.subr.mxu0 %v2012
    %3053 = vmatpush1.msra.mxu0 %v2011
    %3054 = vmatprep.mubr.f32.mxu0 %v2838
    %3055 = vmatmul.mubr.f32.gmra.mrb[0].mxu0 %v2837
    %v3056 = vpop.f32.mrb[0].mxu0
    %v3057 = vadd.f32 %v2045, %v3056
    %v3058 = vpop.f32.mrb[0].mxu0
    %v3059 = vadd.f32 %v2049, %v3058
    %3060 = vdwg.mxu0
    %v3061 = vadd.f32 %v2842, %v2915
    %v3062 = vadd.f32 %v2843, %v2917
    %v3063 = vxor.u32 %v3061, 2147483648
    %v3064 = vxor.u32 %v3062, 2147483648
    %v3065 = vmul.f32 %v3063, 1.442695
    %v3066 = vpow.pop %v3065
    %v3067 = vmul.f32 %v3064, 1.442695
    %v3068 = vpow.pop %v3067
    %v3069 = vadd.f32 %v3066, 1.0
    %v3070 = vadd.f32 %v3068, 1.0
    %v3071 = vrcp.pop %v3069
    %v3072 = vmul.f32 1.0, %v3071
    %v3073 = vrcp.pop %v3070
    %v3074 = vmul.f32 1.0, %v3073
    %v3075 = vadd.f32 %v2844, %v2986
    %v3076 = vadd.f32 %v2845, %v2988
    %v3077 = vxor.u32 %v3075, 2147483648
    %v3078 = vxor.u32 %v3076, 2147483648
    %v3079 = vmul.f32 %v3077, 1.442695
    %v3080 = vpow.pop %v3079
    %v3081 = vmul.f32 %v3078, 1.442695
    %v3082 = vpow.pop %v3081
    %v3083 = vadd.f32 %v3080, 1.0
    %v3084 = vadd.f32 %v3082, 1.0
    %v3085 = vrcp.pop %v3083
    %v3086 = vmul.f32 1.0, %v3085
    %v3087 = vrcp.pop %v3084
    %v3088 = vmul.f32 1.0, %v3087
    %v3089 = vmul.f32 %v3072, %v3057
    %v3090 = vmul.f32 %v3074, %v3059
    %v3091 = vadd.f32 %v2846, %v3089
    %v3092 = vadd.f32 %v2847, %v3090
    %v3093 = vtanh.pop %v3091
    %v3094 = vtanh.pop %v3092
    %v3095 = vsub.f32 1.0, %v3086
    %v3096 = vsub.f32 1.0, %v3088
    %v3097 = vmul.f32 %v3095, %v3093
    %v3098 = vmul.f32 %v3096, %v3094
    %v3099 = vmul.f32 %v3086, %v2837
    %v3100 = vmul.f32 %v3088, %v2838
    %v3101 = vadd.f32 %v3097, %v3099
    %v3102 = vadd.f32 %v3098, %v3100
    %s3103 = smul.u32 4, 6
    %s3104 = smul.addr %s3103, 8
    %s3105 = scalar_lea.vmem [#allocation2], %s3104
    %v3106 = vld [vmem:[%s3105] sm:$0xff]
    %v3107 = vld [vmem:[%s3105 + $0x8] sm:$0xff]
    %v3108 = vld [vmem:[%s3105 + $0x10] sm:$0xff]
    %v3109 = vld [vmem:[%s3105 + $0x18] sm:$0xff]
    %v3110 = vld [vmem:[%s3105 + $0x20] sm:$0xff]
    %v3111 = vld [vmem:[%s3105 + $0x28] sm:$0xff]
    %3112 = vmatprep.subr.mxu0 %v1822
    %3113 = vmatpush1.msra.mxu0 %v1821
    %3114 = vmatprep.subr.mxu0 %v1828
    %3115 = vmatpush1.msra.mxu0 %v1827
    %3116 = vmatprep.subr.mxu0 %v1834
    %3117 = vmatpush1.msra.mxu0 %v1833
    %3118 = vmatprep.subr.mxu0 %v1840
    %3119 = vmatpush1.msra.mxu0 %v1839
    %3120 = vmatprep.subr.mxu0 %v1846
    %3121 = vmatpush1.msra.mxu0 %v1845
    %3122 = vmatprep.subr.mxu0 %v1852
    %3123 = vmatpush1.msra.mxu0 %v1851
    %3124 = vmatprep.subr.mxu0 %v1858
    %3125 = vmatpush1.msra.mxu0 %v1857
    %3126 = vmatprep.subr.mxu0 %v1864
    %3127 = vmatpush1.msra.mxu0 %v1863
    %3128 = vmatprep.subr.mxu0 %v1870
    %3129 = vmatpush1.msra.mxu0 %v1869
    %3130 = vmatprep.subr.mxu0 %v1876
    %3131 = vmatpush1.msra.mxu0 %v1875
    %3132 = vmatprep.subr.mxu0 %v1882
    %3133 = vmatpush1.msra.mxu0 %v1881
    %3134 = vmatprep.subr.mxu0 %v1888
    %3135 = vmatpush1.msra.mxu0 %v1887
    %3136 = vmatprep.subr.mxu0 %v1894
    %3137 = vmatpush1.msra.mxu0 %v1893
    %3138 = vmatprep.subr.mxu0 %v1900
    %3139 = vmatpush1.msra.mxu0 %v1899
    %3140 = vmatprep.subr.mxu0 %v1906
    %3141 = vmatpush1.msra.mxu0 %v1905
    %3142 = vmatprep.subr.mxu0 %v1912
    %3143 = vmatpush1.msra.mxu0 %v1911
    %3144 = vmatprep.subr.mxu0 %v1918
    %3145 = vmatpush1.msra.mxu0 %v1917
    %3146 = vmatprep.subr.mxu0 %v1924
    %3147 = vmatpush1.msra.mxu0 %v1923
    %3148 = vmatprep.subr.mxu0 %v1930
    %3149 = vmatpush1.msra.mxu0 %v1929
    %3150 = vmatprep.subr.mxu0 %v1936
    %3151 = vmatpush1.msra.mxu0 %v1935
    %3152 = vmatprep.subr.mxu0 %v1942
    %3153 = vmatpush1.msra.mxu0 %v1941
    %3154 = vmatprep.subr.mxu0 %v1948
    %3155 = vmatpush1.msra.mxu0 %v1947
    %3156 = vmatprep.subr.mxu0 %v1954
    %3157 = vmatpush1.msra.mxu0 %v1953
    %3158 = vmatprep.subr.mxu0 %v1960
    %3159 = vmatpush1.msra.mxu0 %v1959
    %3160 = vmatprep.subr.mxu0 %v1966
    %3161 = vmatpush1.msra.mxu0 %v1965
    %3162 = vmatprep.subr.mxu0 %v1972
    %3163 = vmatpush1.msra.mxu0 %v1971
    %3164 = vmatprep.subr.mxu0 %v1978
    %3165 = vmatpush1.msra.mxu0 %v1977
    %3166 = vmatprep.subr.mxu0 %v1984
    %3167 = vmatpush1.msra.mxu0 %v1983
    %3168 = vmatprep.subr.mxu0 %v1990
    %3169 = vmatpush1.msra.mxu0 %v1989
    %3170 = vmatprep.subr.mxu0 %v1996
    %3171 = vmatpush1.msra.mxu0 %v1995
    %3172 = vmatprep.subr.mxu0 %v2002
    %3173 = vmatpush1.msra.mxu0 %v2001
    %3174 = vmatprep.subr.mxu0 %v2008
    %3175 = vmatpush1.msra.mxu0 %v2007
    %3176 = vmatprep.mubr.f32.mxu0 %v3102
    %3177 = vmatmul.mubr.f32.gmra.mrb[0].mxu0 %v3101
    %v3178 = vpop.f32.mrb[0].mxu0
    %v3179 = vadd.f32 %v2029, %v3178
    %v3180 = vpop.f32.mrb[0].mxu0
    %v3181 = vadd.f32 %v2033, %v3180
    %3182 = vdwg.mxu0
    %3183 = vmatprep.subr.mxu0 %v1824
    %3184 = vmatpush1.msra.mxu0 %v1823
    %3185 = vmatprep.subr.mxu0 %v1830
    %3186 = vmatpush1.msra.mxu0 %v1829
    %3187 = vmatprep.subr.mxu0 %v1836
    %3188 = vmatpush1.msra.mxu0 %v1835
    %3189 = vmatprep.subr.mxu0 %v1842
    %3190 = vmatpush1.msra.mxu0 %v1841
    %3191 = vmatprep.subr.mxu0 %v1848
    %3192 = vmatpush1.msra.mxu0 %v1847
    %3193 = vmatprep.subr.mxu0 %v1854
    %3194 = vmatpush1.msra.mxu0 %v1853
    %3195 = vmatprep.subr.mxu0 %v1860
    %3196 = vmatpush1.msra.mxu0 %v1859
    %3197 = vmatprep.subr.mxu0 %v1866
    %3198 = vmatpush1.msra.mxu0 %v1865
    %3199 = vmatprep.subr.mxu0 %v1872
    %3200 = vmatpush1.msra.mxu0 %v1871
    %3201 = vmatprep.subr.mxu0 %v1878
    %3202 = vmatpush1.msra.mxu0 %v1877
    %3203 = vmatprep.subr.mxu0 %v1884
    %3204 = vmatpush1.msra.mxu0 %v1883
    %3205 = vmatprep.subr.mxu0 %v1890
    %3206 = vmatpush1.msra.mxu0 %v1889
    %3207 = vmatprep.subr.mxu0 %v1896
    %3208 = vmatpush1.msra.mxu0 %v1895
    %3209 = vmatprep.subr.mxu0 %v1902
    %3210 = vmatpush1.msra.mxu0 %v1901
    %3211 = vmatprep.subr.mxu0 %v1908
    %3212 = vmatpush1.msra.mxu0 %v1907
    %3213 = vmatprep.subr.mxu0 %v1914
    %3214 = vmatpush1.msra.mxu0 %v1913
    %3215 = vmatprep.subr.mxu0 %v1920
    %3216 = vmatpush1.msra.mxu0 %v1919
    %3217 = vmatprep.subr.mxu0 %v1926
    %3218 = vmatpush1.msra.mxu0 %v1925
    %3219 = vmatprep.subr.mxu0 %v1932
    %3220 = vmatpush1.msra.mxu0 %v1931
    %3221 = vmatprep.subr.mxu0 %v1938
    %3222 = vmatpush1.msra.mxu0 %v1937
    %3223 = vmatprep.subr.mxu0 %v1944
    %3224 = vmatpush1.msra.mxu0 %v1943
    %3225 = vmatprep.subr.mxu0 %v1950
    %3226 = vmatpush1.msra.mxu0 %v1949
    %3227 = vmatprep.subr.mxu0 %v1956
    %3228 = vmatpush1.msra.mxu0 %v1955
    %3229 = vmatprep.subr.mxu0 %v1962
    %3230 = vmatpush1.msra.mxu0 %v1961
    %3231 = vmatprep.subr.mxu0 %v1968
    %3232 = vmatpush1.msra.mxu0 %v1967
    %3233 = vmatprep.subr.mxu0 %v1974
    %3234 = vmatpush1.msra.mxu0 %v1973
    %3235 = vmatprep.subr.mxu0 %v1980
    %3236 = vmatpush1.msra.mxu0 %v1979
    %3237 = vmatprep.subr.mxu0 %v1986
    %3238 = vmatpush1.msra.mxu0 %v1985
    %3239 = vmatprep.subr.mxu0 %v1992
    %3240 = vmatpush1.msra.mxu0 %v1991
    %3241 = vmatprep.subr.mxu0 %v1998
    %3242 = vmatpush1.msra.mxu0 %v1997
    %3243 = vmatprep.subr.mxu0 %v2004
    %3244 = vmatpush1.msra.mxu0 %v2003
    %3245 = vmatprep.subr.mxu0 %v2010
    %3246 = vmatpush1.msra.mxu0 %v2009
    %3247 = vmatprep.mubr.f32.mxu0 %v3102
    %3248 = vmatmul.mubr.f32.gmra.mrb[0].mxu0 %v3101
    %v3249 = vpop.f32.mrb[0].mxu0
    %v3250 = vadd.f32 %v2037, %v3249
    %v3251 = vpop.f32.mrb[0].mxu0
    %v3252 = vadd.f32 %v2041, %v3251
    %3253 = vdwg.mxu0
    %3254 = vmatprep.subr.mxu0 %v1826
    %3255 = vmatpush1.msra.mxu0 %v1825
    %3256 = vmatprep.subr.mxu0 %v1832
    %3257 = vmatpush1.msra.mxu0 %v1831
    %3258 = vmatprep.subr.mxu0 %v1838
    %3259 = vmatpush1.msra.mxu0 %v1837
    %3260 = vmatprep.subr.mxu0 %v1844
    %3261 = vmatpush1.msra.mxu0 %v1843
    %3262 = vmatprep.subr.mxu0 %v1850
    %3263 = vmatpush1.msra.mxu0 %v1849
    %3264 = vmatprep.subr.mxu0 %v1856
    %3265 = vmatpush1.msra.mxu0 %v1855
    %3266 = vmatprep.subr.mxu0 %v1862
    %3267 = vmatpush1.msra.mxu0 %v1861
    %3268 = vmatprep.subr.mxu0 %v1868
    %3269 = vmatpush1.msra.mxu0 %v1867
    %3270 = vmatprep.subr.mxu0 %v1874
    %3271 = vmatpush1.msra.mxu0 %v1873
    %3272 = vmatprep.subr.mxu0 %v1880
    %3273 = vmatpush1.msra.mxu0 %v1879
    %3274 = vmatprep.subr.mxu0 %v1886
    %3275 = vmatpush1.msra.mxu0 %v1885
    %3276 = vmatprep.subr.mxu0 %v1892
    %3277 = vmatpush1.msra.mxu0 %v1891
    %3278 = vmatprep.subr.mxu0 %v1898
    %3279 = vmatpush1.msra.mxu0 %v1897
    %3280 = vmatprep.subr.mxu0 %v1904
    %3281 = vmatpush1.msra.mxu0 %v1903
    %3282 = vmatprep.subr.mxu0 %v1910
    %3283 = vmatpush1.msra.mxu0 %v1909
    %3284 = vmatprep.subr.mxu0 %v1916
    %3285 = vmatpush1.msra.mxu0 %v1915
    %3286 = vmatprep.subr.mxu0 %v1922
    %3287 = vmatpush1.msra.mxu0 %v1921
    %3288 = vmatprep.subr.mxu0 %v1928
    %3289 = vmatpush1.msra.mxu0 %v1927
    %3290 = vmatprep.subr.mxu0 %v1934
    %3291 = vmatpush1.msra.mxu0 %v1933
    %3292 = vmatprep.subr.mxu0 %v1940
    %3293 = vmatpush1.msra.mxu0 %v1939
    %3294 = vmatprep.subr.mxu0 %v1946
    %3295 = vmatpush1.msra.mxu0 %v1945
    %3296 = vmatprep.subr.mxu0 %v1952
    %3297 = vmatpush1.msra.mxu0 %v1951
    %3298 = vmatprep.subr.mxu0 %v1958
    %3299 = vmatpush1.msra.mxu0 %v1957
    %3300 = vmatprep.subr.mxu0 %v1964
    %3301 = vmatpush1.msra.mxu0 %v1963
    %3302 = vmatprep.subr.mxu0 %v1970
    %3303 = vmatpush1.msra.mxu0 %v1969
    %3304 = vmatprep.subr.mxu0 %v1976
    %3305 = vmatpush1.msra.mxu0 %v1975
    %3306 = vmatprep.subr.mxu0 %v1982
    %3307 = vmatpush1.msra.mxu0 %v1981
    %3308 = vmatprep.subr.mxu0 %v1988
    %3309 = vmatpush1.msra.mxu0 %v1987
    %3310 = vmatprep.subr.mxu0 %v1994
    %3311 = vmatpush1.msra.mxu0 %v1993
    %3312 = vmatprep.subr.mxu0 %v2000
    %3313 = vmatpush1.msra.mxu0 %v1999
    %3314 = vmatprep.subr.mxu0 %v2006
    %3315 = vmatpush1.msra.mxu0 %v2005
    %3316 = vmatprep.subr.mxu0 %v2012
    %3317 = vmatpush1.msra.mxu0 %v2011
    %3318 = vmatprep.mubr.f32.mxu0 %v3102
    %3319 = vmatmul.mubr.f32.gmra.mrb[0].mxu0 %v3101
    %v3320 = vpop.f32.mrb[0].mxu0
    %v3321 = vadd.f32 %v2045, %v3320
    %v3322 = vpop.f32.mrb[0].mxu0
    %v3323 = vadd.f32 %v2049, %v3322
    %3324 = vdwg.mxu0
    %v3325 = vadd.f32 %v3106, %v3179
    %v3326 = vadd.f32 %v3107, %v3181
    %v3327 = vxor.u32 %v3325, 2147483648
    %v3328 = vxor.u32 %v3326, 2147483648
    %v3329 = vmul.f32 %v3327, 1.442695
    %v3330 = vpow.pop %v3329
    %v3331 = vmul.f32 %v3328, 1.442695
    %v3332 = vpow.pop %v3331
    %v3333 = vadd.f32 %v3330, 1.0
    %v3334 = vadd.f32 %v3332, 1.0
    %v3335 = vrcp.pop %v3333
    %v3336 = vmul.f32 1.0, %v3335
    %v3337 = vrcp.pop %v3334
    %v3338 = vmul.f32 1.0, %v3337
    %v3339 = vadd.f32 %v3108, %v3250
    %v3340 = vadd.f32 %v3109, %v3252
    %v3341 = vxor.u32 %v3339, 2147483648
    %v3342 = vxor.u32 %v3340, 2147483648
    %v3343 = vmul.f32 %v3341, 1.442695
    %v3344 = vpow.pop %v3343
    %v3345 = vmul.f32 %v3342, 1.442695
    %v3346 = vpow.pop %v3345
    %v3347 = vadd.f32 %v3344, 1.0
    %v3348 = vadd.f32 %v3346, 1.0
    %v3349 = vrcp.pop %v3347
    %v3350 = vmul.f32 1.0, %v3349
    %v3351 = vrcp.pop %v3348
    %v3352 = vmul.f32 1.0, %v3351
    %v3353 = vmul.f32 %v3336, %v3321
    %v3354 = vmul.f32 %v3338, %v3323
    %v3355 = vadd.f32 %v3110, %v3353
    %v3356 = vadd.f32 %v3111, %v3354
    %v3357 = vtanh.pop %v3355
    %v3358 = vtanh.pop %v3356
    %v3359 = vsub.f32 1.0, %v3350
    %v3360 = vsub.f32 1.0, %v3352
    %v3361 = vmul.f32 %v3359, %v3357
    %v3362 = vmul.f32 %v3360, %v3358
    %v3363 = vmul.f32 %v3350, %v3101
    %v3364 = vmul.f32 %v3352, %v3102
    %v3365 = vadd.f32 %v3361, %v3363
    %v3366 = vadd.f32 %v3362, %v3364
    %s3367 = smul.u32 5, 6
    %s3368 = smul.addr %s3367, 8
    %s3369 = scalar_lea.vmem [#allocation2], %s3368
    %v3370 = vld [vmem:[%s3369] sm:$0xff]
    %v3371 = vld [vmem:[%s3369 + $0x8] sm:$0xff]
    %v3372 = vld [vmem:[%s3369 + $0x10] sm:$0xff]
    %v3373 = vld [vmem:[%s3369 + $0x18] sm:$0xff]
    %v3374 = vld [vmem:[%s3369 + $0x20] sm:$0xff]
    %v3375 = vld [vmem:[%s3369 + $0x28] sm:$0xff]
    %3376 = vmatprep.subr.mxu0 %v1822
    %3377 = vmatpush1.msra.mxu0 %v1821
    %3378 = vmatprep.subr.mxu0 %v1828
    %3379 = vmatpush1.msra.mxu0 %v1827
    %3380 = vmatprep.subr.mxu0 %v1834
    %3381 = vmatpush1.msra.mxu0 %v1833
    %3382 = vmatprep.subr.mxu0 %v1840
    %3383 = vmatpush1.msra.mxu0 %v1839
    %3384 = vmatprep.subr.mxu0 %v1846
    %3385 = vmatpush1.msra.mxu0 %v1845
    %3386 = vmatprep.subr.mxu0 %v1852
    %3387 = vmatpush1.msra.mxu0 %v1851
    %3388 = vmatprep.subr.mxu0 %v1858
    %3389 = vmatpush1.msra.mxu0 %v1857
    %3390 = vmatprep.subr.mxu0 %v1864
    %3391 = vmatpush1.msra.mxu0 %v1863
    %3392 = vmatprep.subr.mxu0 %v1870
    %3393 = vmatpush1.msra.mxu0 %v1869
    %3394 = vmatprep.subr.mxu0 %v1876
    %3395 = vmatpush1.msra.mxu0 %v1875
    %3396 = vmatprep.subr.mxu0 %v1882
    %3397 = vmatpush1.msra.mxu0 %v1881
    %3398 = vmatprep.subr.mxu0 %v1888
    %3399 = vmatpush1.msra.mxu0 %v1887
    %3400 = vmatprep.subr.mxu0 %v1894
    %3401 = vmatpush1.msra.mxu0 %v1893
    %3402 = vmatprep.subr.mxu0 %v1900
    %3403 = vmatpush1.msra.mxu0 %v1899
    %3404 = vmatprep.subr.mxu0 %v1906
    %3405 = vmatpush1.msra.mxu0 %v1905
    %3406 = vmatprep.subr.mxu0 %v1912
    %3407 = vmatpush1.msra.mxu0 %v1911
    %3408 = vmatprep.subr.mxu0 %v1918
    %3409 = vmatpush1.msra.mxu0 %v1917
    %3410 = vmatprep.subr.mxu0 %v1924
    %3411 = vmatpush1.msra.mxu0 %v1923
    %3412 = vmatprep.subr.mxu0 %v1930
    %3413 = vmatpush1.msra.mxu0 %v1929
    %3414 = vmatprep.subr.mxu0 %v1936
    %3415 = vmatpush1.msra.mxu0 %v1935
    %3416 = vmatprep.subr.mxu0 %v1942
    %3417 = vmatpush1.msra.mxu0 %v1941
    %3418 = vmatprep.subr.mxu0 %v1948
    %3419 = vmatpush1.msra.mxu0 %v1947
    %3420 = vmatprep.subr.mxu0 %v1954
    %3421 = vmatpush1.msra.mxu0 %v1953
    %3422 = vmatprep.subr.mxu0 %v1960
    %3423 = vmatpush1.msra.mxu0 %v1959
    %3424 = vmatprep.subr.mxu0 %v1966
    %3425 = vmatpush1.msra.mxu0 %v1965
    %3426 = vmatprep.subr.mxu0 %v1972
    %3427 = vmatpush1.msra.mxu0 %v1971
    %3428 = vmatprep.subr.mxu0 %v1978
    %3429 = vmatpush1.msra.mxu0 %v1977
    %3430 = vmatprep.subr.mxu0 %v1984
    %3431 = vmatpush1.msra.mxu0 %v1983
    %3432 = vmatprep.subr.mxu0 %v1990
    %3433 = vmatpush1.msra.mxu0 %v1989
    %3434 = vmatprep.subr.mxu0 %v1996
    %3435 = vmatpush1.msra.mxu0 %v1995
    %3436 = vmatprep.subr.mxu0 %v2002
    %3437 = vmatpush1.msra.mxu0 %v2001
    %3438 = vmatprep.subr.mxu0 %v2008
    %3439 = vmatpush1.msra.mxu0 %v2007
    %3440 = vmatprep.mubr.f32.mxu0 %v3366
    %3441 = vmatmul.mubr.f32.gmra.mrb[0].mxu0 %v3365
    %v3442 = vpop.f32.mrb[0].mxu0
    %v3443 = vadd.f32 %v2029, %v3442
    %v3444 = vpop.f32.mrb[0].mxu0
    %v3445 = vadd.f32 %v2033, %v3444
    %3446 = vdwg.mxu0
    %3447 = vmatprep.subr.mxu0 %v1824
    %3448 = vmatpush1.msra.mxu0 %v1823
    %3449 = vmatprep.subr.mxu0 %v1830
    %3450 = vmatpush1.msra.mxu0 %v1829
    %3451 = vmatprep.subr.mxu0 %v1836
    %3452 = vmatpush1.msra.mxu0 %v1835
    %3453 = vmatprep.subr.mxu0 %v1842
    %3454 = vmatpush1.msra.mxu0 %v1841
    %3455 = vmatprep.subr.mxu0 %v1848
    %3456 = vmatpush1.msra.mxu0 %v1847
    %3457 = vmatprep.subr.mxu0 %v1854
    %3458 = vmatpush1.msra.mxu0 %v1853
    %3459 = vmatprep.subr.mxu0 %v1860
    %3460 = vmatpush1.msra.mxu0 %v1859
    %3461 = vmatprep.subr.mxu0 %v1866
    %3462 = vmatpush1.msra.mxu0 %v1865
    %3463 = vmatprep.subr.mxu0 %v1872
    %3464 = vmatpush1.msra.mxu0 %v1871
    %3465 = vmatprep.subr.mxu0 %v1878
    %3466 = vmatpush1.msra.mxu0 %v1877
    %3467 = vmatprep.subr.mxu0 %v1884
    %3468 = vmatpush1.msra.mxu0 %v1883
    %3469 = vmatprep.subr.mxu0 %v1890
    %3470 = vmatpush1.msra.mxu0 %v1889
    %3471 = vmatprep.subr.mxu0 %v1896
    %3472 = vmatpush1.msra.mxu0 %v1895
    %3473 = vmatprep.subr.mxu0 %v1902
    %3474 = vmatpush1.msra.mxu0 %v1901
    %3475 = vmatprep.subr.mxu0 %v1908
    %3476 = vmatpush1.msra.mxu0 %v1907
    %3477 = vmatprep.subr.mxu0 %v1914
    %3478 = vmatpush1.msra.mxu0 %v1913
    %3479 = vmatprep.subr.mxu0 %v1920
    %3480 = vmatpush1.msra.mxu0 %v1919
    %3481 = vmatprep.subr.mxu0 %v1926
    %3482 = vmatpush1.msra.mxu0 %v1925
    %3483 = vmatprep.subr.mxu0 %v1932
    %3484 = vmatpush1.msra.mxu0 %v1931
    %3485 = vmatprep.subr.mxu0 %v1938
    %3486 = vmatpush1.msra.mxu0 %v1937
    %3487 = vmatprep.subr.mxu0 %v1944
    %3488 = vmatpush1.msra.mxu0 %v1943
    %3489 = vmatprep.subr.mxu0 %v1950
    %3490 = vmatpush1.msra.mxu0 %v1949
    %3491 = vmatprep.subr.mxu0 %v1956
    %3492 = vmatpush1.msra.mxu0 %v1955
    %3493 = vmatprep.subr.mxu0 %v1962
    %3494 = vmatpush1.msra.mxu0 %v1961
    %3495 = vmatprep.subr.mxu0 %v1968
    %3496 = vmatpush1.msra.mxu0 %v1967
    %3497 = vmatprep.subr.mxu0 %v1974
    %3498 = vmatpush1.msra.mxu0 %v1973
    %3499 = vmatprep.subr.mxu0 %v1980
    %3500 = vmatpush1.msra.mxu0 %v1979
    %3501 = vmatprep.subr.mxu0 %v1986
    %3502 = vmatpush1.msra.mxu0 %v1985
    %3503 = vmatprep.subr.mxu0 %v1992
    %3504 = vmatpush1.msra.mxu0 %v1991
    %3505 = vmatprep.subr.mxu0 %v1998
    %3506 = vmatpush1.msra.mxu0 %v1997
    %3507 = vmatprep.subr.mxu0 %v2004
    %3508 = vmatpush1.msra.mxu0 %v2003
    %3509 = vmatprep.subr.mxu0 %v2010
    %3510 = vmatpush1.msra.mxu0 %v2009
    %3511 = vmatprep.mubr.f32.mxu0 %v3366
    %3512 = vmatmul.mubr.f32.gmra.mrb[0].mxu0 %v3365
    %v3513 = vpop.f32.mrb[0].mxu0
    %v3514 = vadd.f32 %v2037, %v3513
    %v3515 = vpop.f32.mrb[0].mxu0
    %v3516 = vadd.f32 %v2041, %v3515
    %3517 = vdwg.mxu0
    %3518 = vmatprep.subr.mxu0 %v1826
    %3519 = vmatpush1.msra.mxu0 %v1825
    %3520 = vmatprep.subr.mxu0 %v1832
    %3521 = vmatpush1.msra.mxu0 %v1831
    %3522 = vmatprep.subr.mxu0 %v1838
    %3523 = vmatpush1.msra.mxu0 %v1837
    %3524 = vmatprep.subr.mxu0 %v1844
    %3525 = vmatpush1.msra.mxu0 %v1843
    %3526 = vmatprep.subr.mxu0 %v1850
    %3527 = vmatpush1.msra.mxu0 %v1849
    %3528 = vmatprep.subr.mxu0 %v1856
    %3529 = vmatpush1.msra.mxu0 %v1855
    %3530 = vmatprep.subr.mxu0 %v1862
    %3531 = vmatpush1.msra.mxu0 %v1861
    %3532 = vmatprep.subr.mxu0 %v1868
    %3533 = vmatpush1.msra.mxu0 %v1867
    %3534 = vmatprep.subr.mxu0 %v1874
    %3535 = vmatpush1.msra.mxu0 %v1873
    %3536 = vmatprep.subr.mxu0 %v1880
    %3537 = vmatpush1.msra.mxu0 %v1879
    %3538 = vmatprep.subr.mxu0 %v1886
    %3539 = vmatpush1.msra.mxu0 %v1885
    %3540 = vmatprep.subr.mxu0 %v1892
    %3541 = vmatpush1.msra.mxu0 %v1891
    %3542 = vmatprep.subr.mxu0 %v1898
    %3543 = vmatpush1.msra.mxu0 %v1897
    %3544 = vmatprep.subr.mxu0 %v1904
    %3545 = vmatpush1.msra.mxu0 %v1903
    %3546 = vmatprep.subr.mxu0 %v1910
    %3547 = vmatpush1.msra.mxu0 %v1909
    %3548 = vmatprep.subr.mxu0 %v1916
    %3549 = vmatpush1.msra.mxu0 %v1915
    %3550 = vmatprep.subr.mxu0 %v1922
    %3551 = vmatpush1.msra.mxu0 %v1921
    %3552 = vmatprep.subr.mxu0 %v1928
    %3553 = vmatpush1.msra.mxu0 %v1927
    %3554 = vmatprep.subr.mxu0 %v1934
    %3555 = vmatpush1.msra.mxu0 %v1933
    %3556 = vmatprep.subr.mxu0 %v1940
    %3557 = vmatpush1.msra.mxu0 %v1939
    %3558 = vmatprep.subr.mxu0 %v1946
    %3559 = vmatpush1.msra.mxu0 %v1945
    %3560 = vmatprep.subr.mxu0 %v1952
    %3561 = vmatpush1.msra.mxu0 %v1951
    %3562 = vmatprep.subr.mxu0 %v1958
    %3563 = vmatpush1.msra.mxu0 %v1957
    %3564 = vmatprep.subr.mxu0 %v1964
    %3565 = vmatpush1.msra.mxu0 %v1963
    %3566 = vmatprep.subr.mxu0 %v1970
    %3567 = vmatpush1.msra.mxu0 %v1969
    %3568 = vmatprep.subr.mxu0 %v1976
    %3569 = vmatpush1.msra.mxu0 %v1975
    %3570 = vmatprep.subr.mxu0 %v1982
    %3571 = vmatpush1.msra.mxu0 %v1981
    %3572 = vmatprep.subr.mxu0 %v1988
    %3573 = vmatpush1.msra.mxu0 %v1987
    %3574 = vmatprep.subr.mxu0 %v1994
    %3575 = vmatpush1.msra.mxu0 %v1993
    %3576 = vmatprep.subr.mxu0 %v2000
    %3577 = vmatpush1.msra.mxu0 %v1999
    %3578 = vmatprep.subr.mxu0 %v2006
    %3579 = vmatpush1.msra.mxu0 %v2005
    %3580 = vmatprep.subr.mxu0 %v2012
    %3581 = vmatpush1.msra.mxu0 %v2011
    %3582 = vmatprep.mubr.f32.mxu0 %v3366
    %3583 = vmatmul.mubr.f32.gmra.mrb[0].mxu0 %v3365
    %v3584 = vpop.f32.mrb[0].mxu0
    %v3585 = vadd.f32 %v2045, %v3584
    %v3586 = vpop.f32.mrb[0].mxu0
    %v3587 = vadd.f32 %v2049, %v3586
    %3588 = vdwg.mxu0
    %v3589 = vadd.f32 %v3370, %v3443
    %v3590 = vadd.f32 %v3371, %v3445
    %v3591 = vxor.u32 %v3589, 2147483648
    %v3592 = vxor.u32 %v3590, 2147483648
    %v3593 = vmul.f32 %v3591, 1.442695
    %v3594 = vpow.pop %v3593
    %v3595 = vmul.f32 %v3592, 1.442695
    %v3596 = vpow.pop %v3595
    %v3597 = vadd.f32 %v3594, 1.0
    %v3598 = vadd.f32 %v3596, 1.0
    %v3599 = vrcp.pop %v3597
    %v3600 = vmul.f32 1.0, %v3599
    %v3601 = vrcp.pop %v3598
    %v3602 = vmul.f32 1.0, %v3601
    %v3603 = vadd.f32 %v3372, %v3514
    %v3604 = vadd.f32 %v3373, %v3516
    %v3605 = vxor.u32 %v3603, 2147483648
    %v3606 = vxor.u32 %v3604, 2147483648
    %v3607 = vmul.f32 %v3605, 1.442695
    %v3608 = vpow.pop %v3607
    %v3609 = vmul.f32 %v3606, 1.442695
    %v3610 = vpow.pop %v3609
    %v3611 = vadd.f32 %v3608, 1.0
    %v3612 = vadd.f32 %v3610, 1.0
    %v3613 = vrcp.pop %v3611
    %v3614 = vmul.f32 1.0, %v3613
    %v3615 = vrcp.pop %v3612
    %v3616 = vmul.f32 1.0, %v3615
    %v3617 = vmul.f32 %v3600, %v3585
    %v3618 = vmul.f32 %v3602, %v3587
    %v3619 = vadd.f32 %v3374, %v3617
    %v3620 = vadd.f32 %v3375, %v3618
    %v3621 = vtanh.pop %v3619
    %v3622 = vtanh.pop %v3620
    %v3623 = vsub.f32 1.0, %v3614
    %v3624 = vsub.f32 1.0, %v3616
    %v3625 = vmul.f32 %v3623, %v3621
    %v3626 = vmul.f32 %v3624, %v3622
    %v3627 = vmul.f32 %v3614, %v3365
    %v3628 = vmul.f32 %v3616, %v3366
    %v3629 = vadd.f32 %v3625, %v3627
    %v3630 = vadd.f32 %v3626, %v3628
    %s3631 = smul.u32 6, 6
    %s3632 = smul.addr %s3631, 8
    %s3633 = scalar_lea.vmem [#allocation2], %s3632
    %v3634 = vld [vmem:[%s3633] sm:$0xff]
    %v3635 = vld [vmem:[%s3633 + $0x8] sm:$0xff]
    %v3636 = vld [vmem:[%s3633 + $0x10] sm:$0xff]
    %v3637 = vld [vmem:[%s3633 + $0x18] sm:$0xff]
    %v3638 = vld [vmem:[%s3633 + $0x20] sm:$0xff]
    %v3639 = vld [vmem:[%s3633 + $0x28] sm:$0xff]
    %3640 = vmatprep.subr.mxu0 %v1822
    %3641 = vmatpush1.msra.mxu0 %v1821
    %3642 = vmatprep.subr.mxu0 %v1828
    %3643 = vmatpush1.msra.mxu0 %v1827
    %3644 = vmatprep.subr.mxu0 %v1834
    %3645 = vmatpush1.msra.mxu0 %v1833
    %3646 = vmatprep.subr.mxu0 %v1840
    %3647 = vmatpush1.msra.mxu0 %v1839
    %3648 = vmatprep.subr.mxu0 %v1846
    %3649 = vmatpush1.msra.mxu0 %v1845
    %3650 = vmatprep.subr.mxu0 %v1852
    %3651 = vmatpush1.msra.mxu0 %v1851
    %3652 = vmatprep.subr.mxu0 %v1858
    %3653 = vmatpush1.msra.mxu0 %v1857
    %3654 = vmatprep.subr.mxu0 %v1864
    %3655 = vmatpush1.msra.mxu0 %v1863
    %3656 = vmatprep.subr.mxu0 %v1870
    %3657 = vmatpush1.msra.mxu0 %v1869
    %3658 = vmatprep.subr.mxu0 %v1876
    %3659 = vmatpush1.msra.mxu0 %v1875
    %3660 = vmatprep.subr.mxu0 %v1882
    %3661 = vmatpush1.msra.mxu0 %v1881
    %3662 = vmatprep.subr.mxu0 %v1888
    %3663 = vmatpush1.msra.mxu0 %v1887
    %3664 = vmatprep.subr.mxu0 %v1894
    %3665 = vmatpush1.msra.mxu0 %v1893
    %3666 = vmatprep.subr.mxu0 %v1900
    %3667 = vmatpush1.msra.mxu0 %v1899
    %3668 = vmatprep.subr.mxu0 %v1906
    %3669 = vmatpush1.msra.mxu0 %v1905
    %3670 = vmatprep.subr.mxu0 %v1912
    %3671 = vmatpush1.msra.mxu0 %v1911
    %3672 = vmatprep.subr.mxu0 %v1918
    %3673 = vmatpush1.msra.mxu0 %v1917
    %3674 = vmatprep.subr.mxu0 %v1924
    %3675 = vmatpush1.msra.mxu0 %v1923
    %3676 = vmatprep.subr.mxu0 %v1930
    %3677 = vmatpush1.msra.mxu0 %v1929
    %3678 = vmatprep.subr.mxu0 %v1936
    %3679 = vmatpush1.msra.mxu0 %v1935
    %3680 = vmatprep.subr.mxu0 %v1942
    %3681 = vmatpush1.msra.mxu0 %v1941
    %3682 = vmatprep.subr.mxu0 %v1948
    %3683 = vmatpush1.msra.mxu0 %v1947
    %3684 = vmatprep.subr.mxu0 %v1954
    %3685 = vmatpush1.msra.mxu0 %v1953
    %3686 = vmatprep.subr.mxu0 %v1960
    %3687 = vmatpush1.msra.mxu0 %v1959
    %3688 = vmatprep.subr.mxu0 %v1966
    %3689 = vmatpush1.msra.mxu0 %v1965
    %3690 = vmatprep.subr.mxu0 %v1972
    %3691 = vmatpush1.msra.mxu0 %v1971
    %3692 = vmatprep.subr.mxu0 %v1978
    %3693 = vmatpush1.msra.mxu0 %v1977
    %3694 = vmatprep.subr.mxu0 %v1984
    %3695 = vmatpush1.msra.mxu0 %v1983
    %3696 = vmatprep.subr.mxu0 %v1990
    %3697 = vmatpush1.msra.mxu0 %v1989
    %3698 = vmatprep.subr.mxu0 %v1996
    %3699 = vmatpush1.msra.mxu0 %v1995
    %3700 = vmatprep.subr.mxu0 %v2002
    %3701 = vmatpush1.msra.mxu0 %v2001
    %3702 = vmatprep.subr.mxu0 %v2008
    %3703 = vmatpush1.msra.mxu0 %v2007
    %3704 = vmatprep.mubr.f32.mxu0 %v3630
    %3705 = vmatmul.mubr.f32.gmra.mrb[0].mxu0 %v3629
    %v3706 = vpop.f32.mrb[0].mxu0
    %v3707 = vadd.f32 %v2029, %v3706
    %v3708 = vpop.f32.mrb[0].mxu0
    %v3709 = vadd.f32 %v2033, %v3708
    %3710 = vdwg.mxu0
    %3711 = vmatprep.subr.mxu0 %v1824
    %3712 = vmatpush1.msra.mxu0 %v1823
    %3713 = vmatprep.subr.mxu0 %v1830
    %3714 = vmatpush1.msra.mxu0 %v1829
    %3715 = vmatprep.subr.mxu0 %v1836
    %3716 = vmatpush1.msra.mxu0 %v1835
    %3717 = vmatprep.subr.mxu0 %v1842
    %3718 = vmatpush1.msra.mxu0 %v1841
    %3719 = vmatprep.subr.mxu0 %v1848
    %3720 = vmatpush1.msra.mxu0 %v1847
    %3721 = vmatprep.subr.mxu0 %v1854
    %3722 = vmatpush1.msra.mxu0 %v1853
    %3723 = vmatprep.subr.mxu0 %v1860
    %3724 = vmatpush1.msra.mxu0 %v1859
    %3725 = vmatprep.subr.mxu0 %v1866
    %3726 = vmatpush1.msra.mxu0 %v1865
    %3727 = vmatprep.subr.mxu0 %v1872
    %3728 = vmatpush1.msra.mxu0 %v1871
    %3729 = vmatprep.subr.mxu0 %v1878
    %3730 = vmatpush1.msra.mxu0 %v1877
    %3731 = vmatprep.subr.mxu0 %v1884
    %3732 = vmatpush1.msra.mxu0 %v1883
    %3733 = vmatprep.subr.mxu0 %v1890
    %3734 = vmatpush1.msra.mxu0 %v1889
    %3735 = vmatprep.subr.mxu0 %v1896
    %3736 = vmatpush1.msra.mxu0 %v1895
    %3737 = vmatprep.subr.mxu0 %v1902
    %3738 = vmatpush1.msra.mxu0 %v1901
    %3739 = vmatprep.subr.mxu0 %v1908
    %3740 = vmatpush1.msra.mxu0 %v1907
    %3741 = vmatprep.subr.mxu0 %v1914
    %3742 = vmatpush1.msra.mxu0 %v1913
    %3743 = vmatprep.subr.mxu0 %v1920
    %3744 = vmatpush1.msra.mxu0 %v1919
    %3745 = vmatprep.subr.mxu0 %v1926
    %3746 = vmatpush1.msra.mxu0 %v1925
    %3747 = vmatprep.subr.mxu0 %v1932
    %3748 = vmatpush1.msra.mxu0 %v1931
    %3749 = vmatprep.subr.mxu0 %v1938
    %3750 = vmatpush1.msra.mxu0 %v1937
    %3751 = vmatprep.subr.mxu0 %v1944
    %3752 = vmatpush1.msra.mxu0 %v1943
    %3753 = vmatprep.subr.mxu0 %v1950
    %3754 = vmatpush1.msra.mxu0 %v1949
    %3755 = vmatprep.subr.mxu0 %v1956
    %3756 = vmatpush1.msra.mxu0 %v1955
    %3757 = vmatprep.subr.mxu0 %v1962
    %3758 = vmatpush1.msra.mxu0 %v1961
    %3759 = vmatprep.subr.mxu0 %v1968
    %3760 = vmatpush1.msra.mxu0 %v1967
    %3761 = vmatprep.subr.mxu0 %v1974
    %3762 = vmatpush1.msra.mxu0 %v1973
    %3763 = vmatprep.subr.mxu0 %v1980
    %3764 = vmatpush1.msra.mxu0 %v1979
    %3765 = vmatprep.subr.mxu0 %v1986
    %3766 = vmatpush1.msra.mxu0 %v1985
    %3767 = vmatprep.subr.mxu0 %v1992
    %3768 = vmatpush1.msra.mxu0 %v1991
    %3769 = vmatprep.subr.mxu0 %v1998
    %3770 = vmatpush1.msra.mxu0 %v1997
    %3771 = vmatprep.subr.mxu0 %v2004
    %3772 = vmatpush1.msra.mxu0 %v2003
    %3773 = vmatprep.subr.mxu0 %v2010
    %3774 = vmatpush1.msra.mxu0 %v2009
    %3775 = vmatprep.mubr.f32.mxu0 %v3630
    %3776 = vmatmul.mubr.f32.gmra.mrb[0].mxu0 %v3629
    %v3777 = vpop.f32.mrb[0].mxu0
    %v3778 = vadd.f32 %v2037, %v3777
    %v3779 = vpop.f32.mrb[0].mxu0
    %v3780 = vadd.f32 %v2041, %v3779
    %3781 = vdwg.mxu0
    %3782 = vmatprep.subr.mxu0 %v1826
    %3783 = vmatpush1.msra.mxu0 %v1825
    %3784 = vmatprep.subr.mxu0 %v1832
    %3785 = vmatpush1.msra.mxu0 %v1831
    %3786 = vmatprep.subr.mxu0 %v1838
    %3787 = vmatpush1.msra.mxu0 %v1837
    %3788 = vmatprep.subr.mxu0 %v1844
    %3789 = vmatpush1.msra.mxu0 %v1843
    %3790 = vmatprep.subr.mxu0 %v1850
    %3791 = vmatpush1.msra.mxu0 %v1849
    %3792 = vmatprep.subr.mxu0 %v1856
    %3793 = vmatpush1.msra.mxu0 %v1855
    %3794 = vmatprep.subr.mxu0 %v1862
    %3795 = vmatpush1.msra.mxu0 %v1861
    %3796 = vmatprep.subr.mxu0 %v1868
    %3797 = vmatpush1.msra.mxu0 %v1867
    %3798 = vmatprep.subr.mxu0 %v1874
    %3799 = vmatpush1.msra.mxu0 %v1873
    %3800 = vmatprep.subr.mxu0 %v1880
    %3801 = vmatpush1.msra.mxu0 %v1879
    %3802 = vmatprep.subr.mxu0 %v1886
    %3803 = vmatpush1.msra.mxu0 %v1885
    %3804 = vmatprep.subr.mxu0 %v1892
    %3805 = vmatpush1.msra.mxu0 %v1891
    %3806 = vmatprep.subr.mxu0 %v1898
    %3807 = vmatpush1.msra.mxu0 %v1897
    %3808 = vmatprep.subr.mxu0 %v1904
    %3809 = vmatpush1.msra.mxu0 %v1903
    %3810 = vmatprep.subr.mxu0 %v1910
    %3811 = vmatpush1.msra.mxu0 %v1909
    %3812 = vmatprep.subr.mxu0 %v1916
    %3813 = vmatpush1.msra.mxu0 %v1915
    %3814 = vmatprep.subr.mxu0 %v1922
    %3815 = vmatpush1.msra.mxu0 %v1921
    %3816 = vmatprep.subr.mxu0 %v1928
    %3817 = vmatpush1.msra.mxu0 %v1927
    %3818 = vmatprep.subr.mxu0 %v1934
    %3819 = vmatpush1.msra.mxu0 %v1933
    %3820 = vmatprep.subr.mxu0 %v1940
    %3821 = vmatpush1.msra.mxu0 %v1939
    %3822 = vmatprep.subr.mxu0 %v1946
    %3823 = vmatpush1.msra.mxu0 %v1945
    %3824 = vmatprep.subr.mxu0 %v1952
    %3825 = vmatpush1.msra.mxu0 %v1951
    %3826 = vmatprep.subr.mxu0 %v1958
    %3827 = vmatpush1.msra.mxu0 %v1957
    %3828 = vmatprep.subr.mxu0 %v1964
    %3829 = vmatpush1.msra.mxu0 %v1963
    %3830 = vmatprep.subr.mxu0 %v1970
    %3831 = vmatpush1.msra.mxu0 %v1969
    %3832 = vmatprep.subr.mxu0 %v1976
    %3833 = vmatpush1.msra.mxu0 %v1975
    %3834 = vmatprep.subr.mxu0 %v1982
    %3835 = vmatpush1.msra.mxu0 %v1981
    %3836 = vmatprep.subr.mxu0 %v1988
    %3837 = vmatpush1.msra.mxu0 %v1987
    %3838 = vmatprep.subr.mxu0 %v1994
    %3839 = vmatpush1.msra.mxu0 %v1993
    %3840 = vmatprep.subr.mxu0 %v2000
    %3841 = vmatpush1.msra.mxu0 %v1999
    %3842 = vmatprep.subr.mxu0 %v2006
    %3843 = vmatpush1.msra.mxu0 %v2005
    %3844 = vmatprep.subr.mxu0 %v2012
    %3845 = vmatpush1.msra.mxu0 %v2011
    %3846 = vmatprep.mubr.f32.mxu0 %v3630
    %3847 = vmatmul.mubr.f32.gmra.mrb[0].mxu0 %v3629
    %v3848 = vpop.f32.mrb[0].mxu0
    %v3849 = vadd.f32 %v2045, %v3848
    %v3850 = vpop.f32.mrb[0].mxu0
    %v3851 = vadd.f32 %v2049, %v3850
    %3852 = vdwg.mxu0
    %v3853 = vadd.f32 %v3634, %v3707
    %v3854 = vadd.f32 %v3635, %v3709
    %v3855 = vxor.u32 %v3853, 2147483648
    %v3856 = vxor.u32 %v3854, 2147483648
    %v3857 = vmul.f32 %v3855, 1.442695
    %v3858 = vpow.pop %v3857
    %v3859 = vmul.f32 %v3856, 1.442695
    %v3860 = vpow.pop %v3859
    %v3861 = vadd.f32 %v3858, 1.0
    %v3862 = vadd.f32 %v3860, 1.0
    %v3863 = vrcp.pop %v3861
    %v3864 = vmul.f32 1.0, %v3863
    %v3865 = vrcp.pop %v3862
    %v3866 = vmul.f32 1.0, %v3865
    %v3867 = vadd.f32 %v3636, %v3778
    %v3868 = vadd.f32 %v3637, %v3780
    %v3869 = vxor.u32 %v3867, 2147483648
    %v3870 = vxor.u32 %v3868, 2147483648
    %v3871 = vmul.f32 %v3869, 1.442695
    %v3872 = vpow.pop %v3871
    %v3873 = vmul.f32 %v3870, 1.442695
    %v3874 = vpow.pop %v3873
    %v3875 = vadd.f32 %v3872, 1.0
    %v3876 = vadd.f32 %v3874, 1.0
    %v3877 = vrcp.pop %v3875
    %v3878 = vmul.f32 1.0, %v3877
    %v3879 = vrcp.pop %v3876
    %v3880 = vmul.f32 1.0, %v3879
    %v3881 = vmul.f32 %v3864, %v3849
    %v3882 = vmul.f32 %v3866, %v3851
    %v3883 = vadd.f32 %v3638, %v3881
    %v3884 = vadd.f32 %v3639, %v3882
    %v3885 = vtanh.pop %v3883
    %v3886 = vtanh.pop %v3884
    %v3887 = vsub.f32 1.0, %v3878
    %v3888 = vsub.f32 1.0, %v3880
    %v3889 = vmul.f32 %v3887, %v3885
    %v3890 = vmul.f32 %v3888, %v3886
    %v3891 = vmul.f32 %v3878, %v3629
    %v3892 = vmul.f32 %v3880, %v3630
    %v3893 = vadd.f32 %v3889, %v3891
    %v3894 = vadd.f32 %v3890, %v3892
    %s3895 = smul.u32 7, 6
    %s3896 = smul.addr %s3895, 8
    %s3897 = scalar_lea.vmem [#allocation2], %s3896
    %v3898 = vld [vmem:[%s3897] sm:$0xff]
    %v3899 = vld [vmem:[%s3897 + $0x8] sm:$0xff]
    %v3900 = vld [vmem:[%s3897 + $0x10] sm:$0xff]
    %v3901 = vld [vmem:[%s3897 + $0x18] sm:$0xff]
    %v3902 = vld [vmem:[%s3897 + $0x20] sm:$0xff]
    %v3903 = vld [vmem:[%s3897 + $0x28] sm:$0xff]
    %3904 = vmatprep.subr.mxu0 %v1822
    %3905 = vmatpush1.msra.mxu0 %v1821
    %3906 = vmatprep.subr.mxu0 %v1828
    %3907 = vmatpush1.msra.mxu0 %v1827
    %3908 = vmatprep.subr.mxu0 %v1834
    %3909 = vmatpush1.msra.mxu0 %v1833
    %3910 = vmatprep.subr.mxu0 %v1840
    %3911 = vmatpush1.msra.mxu0 %v1839
    %3912 = vmatprep.subr.mxu0 %v1846
    %3913 = vmatpush1.msra.mxu0 %v1845
    %3914 = vmatprep.subr.mxu0 %v1852
    %3915 = vmatpush1.msra.mxu0 %v1851
    %3916 = vmatprep.subr.mxu0 %v1858
    %3917 = vmatpush1.msra.mxu0 %v1857
    %3918 = vmatprep.subr.mxu0 %v1864
    %3919 = vmatpush1.msra.mxu0 %v1863
    %3920 = vmatprep.subr.mxu0 %v1870
    %3921 = vmatpush1.msra.mxu0 %v1869
    %3922 = vmatprep.subr.mxu0 %v1876
    %3923 = vmatpush1.msra.mxu0 %v1875
    %3924 = vmatprep.subr.mxu0 %v1882
    %3925 = vmatpush1.msra.mxu0 %v1881
    %3926 = vmatprep.subr.mxu0 %v1888
    %3927 = vmatpush1.msra.mxu0 %v1887
    %3928 = vmatprep.subr.mxu0 %v1894
    %3929 = vmatpush1.msra.mxu0 %v1893
    %3930 = vmatprep.subr.mxu0 %v1900
    %3931 = vmatpush1.msra.mxu0 %v1899
    %3932 = vmatprep.subr.mxu0 %v1906
    %3933 = vmatpush1.msra.mxu0 %v1905
    %3934 = vmatprep.subr.mxu0 %v1912
    %3935 = vmatpush1.msra.mxu0 %v1911
    %3936 = vmatprep.subr.mxu0 %v1918
    %3937 = vmatpush1.msra.mxu0 %v1917
    %3938 = vmatprep.subr.mxu0 %v1924
    %3939 = vmatpush1.msra.mxu0 %v1923
    %3940 = vmatprep.subr.mxu0 %v1930
    %3941 = vmatpush1.msra.mxu0 %v1929
    %3942 = vmatprep.subr.mxu0 %v1936
    %3943 = vmatpush1.msra.mxu0 %v1935
    %3944 = vmatprep.subr.mxu0 %v1942
    %3945 = vmatpush1.msra.mxu0 %v1941
    %3946 = vmatprep.subr.mxu0 %v1948
    %3947 = vmatpush1.msra.mxu0 %v1947
    %3948 = vmatprep.subr.mxu0 %v1954
    %3949 = vmatpush1.msra.mxu0 %v1953
    %3950 = vmatprep.subr.mxu0 %v1960
    %3951 = vmatpush1.msra.mxu0 %v1959
    %3952 = vmatprep.subr.mxu0 %v1966
    %3953 = vmatpush1.msra.mxu0 %v1965
    %3954 = vmatprep.subr.mxu0 %v1972
    %3955 = vmatpush1.msra.mxu0 %v1971
    %3956 = vmatprep.subr.mxu0 %v1978
    %3957 = vmatpush1.msra.mxu0 %v1977
    %3958 = vmatprep.subr.mxu0 %v1984
    %3959 = vmatpush1.msra.mxu0 %v1983
    %3960 = vmatprep.subr.mxu0 %v1990
    %3961 = vmatpush1.msra.mxu0 %v1989
    %3962 = vmatprep.subr.mxu0 %v1996
    %3963 = vmatpush1.msra.mxu0 %v1995
    %3964 = vmatprep.subr.mxu0 %v2002
    %3965 = vmatpush1.msra.mxu0 %v2001
    %3966 = vmatprep.subr.mxu0 %v2008
    %3967 = vmatpush1.msra.mxu0 %v2007
    %3968 = vmatprep.mubr.f32.mxu0 %v3894
    %3969 = vmatmul.mubr.f32.gmra.mrb[0].mxu0 %v3893
    %v3970 = vpop.f32.mrb[0].mxu0
    %v3971 = vadd.f32 %v2029, %v3970
    %v3972 = vpop.f32.mrb[0].mxu0
    %v3973 = vadd.f32 %v2033, %v3972
    %3974 = vdwg.mxu0
    %3975 = vmatprep.subr.mxu0 %v1824
    %3976 = vmatpush1.msra.mxu0 %v1823
    %3977 = vmatprep.subr.mxu0 %v1830
    %3978 = vmatpush1.msra.mxu0 %v1829
    %3979 = vmatprep.subr.mxu0 %v1836
    %3980 = vmatpush1.msra.mxu0 %v1835
    %3981 = vmatprep.subr.mxu0 %v1842
    %3982 = vmatpush1.msra.mxu0 %v1841
    %3983 = vmatprep.subr.mxu0 %v1848
    %3984 = vmatpush1.msra.mxu0 %v1847
    %3985 = vmatprep.subr.mxu0 %v1854
    %3986 = vmatpush1.msra.mxu0 %v1853
    %3987 = vmatprep.subr.mxu0 %v1860
    %3988 = vmatpush1.msra.mxu0 %v1859
    %3989 = vmatprep.subr.mxu0 %v1866
    %3990 = vmatpush1.msra.mxu0 %v1865
    %3991 = vmatprep.subr.mxu0 %v1872
    %3992 = vmatpush1.msra.mxu0 %v1871
    %3993 = vmatprep.subr.mxu0 %v1878
    %3994 = vmatpush1.msra.mxu0 %v1877
    %3995 = vmatprep.subr.mxu0 %v1884
    %3996 = vmatpush1.msra.mxu0 %v1883
    %3997 = vmatprep.subr.mxu0 %v1890
    %3998 = vmatpush1.msra.mxu0 %v1889
    %3999 = vmatprep.subr.mxu0 %v1896
    %4000 = vmatpush1.msra.mxu0 %v1895
    %4001 = vmatprep.subr.mxu0 %v1902
    %4002 = vmatpush1.msra.mxu0 %v1901
    %4003 = vmatprep.subr.mxu0 %v1908
    %4004 = vmatpush1.msra.mxu0 %v1907
    %4005 = vmatprep.subr.mxu0 %v1914
    %4006 = vmatpush1.msra.mxu0 %v1913
    %4007 = vmatprep.subr.mxu0 %v1920
    %4008 = vmatpush1.msra.mxu0 %v1919
    %4009 = vmatprep.subr.mxu0 %v1926
    %4010 = vmatpush1.msra.mxu0 %v1925
    %4011 = vmatprep.subr.mxu0 %v1932
    %4012 = vmatpush1.msra.mxu0 %v1931
    %4013 = vmatprep.subr.mxu0 %v1938
    %4014 = vmatpush1.msra.mxu0 %v1937
    %4015 = vmatprep.subr.mxu0 %v1944
    %4016 = vmatpush1.msra.mxu0 %v1943
    %4017 = vmatprep.subr.mxu0 %v1950
    %4018 = vmatpush1.msra.mxu0 %v1949
    %4019 = vmatprep.subr.mxu0 %v1956
    %4020 = vmatpush1.msra.mxu0 %v1955
    %4021 = vmatprep.subr.mxu0 %v1962
    %4022 = vmatpush1.msra.mxu0 %v1961
    %4023 = vmatprep.subr.mxu0 %v1968
    %4024 = vmatpush1.msra.mxu0 %v1967
    %4025 = vmatprep.subr.mxu0 %v1974
    %4026 = vmatpush1.msra.mxu0 %v1973
    %4027 = vmatprep.subr.mxu0 %v1980
    %4028 = vmatpush1.msra.mxu0 %v1979
    %4029 = vmatprep.subr.mxu0 %v1986
    %4030 = vmatpush1.msra.mxu0 %v1985
    %4031 = vmatprep.subr.mxu0 %v1992
    %4032 = vmatpush1.msra.mxu0 %v1991
    %4033 = vmatprep.subr.mxu0 %v1998
    %4034 = vmatpush1.msra.mxu0 %v1997
    %4035 = vmatprep.subr.mxu0 %v2004
    %4036 = vmatpush1.msra.mxu0 %v2003
    %4037 = vmatprep.subr.mxu0 %v2010
    %4038 = vmatpush1.msra.mxu0 %v2009
    %4039 = vmatprep.mubr.f32.mxu0 %v3894
    %4040 = vmatmul.mubr.f32.gmra.mrb[0].mxu0 %v3893
    %v4041 = vpop.f32.mrb[0].mxu0
    %v4042 = vadd.f32 %v2037, %v4041
    %v4043 = vpop.f32.mrb[0].mxu0
    %v4044 = vadd.f32 %v2041, %v4043
    %4045 = vdwg.mxu0
    %4046 = vmatprep.subr.mxu0 %v1826
    %4047 = vmatpush1.msra.mxu0 %v1825
    %4048 = vmatprep.subr.mxu0 %v1832
    %4049 = vmatpush1.msra.mxu0 %v1831
    %4050 = vmatprep.subr.mxu0 %v1838
    %4051 = vmatpush1.msra.mxu0 %v1837
    %4052 = vmatprep.subr.mxu0 %v1844
    %4053 = vmatpush1.msra.mxu0 %v1843
    %4054 = vmatprep.subr.mxu0 %v1850
    %4055 = vmatpush1.msra.mxu0 %v1849
    %4056 = vmatprep.subr.mxu0 %v1856
    %4057 = vmatpush1.msra.mxu0 %v1855
    %4058 = vmatprep.subr.mxu0 %v1862
    %4059 = vmatpush1.msra.mxu0 %v1861
    %4060 = vmatprep.subr.mxu0 %v1868
    %4061 = vmatpush1.msra.mxu0 %v1867
    %4062 = vmatprep.subr.mxu0 %v1874
    %4063 = vmatpush1.msra.mxu0 %v1873
    %4064 = vmatprep.subr.mxu0 %v1880
    %4065 = vmatpush1.msra.mxu0 %v1879
    %4066 = vmatprep.subr.mxu0 %v1886
    %4067 = vmatpush1.msra.mxu0 %v1885
    %4068 = vmatprep.subr.mxu0 %v1892
    %4069 = vmatpush1.msra.mxu0 %v1891
    %4070 = vmatprep.subr.mxu0 %v1898
    %4071 = vmatpush1.msra.mxu0 %v1897
    %4072 = vmatprep.subr.mxu0 %v1904
    %4073 = vmatpush1.msra.mxu0 %v1903
    %4074 = vmatprep.subr.mxu0 %v1910
    %4075 = vmatpush1.msra.mxu0 %v1909
    %4076 = vmatprep.subr.mxu0 %v1916
    %4077 = vmatpush1.msra.mxu0 %v1915
    %4078 = vmatprep.subr.mxu0 %v1922
    %4079 = vmatpush1.msra.mxu0 %v1921
    %4080 = vmatprep.subr.mxu0 %v1928
    %4081 = vmatpush1.msra.mxu0 %v1927
    %4082 = vmatprep.subr.mxu0 %v1934
    %4083 = vmatpush1.msra.mxu0 %v1933
    %4084 = vmatprep.subr.mxu0 %v1940
    %4085 = vmatpush1.msra.mxu0 %v1939
    %4086 = vmatprep.subr.mxu0 %v1946
    %4087 = vmatpush1.msra.mxu0 %v1945
    %4088 = vmatprep.subr.mxu0 %v1952
    %4089 = vmatpush1.msra.mxu0 %v1951
    %4090 = vmatprep.subr.mxu0 %v1958
    %4091 = vmatpush1.msra.mxu0 %v1957
    %4092 = vmatprep.subr.mxu0 %v1964
    %4093 = vmatpush1.msra.mxu0 %v1963
    %4094 = vmatprep.subr.mxu0 %v1970
    %4095 = vmatpush1.msra.mxu0 %v1969
    %4096 = vmatprep.subr.mxu0 %v1976
    %4097 = vmatpush1.msra.mxu0 %v1975
    %4098 = vmatprep.subr.mxu0 %v1982
    %4099 = vmatpush1.msra.mxu0 %v1981
    %4100 = vmatprep.subr.mxu0 %v1988
    %4101 = vmatpush1.msra.mxu0 %v1987
    %4102 = vmatprep.subr.mxu0 %v1994
    %4103 = vmatpush1.msra.mxu0 %v1993
    %4104 = vmatprep.subr.mxu0 %v2000
    %4105 = vmatpush1.msra.mxu0 %v1999
    %4106 = vmatprep.subr.mxu0 %v2006
    %4107 = vmatpush1.msra.mxu0 %v2005
    %4108 = vmatprep.subr.mxu0 %v2012
    %4109 = vmatpush1.msra.mxu0 %v2011
    %4110 = vmatprep.mubr.f32.mxu0 %v3894
    %4111 = vmatmul.mubr.f32.gmra.mrb[0].mxu0 %v3893
    %v4112 = vpop.f32.mrb[0].mxu0
    %v4113 = vadd.f32 %v2045, %v4112
    %v4114 = vpop.f32.mrb[0].mxu0
    %v4115 = vadd.f32 %v2049, %v4114
    %4116 = vdwg.mxu0
    %v4117 = vadd.f32 %v3898, %v3971
    %v4118 = vadd.f32 %v3899, %v3973
    %v4119 = vxor.u32 %v4117, 2147483648
    %v4120 = vxor.u32 %v4118, 2147483648
    %v4121 = vmul.f32 %v4119, 1.442695
    %v4122 = vpow.pop %v4121
    %v4123 = vmul.f32 %v4120, 1.442695
    %v4124 = vpow.pop %v4123
    %v4125 = vadd.f32 %v4122, 1.0
    %v4126 = vadd.f32 %v4124, 1.0
    %v4127 = vrcp.pop %v4125
    %v4128 = vmul.f32 1.0, %v4127
    %v4129 = vrcp.pop %v4126
    %v4130 = vmul.f32 1.0, %v4129
    %v4131 = vadd.f32 %v3900, %v4042
    %v4132 = vadd.f32 %v3901, %v4044
    %v4133 = vxor.u32 %v4131, 2147483648
    %v4134 = vxor.u32 %v4132, 2147483648
    %v4135 = vmul.f32 %v4133, 1.442695
    %v4136 = vpow.pop %v4135
    %v4137 = vmul.f32 %v4134, 1.442695
    %v4138 = vpow.pop %v4137
    %v4139 = vadd.f32 %v4136, 1.0
    %v4140 = vadd.f32 %v4138, 1.0
    %v4141 = vrcp.pop %v4139
    %v4142 = vmul.f32 1.0, %v4141
    %v4143 = vrcp.pop %v4140
    %v4144 = vmul.f32 1.0, %v4143
    %v4145 = vmul.f32 %v4128, %v4113
    %v4146 = vmul.f32 %v4130, %v4115
    %v4147 = vadd.f32 %v3902, %v4145
    %v4148 = vadd.f32 %v3903, %v4146
    %v4149 = vtanh.pop %v4147
    %v4150 = vtanh.pop %v4148
    %v4151 = vsub.f32 1.0, %v4142
    %v4152 = vsub.f32 1.0, %v4144
    %v4153 = vmul.f32 %v4151, %v4149
    %v4154 = vmul.f32 %v4152, %v4150
    %v4155 = vmul.f32 %v4142, %v3893
    %v4156 = vmul.f32 %v4144, %v3894
    %v4157 = vadd.f32 %v4153, %v4155
    %v4158 = vadd.f32 %v4154, %v4156
    %4159 = vst [vmem:[#allocation14] sm:$0xff] %v4157
    %4160 = vst [vmem:[#allocation14 + $0x8] sm:$0xff] %v4158
    // Predicated region
    $region50: #{char_embedding_forward.1} parent=1 // pred_check
      _
    $region51: #{char_embedding_forward.1} parent=1 // pred_check_branch
      %4162 = sbr.rel (0) target = $region53
    $region52: #{char_embedding_forward.1} parent=1 // pred_region
      %s4164 = ssub.s32 256, 256
      %4165 = vsyncadd [#allocation5], %s4164
      %s4167 = sshll.u32 [#allocation14], 4
      %s4168 = int_to_ptr.vmem [resolvable:$true] %s4167
      %4170 = dma.vmem_to_hbm [thread:$0]  %s4168, 256, %s6, [#allocation5]
    $region53: #{char_embedding_forward.1} parent=1 // pred_fallthru
      _
    // Predicated region
    $region54: #{char_embedding_forward.1} parent=1 // pred_check
      _
    $region55: #{char_embedding_forward.1} parent=1 // pred_check_branch
      %4172 = sbr.rel (0) target = $region57
    $region56: #{char_embedding_forward.1} parent=1 // pred_region
      %4173 = dma.done [#allocation5], 256
    $region57: #{char_embedding_forward.1} parent=1 // pred_fallthru
      _
    %4174 = vsyncpa [#allocation4], 1
    %4175 = vsyncpa [#allocation7], 1
    %4176 = vsyncpa [#allocation10], 1
    %4177 = vsyncpa [#allocation13], 1
    %4178 = vsyncpa [#allocation5], 1

</llo_original>
